<compile_context>
chip_gen: v5e
topology: v5e:2x2
jax: 0.10.0
libtpu: 0.0.40
codegen_flags: <defaults>
</compile_context>

<pallas_src>
import functools
import math

import jax
import jax.numpy as jnp
from jax.experimental import pallas as pl
from jax.experimental.pallas import tpu as pltpu


# Set True to use exact softmax normalization when validating against PyTorch
# with tight tolerances; approx reciprocal (~2^-12 rel. err) is fine for infer.
_EXACT_SOFTMAX_RECIPROCAL = False


# ------------------------------ kernel helpers ------------------------------ #

def _add_ln(x, y, gamma, beta, eps):
    """LayerNorm(x + y) in f32."""
    z = x + y
    mu = jnp.mean(z, axis=-1, keepdims=True)
    var = jnp.mean(jnp.square(z - mu), axis=-1, keepdims=True)
    return (z - mu) * jax.lax.rsqrt(var + eps) * gamma + beta


def _split_heads(t, n_heads):
    """(L, H) f32 -> (n_heads, L, dh): one reshape + one lane-preserving transpose."""
    L, H = t.shape
    return jnp.transpose(t.reshape(L, n_heads, H // n_heads), (1, 0, 2))


def _mha(xb, kvb, bias, wq, wk, wv, bq, bk, bv, wo, bo, n_heads):
    """Multi-head attention for one batch element.

    xb: (Lq, H) bf16, kvb: (Lk, H) bf16, bias: 2-D f32 additive mask that
    broadcasts against (Lq, Lk).  Weights are pre-transposed (in, out) bf16;
    biases f32 (1, out).  Heads are batched on the leading axis of single
    einsum contractions (no per-head loops / slices / concatenations).
    """
    Lq, H = xb.shape
    dh = H // n_heads

    q = jnp.dot(xb, wq, preferred_element_type=jnp.float32) + bq   # (Lq, H)
    k = jnp.dot(kvb, wk, preferred_element_type=jnp.float32) + bk  # (Lk, H)
    v = jnp.dot(kvb, wv, preferred_element_type=jnp.float32) + bv  # (Lk, H)
    q = q * (1.0 / math.sqrt(dh))            # fold 1/sqrt(dh) into q

    qh = _split_heads(q, n_heads).astype(jnp.bfloat16)   # (h, Lq, dh)
    kh = _split_heads(k, n_heads).astype(jnp.bfloat16)   # (h, Lk, dh)
    vh = _split_heads(v, n_heads).astype(jnp.bfloat16)   # (h, Lk, dh)

    s = jnp.einsum("hqd,hkd->hqk", qh, kh,
                   preferred_element_type=jnp.float32)    # (h, Lq, Lk) f32
    s = s + bias[None]
    s = s - jnp.max(s, axis=-1, keepdims=True)
    p = jnp.exp(s)
    den = jnp.sum(p, axis=-1, keepdims=True)
    if _EXACT_SOFTMAX_RECIPROCAL:
        p = p / den
    else:
        p = p * pl.reciprocal(den, approx=True)

    o = jnp.einsum("hqk,hkd->hqd", p.astype(jnp.bfloat16), vh,
                   preferred_element_type=jnp.float32)    # (h, Lq, dh) f32
    attn = jnp.transpose(o, (1, 0, 2)).reshape(Lq, H)     # merge heads, (Lq, H)
    return jnp.dot(attn.astype(jnp.bfloat16), wo,
                   preferred_element_type=jnp.float32) + bo


# ------------------------------ fused kernels ------------------------------- #

def _decoder_layer_kernel(*refs, n_heads, eps, has_mem_mask):
    """One full post-norm TransformerDecoderLayer for one batch element."""
    o_ref = refs[-1]
    it = iter(refs[:-1])
    x_ref = next(it)
    mem_ref = next(it)
    tmask_ref = next(it)
    mmask_ref = next(it) if has_mem_mask else None
    padl_ref = next(it)
    pads_ref = next(it)
    (sqw, skw, svw, sqb, skb, svb, sow, sob,
     cqw, ckw, cvw, cqb, ckb, cvb, cow, cob,
     fw1, fb1, fw2, fb2,
     g1, be1, g2, be2, g3, be3) = it

    x_bf = x_ref[0]                                 # (L, H) bf16
    mem_bf = mem_ref[0]                             # (S, H) bf16
    x = x_bf.astype(jnp.float32)                    # f32 residual stream

    # Additive attention biases, built once per kernel invocation.
    self_bias = tmask_ref[...] + padl_ref[0]        # (L, L)
    cross_bias = pads_ref[0]                        # (1, S)
    if mmask_ref is not None:
        cross_bias = mmask_ref[...] + cross_bias    # (L, S)

    # --- self attention + residual + LN1
    sa = _mha(x_bf, x_bf, self_bias,
              sqw[...], skw[...], svw[...], sqb[...], skb[...], svb[...],
              sow[...], sob[...], n_heads)
    x = _add_ln(x, sa, g1[...], be1[...], eps)

    # --- cross attention + residual + LN2
    x_bf = x.astype(jnp.bfloat16)                   # single cast, reused
    ca = _mha(x_bf, mem_bf, cross_bias,
              cqw[...], ckw[...], cvw[...], cqb[...], ckb[...], cvb[...],
              cow[...], cob[...], n_heads)
    x = _add_ln(x, ca, g2[...], be2[...], eps)

    # --- FFN + residual + LN3
    x_bf = x.astype(jnp.bfloat16)
    h = jnp.dot(x_bf, fw1[...], preferred_element_type=jnp.float32) + fb1[...]
    h = jnp.maximum(h, 0.0)
    ff = jnp.dot(h.astype(jnp.bfloat16), fw2[...],
                 preferred_element_type=jnp.float32) + fb2[...]
    x = _add_ln(x, ff, g3[...], be3[...], eps)

    o_ref[0] = x.astype(o_ref.dtype)                # bf16 activation stream


def _final_kernel(x_ref, g_ref, b_ref, w_ref, bo_ref, o_ref, *, eps):
    """Fused final decoder LayerNorm + fc_out projection."""
    x = x_ref[0].astype(jnp.float32)                # (L, H)
    mu = jnp.mean(x, axis=-1, keepdims=True)
    var = jnp.mean(jnp.square(x - mu), axis=-1, keepdims=True)
    xn = (x - mu) * jax.lax.rsqrt(var + eps) * g_ref[...] + b_ref[...]
    logits = jnp.dot(xn.astype(jnp.bfloat16), w_ref[...],
                     preferred_element_type=jnp.float32) + bo_ref[...]
    o_ref[0] = logits.astype(o_ref.dtype)


# ------------------------------ Pallas wrappers ----------------------------- #

def _rep(shape):
    """Replicated (grid-invariant) full-array BlockSpec."""
    return pl.BlockSpec(shape, lambda b: (0,) * len(shape))


def _vmem_limit(block_bytes):
    # Double-buffered blocks + headroom, capped so it is valid on v7x (64 MiB).
    return int(min(2 * block_bytes + (8 << 20), 64 << 20))


def decoder_layer(x, mem, trg_mask, memory_mask, pad_l, pad_s, lyr,
                  *, n_heads, eps=1e-5):
    B, L, H = x.shape
    S = mem.shape[1]
    weights = (*lyr["sa"], *lyr["ca"], *lyr["ffn"],
               *lyr["ln1"], *lyr["ln2"], *lyr["ln3"])
    has_mm = memory_mask is not None

    operands = [x, mem, trg_mask] + ([memory_mask] if has_mm else []) \
        + [pad_l, pad_s, *weights]
    in_specs = (
        [pl.BlockSpec((1, L, H), lambda b: (b, 0, 0)),
         pl.BlockSpec((1, S, H), lambda b: (b, 0, 0)),
         _rep((L, L))]
        + ([_rep((L, S))] if has_mm else [])
        + [pl.BlockSpec((1, 1, L), lambda b: (b, 0, 0)),
           pl.BlockSpec((1, 1, S), lambda b: (b, 0, 0))]
        + [_rep(w.shape) for w in weights]
    )

    block_bytes = (x.nbytes // B + mem.nbytes // B + trg_mask.nbytes
                   + pad_l.nbytes // B + pad_s.nbytes // B
                   + (memory_mask.nbytes if has_mm else 0)
                   + sum(int(w.nbytes) for w in weights)
                   + x.nbytes // B)                     # output block (bf16)

    return pl.pallas_call(
        functools.partial(_decoder_layer_kernel, n_heads=n_heads, eps=eps,
                          has_mem_mask=has_mm),
        out_shape=jax.ShapeDtypeStruct((B, L, H), jnp.bfloat16),
        grid=(B,),
        in_specs=in_specs,
        out_specs=pl.BlockSpec((1, L, H), lambda b: (b, 0, 0)),
        compiler_params=pltpu.CompilerParams(
            dimension_semantics=("parallel",),
            vmem_limit_bytes=_vmem_limit(block_bytes)),
    )(*operands)


def final_norm_project(x, gamma, beta, w_t, b, *, eps=1e-5):
    B, L, H = x.shape
    V = w_t.shape[1]
    block_bytes = (x.nbytes // B + gamma.nbytes + beta.nbytes
                   + w_t.nbytes + b.nbytes + L * V * 4)
    return pl.pallas_call(
        functools.partial(_final_kernel, eps=eps),
        out_shape=jax.ShapeDtypeStruct((B, L, V), jnp.float32),
        grid=(B,),
        in_specs=[pl.BlockSpec((1, L, H), lambda b: (b, 0, 0)),
                  _rep(gamma.shape), _rep(beta.shape),
                  _rep(w_t.shape), _rep(b.shape)],
        out_specs=pl.BlockSpec((1, L, V), lambda b: (b, 0, 0)),
        compiler_params=pltpu.CompilerParams(
            dimension_semantics=("parallel",),
            vmem_limit_bytes=_vmem_limit(block_bytes)),
    )(x, gamma, beta, w_t, b)


# --------------------------- parameters & forward --------------------------- #

def init_params(key, output_dim, hid_dim, n_layers, n_heads, pf_dim,
                max_length=128):
    H = hid_dim
    state = {"key": key}

    def w(shape, scale=0.02):
        state["key"], sub = jax.random.split(state["key"])
        return (scale * jax.random.normal(sub, shape)).astype(jnp.float32)

    def wT(out_f, in_f, scale=0.02):
        # PyTorch stores (out, in); pre-transpose to (in, out) bf16 so kernels
        # do jnp.dot(x, w) with no in-kernel transpose.
        return w((out_f, in_f), scale).T.astype(jnp.bfloat16)

    # Embeddings: both tok/pos embeddings use padding_idx=0 in the spec module,
    # so row 0 is zeroed for both (matches nn.Embedding(..., padding_idx=0)).
    tok_emb = w((output_dim, H), 1.0).at[0].set(0.0)
    pos_emb = w((max_length, H), 1.0).at[0].set(0.0)

    def attn_params():
        return (wT(H, H), wT(H, H), wT(H, H),         # Wq^T, Wk^T, Wv^T (bf16)
                w((1, H)), w((1, H)), w((1, H)),      # bq, bk, bv       (f32)
                wT(H, H), w((1, H)))                  # Wo^T, bo

    def ln_params():
        return (jnp.ones((1, H), jnp.float32), jnp.zeros((1, H), jnp.float32))

    layers = []
    for _ in range(n_layers):
        layers.append(dict(
            sa=attn_params(),
            ca=attn_params(),
            ffn=(wT(pf_dim, H), w((1, pf_dim)), wT(H, pf_dim), w((1, H))),
            ln1=ln_params(), ln2=ln_params(), ln3=ln_params(),
        ))

    return dict(
        tok_emb=tok_emb,
        pos_emb=pos_emb,
        layers=layers,
        dec_norm=ln_params(),
        fc_out=(wT(output_dim, H), w((1, output_dim))),
    )


def transformer_decoder_forward(params, trg, enc_output, trg_mask,
                                trg_padding_mask, memory_mask,
                                memory_key_padding_mask, *, n_heads):
    """Eval-mode (is_training=False) forward pass of the reference module."""
    B, L = trg.shape
    H = params["tok_emb"].shape[1]

    # Glue: embedding gathers + positional ids (padding_idx rows already zero).
    pos = jnp.broadcast_to(jnp.arange(L, dtype=jnp.int32)[None, :], (B, L))
    x = params["tok_emb"][trg] * jnp.sqrt(jnp.float32(H)) + params["pos_emb"][pos]
    x = x.astype(jnp.bfloat16)                      # bf16 activation stream
    enc_bf = enc_output.astype(jnp.bfloat16)

    neg = jnp.float32(-1e9)
    # Tiny per-batch additive key-padding biases (no (B,L,L) mask materialized).
    pad_l = jnp.where(trg_padding_mask, neg, 0.0).astype(jnp.float32)[:, None, :]
    pad_s = jnp.where(memory_key_padding_mask, neg, 0.0).astype(jnp.float32)[:, None, :]

    if memory_mask is not None:
        memory_mask = memory_mask.astype(jnp.float32)

    for lyr in params["layers"]:
        x = decoder_layer(x, enc_bf, trg_mask.astype(jnp.float32), memory_mask,
                          pad_l, pad_s, lyr, n_heads=n_heads)

    gamma, beta = params["dec_norm"]
    w_out, b_out = params["fc_out"]
    return final_norm_project(x, gamma, beta, w_out, b_out)


# ---------------------------------- main ------------------------------------ #

if __name__ == "__main__":
    # Small, TPU-layout-friendly toy shapes: head_dim = hid/n_heads = 128 (lane
    # dense), L and S multiples of 8, vocab a multiple of 128.
    output_dim, hid_dim, n_layers, n_heads, pf_dim = 128, 256, 2, 2, 512
    B, L, S = 2, 8, 16

    key = jax.random.PRNGKey(0)
    kp, kt, ke = jax.random.split(key, 3)

    params = init_params(kp, output_dim, hid_dim, n_layers, n_heads, pf_dim)

    trg = jax.random.randint(kt, (B, L), 0, output_dim, dtype=jnp.int32)
    enc_output = jax.random.normal(ke, (B, S, hid_dim), jnp.float32)

    # Causal additive target mask.
    idx = jnp.arange(L)
    trg_mask = jnp.where(idx[:, None] >= idx[None, :], 0.0, -1e9).astype(jnp.float32)
    # Boolean key-padding masks (True = padded / ignored).
    trg_padding_mask = jnp.zeros((B, L), bool).at[1, L - 1].set(True)
    memory_mask = None                              # "None" memory mask (skipped)
    memory_key_padding_mask = jnp.zeros((B, S), bool).at[0, S - 1].set(True)

    out = transformer_decoder_forward(
        params, trg, enc_output, trg_mask, trg_padding_mask,
        memory_mask, memory_key_padding_mask, n_heads=n_heads)
    out = jax.block_until_ready(out)

    assert out.shape == (B, L, output_dim), out.shape
    assert bool(jnp.all(jnp.isfinite(out)))
    print("KERNEL_OK")
</pallas_src>

<mosaic_0001>
module attributes {stable_mosaic.version = 11 : i64} {
  func.func @_decoder_layer_kernel(%arg0: i32, %arg1: memref<1x8x256xbf16, #tpu.memory_space<vmem>>, %arg2: memref<1x16x256xbf16, #tpu.memory_space<vmem>>, %arg3: memref<8x8xf32, #tpu.memory_space<vmem>>, %arg4: memref<1x1x8xf32, #tpu.memory_space<vmem>>, %arg5: memref<1x1x16xf32, #tpu.memory_space<vmem>>, %arg6: memref<256x256xbf16, #tpu.memory_space<vmem>>, %arg7: memref<256x256xbf16, #tpu.memory_space<vmem>>, %arg8: memref<256x256xbf16, #tpu.memory_space<vmem>>, %arg9: memref<1x256xf32, #tpu.memory_space<vmem>>, %arg10: memref<1x256xf32, #tpu.memory_space<vmem>>, %arg11: memref<1x256xf32, #tpu.memory_space<vmem>>, %arg12: memref<256x256xbf16, #tpu.memory_space<vmem>>, %arg13: memref<1x256xf32, #tpu.memory_space<vmem>>, %arg14: memref<256x256xbf16, #tpu.memory_space<vmem>>, %arg15: memref<256x256xbf16, #tpu.memory_space<vmem>>, %arg16: memref<256x256xbf16, #tpu.memory_space<vmem>>, %arg17: memref<1x256xf32, #tpu.memory_space<vmem>>, %arg18: memref<1x256xf32, #tpu.memory_space<vmem>>, %arg19: memref<1x256xf32, #tpu.memory_space<vmem>>, %arg20: memref<256x256xbf16, #tpu.memory_space<vmem>>, %arg21: memref<1x256xf32, #tpu.memory_space<vmem>>, %arg22: memref<256x512xbf16, #tpu.memory_space<vmem>>, %arg23: memref<1x512xf32, #tpu.memory_space<vmem>>, %arg24: memref<512x256xbf16, #tpu.memory_space<vmem>>, %arg25: memref<1x256xf32, #tpu.memory_space<vmem>>, %arg26: memref<1x256xf32, #tpu.memory_space<vmem>>, %arg27: memref<1x256xf32, #tpu.memory_space<vmem>>, %arg28: memref<1x256xf32, #tpu.memory_space<vmem>>, %arg29: memref<1x256xf32, #tpu.memory_space<vmem>>, %arg30: memref<1x256xf32, #tpu.memory_space<vmem>>, %arg31: memref<1x256xf32, #tpu.memory_space<vmem>>, %arg32: memref<1x8x256xbf16, #tpu.memory_space<vmem>>) attributes {dimension_semantics = [#tpu.dimension_semantics<parallel>], iteration_bounds = array<i64: 2>, scalar_prefetch = 0 : i64, scratch_operands = 0 : i64, tpu.core_type = #tpu.core_type<tc>, window_params = [{transform_indices = @transform_0, window_bounds = array<i64: 1, 8, 256>}, {transform_indices = @transform_1, window_bounds = array<i64: 1, 16, 256>}, {pipeline_mode = #tpu.pipeline_mode<synchronous>, transform_indices = @transform_2, window_bounds = array<i64: 8, 8>}, {transform_indices = @transform_3, window_bounds = array<i64: 1, 1, 8>}, {transform_indices = @transform_4, window_bounds = array<i64: 1, 1, 16>}, {pipeline_mode = #tpu.pipeline_mode<synchronous>, transform_indices = @transform_5, window_bounds = array<i64: 256, 256>}, {pipeline_mode = #tpu.pipeline_mode<synchronous>, transform_indices = @transform_6, window_bounds = array<i64: 256, 256>}, {pipeline_mode = #tpu.pipeline_mode<synchronous>, transform_indices = @transform_7, window_bounds = array<i64: 256, 256>}, {pipeline_mode = #tpu.pipeline_mode<synchronous>, transform_indices = @transform_8, window_bounds = array<i64: 1, 256>}, {pipeline_mode = #tpu.pipeline_mode<synchronous>, transform_indices = @transform_9, window_bounds = array<i64: 1, 256>}, {pipeline_mode = #tpu.pipeline_mode<synchronous>, transform_indices = @transform_10, window_bounds = array<i64: 1, 256>}, {pipeline_mode = #tpu.pipeline_mode<synchronous>, transform_indices = @transform_11, window_bounds = array<i64: 256, 256>}, {pipeline_mode = #tpu.pipeline_mode<synchronous>, transform_indices = @transform_12, window_bounds = array<i64: 1, 256>}, {pipeline_mode = #tpu.pipeline_mode<synchronous>, transform_indices = @transform_13, window_bounds = array<i64: 256, 256>}, {pipeline_mode = #tpu.pipeline_mode<synchronous>, transform_indices = @transform_14, window_bounds = array<i64: 256, 256>}, {pipeline_mode = #tpu.pipeline_mode<synchronous>, transform_indices = @transform_15, window_bounds = array<i64: 256, 256>}, {pipeline_mode = #tpu.pipeline_mode<synchronous>, transform_indices = @transform_16, window_bounds = array<i64: 1, 256>}, {pipeline_mode = #tpu.pipeline_mode<synchronous>, transform_indices = @transform_17, window_bounds = array<i64: 1, 256>}, {pipeline_mode = #tpu.pipeline_mode<synchronous>, transform_indices = @transform_18, window_bounds = array<i64: 1, 256>}, {pipeline_mode = #tpu.pipeline_mode<synchronous>, transform_indices = @transform_19, window_bounds = array<i64: 256, 256>}, {pipeline_mode = #tpu.pipeline_mode<synchronous>, transform_indices = @transform_20, window_bounds = array<i64: 1, 256>}, {pipeline_mode = #tpu.pipeline_mode<synchronous>, transform_indices = @transform_21, window_bounds = array<i64: 256, 512>}, {pipeline_mode = #tpu.pipeline_mode<synchronous>, transform_indices = @transform_22, window_bounds = array<i64: 1, 512>}, {pipeline_mode = #tpu.pipeline_mode<synchronous>, transform_indices = @transform_23, window_bounds = array<i64: 512, 256>}, {pipeline_mode = #tpu.pipeline_mode<synchronous>, transform_indices = @transform_24, window_bounds = array<i64: 1, 256>}, {pipeline_mode = #tpu.pipeline_mode<synchronous>, transform_indices = @transform_25, window_bounds = array<i64: 1, 256>}, {pipeline_mode = #tpu.pipeline_mode<synchronous>, transform_indices = @transform_26, window_bounds = array<i64: 1, 256>}, {pipeline_mode = #tpu.pipeline_mode<synchronous>, transform_indices = @transform_27, window_bounds = array<i64: 1, 256>}, {pipeline_mode = #tpu.pipeline_mode<synchronous>, transform_indices = @transform_28, window_bounds = array<i64: 1, 256>}, {pipeline_mode = #tpu.pipeline_mode<synchronous>, transform_indices = @transform_29, window_bounds = array<i64: 1, 256>}, {pipeline_mode = #tpu.pipeline_mode<synchronous>, transform_indices = @transform_30, window_bounds = array<i64: 1, 256>}, {transform_indices = @transform_31, window_bounds = array<i64: 1, 8, 256>}]} {
    %c0 = arith.constant 0 : index
    %c0_0 = arith.constant 0 : index
    %c0_1 = arith.constant 0 : index
    %0 = vector.load %arg1[%c0, %c0_0, %c0_1] : memref<1x8x256xbf16, #tpu.memory_space<vmem>>, vector<1x8x256xbf16>
    %1 = vector.shape_cast %0 : vector<1x8x256xbf16> to vector<8x256xbf16>
    %c0_2 = arith.constant 0 : index
    %c0_3 = arith.constant 0 : index
    %c0_4 = arith.constant 0 : index
    %2 = vector.load %arg2[%c0_2, %c0_3, %c0_4] : memref<1x16x256xbf16, #tpu.memory_space<vmem>>, vector<1x16x256xbf16>
    %3 = vector.shape_cast %2 : vector<1x16x256xbf16> to vector<16x256xbf16>
    %4 = arith.extf %1 : vector<8x256xbf16> to vector<8x256xf32>
    %c0_5 = arith.constant 0 : index
    %c0_6 = arith.constant 0 : index
    %5 = vector.load %arg3[%c0_5, %c0_6] : memref<8x8xf32, #tpu.memory_space<vmem>>, vector<8x8xf32>
    %c0_7 = arith.constant 0 : index
    %c0_8 = arith.constant 0 : index
    %c0_9 = arith.constant 0 : index
    %6 = vector.load %arg4[%c0_7, %c0_8, %c0_9] : memref<1x1x8xf32, #tpu.memory_space<vmem>>, vector<1x1x8xf32>
    %7 = vector.shape_cast %6 : vector<1x1x8xf32> to vector<1x8xf32>
    %8 = vector.broadcast %7 : vector<1x8xf32> to vector<8x8xf32>
    %9 = arith.addf %5, %8 : vector<8x8xf32>
    %c0_10 = arith.constant 0 : index
    %c0_11 = arith.constant 0 : index
    %c0_12 = arith.constant 0 : index
    %10 = vector.load %arg5[%c0_10, %c0_11, %c0_12] : memref<1x1x16xf32, #tpu.memory_space<vmem>>, vector<1x1x16xf32>
    %11 = vector.shape_cast %10 : vector<1x1x16xf32> to vector<1x16xf32>
    %c0_13 = arith.constant 0 : index
    %c0_14 = arith.constant 0 : index
    %12 = vector.load %arg6[%c0_13, %c0_14] : memref<256x256xbf16, #tpu.memory_space<vmem>>, vector<256x256xbf16>
    %c0_15 = arith.constant 0 : index
    %c0_16 = arith.constant 0 : index
    %13 = vector.load %arg7[%c0_15, %c0_16] : memref<256x256xbf16, #tpu.memory_space<vmem>>, vector<256x256xbf16>
    %c0_17 = arith.constant 0 : index
    %c0_18 = arith.constant 0 : index
    %14 = vector.load %arg8[%c0_17, %c0_18] : memref<256x256xbf16, #tpu.memory_space<vmem>>, vector<256x256xbf16>
    %c0_19 = arith.constant 0 : index
    %c0_20 = arith.constant 0 : index
    %15 = vector.load %arg9[%c0_19, %c0_20] : memref<1x256xf32, #tpu.memory_space<vmem>>, vector<1x256xf32>
    %c0_21 = arith.constant 0 : index
    %c0_22 = arith.constant 0 : index
    %16 = vector.load %arg10[%c0_21, %c0_22] : memref<1x256xf32, #tpu.memory_space<vmem>>, vector<1x256xf32>
    %c0_23 = arith.constant 0 : index
    %c0_24 = arith.constant 0 : index
    %17 = vector.load %arg11[%c0_23, %c0_24] : memref<1x256xf32, #tpu.memory_space<vmem>>, vector<1x256xf32>
    %c0_25 = arith.constant 0 : index
    %c0_26 = arith.constant 0 : index
    %18 = vector.load %arg12[%c0_25, %c0_26] : memref<256x256xbf16, #tpu.memory_space<vmem>>, vector<256x256xbf16>
    %c0_27 = arith.constant 0 : index
    %c0_28 = arith.constant 0 : index
    %19 = vector.load %arg13[%c0_27, %c0_28] : memref<1x256xf32, #tpu.memory_space<vmem>>, vector<1x256xf32>
    %cst = arith.constant dense<0.000000e+00> : vector<8x256xf32>
    %20 = tpu.matmul %1, %12, %cst {dimension_numbers = #tpu.dot_dimension_numbers<[1], [0], [0], [1], [0, 0, 1, 1], [], []>} : vector<8x256xbf16>, vector<256x256xbf16>, vector<8x256xf32> -> vector<8x256xf32>
    %21 = vector.broadcast %15 : vector<1x256xf32> to vector<8x256xf32>
    %22 = arith.addf %20, %21 : vector<8x256xf32>
    %cst_29 = arith.constant dense<0.000000e+00> : vector<8x256xf32>
    %23 = tpu.matmul %1, %13, %cst_29 {dimension_numbers = #tpu.dot_dimension_numbers<[1], [0], [0], [1], [0, 0, 1, 1], [], []>} : vector<8x256xbf16>, vector<256x256xbf16>, vector<8x256xf32> -> vector<8x256xf32>
    %24 = vector.broadcast %16 : vector<1x256xf32> to vector<8x256xf32>
    %25 = arith.addf %23, %24 : vector<8x256xf32>
    %cst_30 = arith.constant dense<0.000000e+00> : vector<8x256xf32>
    %26 = tpu.matmul %1, %14, %cst_30 {dimension_numbers = #tpu.dot_dimension_numbers<[1], [0], [0], [1], [0, 0, 1, 1], [], []>} : vector<8x256xbf16>, vector<256x256xbf16>, vector<8x256xf32> -> vector<8x256xf32>
    %27 = vector.broadcast %17 : vector<1x256xf32> to vector<8x256xf32>
    %28 = arith.addf %26, %27 : vector<8x256xf32>
    %cst_31 = arith.constant 0.0883883461 : f32
    %29 = vector.broadcast %cst_31 : f32 to vector<8x256xf32>
    %30 = arith.mulf %22, %29 : vector<8x256xf32>
    %31 = vector.shape_cast %30 : vector<8x256xf32> to vector<8x2x128xf32>
    %32 = tpu.transpose %31, [1, 0, 2] : vector<8x2x128xf32> -> vector<2x8x128xf32>
    %33 = arith.truncf %32 : vector<2x8x128xf32> to vector<2x8x128xbf16>
    %34 = vector.shape_cast %25 : vector<8x256xf32> to vector<8x2x128xf32>
    %35 = tpu.transpose %34, [1, 0, 2] : vector<8x2x128xf32> -> vector<2x8x128xf32>
    %36 = arith.truncf %35 : vector<2x8x128xf32> to vector<2x8x128xbf16>
    %37 = vector.shape_cast %28 : vector<8x256xf32> to vector<8x2x128xf32>
    %38 = tpu.transpose %37, [1, 0, 2] : vector<8x2x128xf32> -> vector<2x8x128xf32>
    %39 = arith.truncf %38 : vector<2x8x128xf32> to vector<2x8x128xbf16>
    "tpu.trace_start"() <{level = 10 : i32, message = "hqd,hkd->hqk"}> : () -> ()
    %cst_32 = arith.constant dense<0.000000e+00> : vector<2x8x8xf32>
    %40 = tpu.matmul %33, %36, %cst_32 {dimension_numbers = #tpu.dot_dimension_numbers<[2], [2], [1], [1], [0, 0, 0, 1, 1, 1], [0], [0]>} : vector<2x8x128xbf16>, vector<2x8x128xbf16>, vector<2x8x8xf32> -> vector<2x8x8xf32>
    "tpu.trace_stop"() : () -> ()
    %41 = vector.shape_cast %9 : vector<8x8xf32> to vector<1x8x8xf32>
    %42 = vector.broadcast %41 : vector<1x8x8xf32> to vector<2x8x8xf32>
    %43 = arith.addf %40, %42 : vector<2x8x8xf32>
    %cst_33 = arith.constant dense<0xFF800000> : vector<2x8xf32>
    %44 = vector.multi_reduction <maximumf>, %43, %cst_33 [2] : vector<2x8x8xf32> to vector<2x8xf32>
    %45 = vector.shape_cast %44 : vector<2x8xf32> to vector<2x8x1xf32>
    %46 = vector.broadcast %45 : vector<2x8x1xf32> to vector<2x8x8xf32>
    %47 = arith.subf %43, %46 : vector<2x8x8xf32>
    %48 = math.exp %47 : vector<2x8x8xf32>
    %cst_34 = arith.constant dense<0.000000e+00> : vector<2x8xf32>
    %49 = vector.multi_reduction <add>, %48, %cst_34 [2] : vector<2x8x8xf32> to vector<2x8xf32>
    %50 = vector.shape_cast %49 : vector<2x8xf32> to vector<2x8x1xf32>
    %51 = tpu.reciprocal %50 {approx = true} : vector<2x8x1xf32> -> vector<2x8x1xf32>
    %52 = vector.broadcast %51 : vector<2x8x1xf32> to vector<2x8x8xf32>
    %53 = arith.mulf %48, %52 : vector<2x8x8xf32>
    %54 = arith.truncf %53 : vector<2x8x8xf32> to vector<2x8x8xbf16>
    "tpu.trace_start"() <{level = 10 : i32, message = "hqk,hkd->hqd"}> : () -> ()
    %cst_35 = arith.constant dense<0.000000e+00> : vector<2x8x128xf32>
    %55 = tpu.matmul %54, %39, %cst_35 {dimension_numbers = #tpu.dot_dimension_numbers<[2], [1], [1], [2], [0, 0, 0, 1, 1, 2], [0], [0]>} : vector<2x8x8xbf16>, vector<2x8x128xbf16>, vector<2x8x128xf32> -> vector<2x8x128xf32>
    "tpu.trace_stop"() : () -> ()
    %56 = tpu.transpose %55, [1, 0, 2] : vector<2x8x128xf32> -> vector<8x2x128xf32>
    %57 = vector.shape_cast %56 : vector<8x2x128xf32> to vector<8x256xf32>
    %58 = arith.truncf %57 : vector<8x256xf32> to vector<8x256xbf16>
    %cst_36 = arith.constant dense<0.000000e+00> : vector<8x256xf32>
    %59 = tpu.matmul %58, %18, %cst_36 {dimension_numbers = #tpu.dot_dimension_numbers<[1], [0], [0], [1], [0, 0, 1, 1], [], []>} : vector<8x256xbf16>, vector<256x256xbf16>, vector<8x256xf32> -> vector<8x256xf32>
    %60 = vector.broadcast %19 : vector<1x256xf32> to vector<8x256xf32>
    %61 = arith.addf %59, %60 : vector<8x256xf32>
    %c0_37 = arith.constant 0 : index
    %c0_38 = arith.constant 0 : index
    %62 = vector.load %arg26[%c0_37, %c0_38] : memref<1x256xf32, #tpu.memory_space<vmem>>, vector<1x256xf32>
    %c0_39 = arith.constant 0 : index
    %c0_40 = arith.constant 0 : index
    %63 = vector.load %arg27[%c0_39, %c0_40] : memref<1x256xf32, #tpu.memory_space<vmem>>, vector<1x256xf32>
    %64 = arith.addf %4, %61 : vector<8x256xf32>
    %cst_41 = arith.constant dense<0.000000e+00> : vector<8xf32>
    %65 = vector.multi_reduction <add>, %64, %cst_41 [1] : vector<8x256xf32> to vector<8xf32>
    %66 = vector.shape_cast %65 : vector<8xf32> to vector<8x1xf32>
    %cst_42 = arith.constant 2.560000e+02 : f32
    %67 = vector.broadcast %cst_42 : f32 to vector<8x1xf32>
    %68 = arith.divf %66, %67 : vector<8x1xf32>
    %69 = vector.broadcast %68 : vector<8x1xf32> to vector<8x256xf32>
    %70 = arith.subf %64, %69 : vector<8x256xf32>
    %71 = arith.mulf %70, %70 : vector<8x256xf32>
    %cst_43 = arith.constant dense<0.000000e+00> : vector<8xf32>
    %72 = vector.multi_reduction <add>, %71, %cst_43 [1] : vector<8x256xf32> to vector<8xf32>
    %73 = vector.shape_cast %72 : vector<8xf32> to vector<8x1xf32>
    %cst_44 = arith.constant 2.560000e+02 : f32
    %74 = vector.broadcast %cst_44 : f32 to vector<8x1xf32>
    %75 = arith.divf %73, %74 : vector<8x1xf32>
    %76 = vector.broadcast %68 : vector<8x1xf32> to vector<8x256xf32>
    %77 = arith.subf %64, %76 : vector<8x256xf32>
    %cst_45 = arith.constant 9.99999974E-6 : f32
    %78 = vector.broadcast %cst_45 : f32 to vector<8x1xf32>
    %79 = arith.addf %75, %78 : vector<8x1xf32>
    %80 = math.rsqrt %79 : vector<8x1xf32>
    %81 = vector.broadcast %80 : vector<8x1xf32> to vector<8x256xf32>
    %82 = arith.mulf %77, %81 : vector<8x256xf32>
    %83 = vector.broadcast %62 : vector<1x256xf32> to vector<8x256xf32>
    %84 = arith.mulf %82, %83 : vector<8x256xf32>
    %85 = vector.broadcast %63 : vector<1x256xf32> to vector<8x256xf32>
    %86 = arith.addf %84, %85 : vector<8x256xf32>
    %87 = arith.truncf %86 : vector<8x256xf32> to vector<8x256xbf16>
    %c0_46 = arith.constant 0 : index
    %c0_47 = arith.constant 0 : index
    %88 = vector.load %arg14[%c0_46, %c0_47] : memref<256x256xbf16, #tpu.memory_space<vmem>>, vector<256x256xbf16>
    %c0_48 = arith.constant 0 : index
    %c0_49 = arith.constant 0 : index
    %89 = vector.load %arg15[%c0_48, %c0_49] : memref<256x256xbf16, #tpu.memory_space<vmem>>, vector<256x256xbf16>
    %c0_50 = arith.constant 0 : index
    %c0_51 = arith.constant 0 : index
    %90 = vector.load %arg16[%c0_50, %c0_51] : memref<256x256xbf16, #tpu.memory_space<vmem>>, vector<256x256xbf16>
    %c0_52 = arith.constant 0 : index
    %c0_53 = arith.constant 0 : index
    %91 = vector.load %arg17[%c0_52, %c0_53] : memref<1x256xf32, #tpu.memory_space<vmem>>, vector<1x256xf32>
    %c0_54 = arith.constant 0 : index
    %c0_55 = arith.constant 0 : index
    %92 = vector.load %arg18[%c0_54, %c0_55] : memref<1x256xf32, #tpu.memory_space<vmem>>, vector<1x256xf32>
    %c0_56 = arith.constant 0 : index
    %c0_57 = arith.constant 0 : index
    %93 = vector.load %arg19[%c0_56, %c0_57] : memref<1x256xf32, #tpu.memory_space<vmem>>, vector<1x256xf32>
    %c0_58 = arith.constant 0 : index
    %c0_59 = arith.constant 0 : index
    %94 = vector.load %arg20[%c0_58, %c0_59] : memref<256x256xbf16, #tpu.memory_space<vmem>>, vector<256x256xbf16>
    %c0_60 = arith.constant 0 : index
    %c0_61 = arith.constant 0 : index
    %95 = vector.load %arg21[%c0_60, %c0_61] : memref<1x256xf32, #tpu.memory_space<vmem>>, vector<1x256xf32>
    %cst_62 = arith.constant dense<0.000000e+00> : vector<8x256xf32>
    %96 = tpu.matmul %87, %88, %cst_62 {dimension_numbers = #tpu.dot_dimension_numbers<[1], [0], [0], [1], [0, 0, 1, 1], [], []>} : vector<8x256xbf16>, vector<256x256xbf16>, vector<8x256xf32> -> vector<8x256xf32>
    %97 = vector.broadcast %91 : vector<1x256xf32> to vector<8x256xf32>
    %98 = arith.addf %96, %97 : vector<8x256xf32>
    %cst_63 = arith.constant dense<0.000000e+00> : vector<16x256xf32>
    %99 = tpu.matmul %3, %89, %cst_63 {dimension_numbers = #tpu.dot_dimension_numbers<[1], [0], [0], [1], [0, 0, 1, 1], [], []>} : vector<16x256xbf16>, vector<256x256xbf16>, vector<16x256xf32> -> vector<16x256xf32>
    %100 = vector.broadcast %92 : vector<1x256xf32> to vector<16x256xf32>
    %101 = arith.addf %99, %100 : vector<16x256xf32>
    %cst_64 = arith.constant dense<0.000000e+00> : vector<16x256xf32>
    %102 = tpu.matmul %3, %90, %cst_64 {dimension_numbers = #tpu.dot_dimension_numbers<[1], [0], [0], [1], [0, 0, 1, 1], [], []>} : vector<16x256xbf16>, vector<256x256xbf16>, vector<16x256xf32> -> vector<16x256xf32>
    %103 = vector.broadcast %93 : vector<1x256xf32> to vector<16x256xf32>
    %104 = arith.addf %102, %103 : vector<16x256xf32>
    %cst_65 = arith.constant 0.0883883461 : f32
    %105 = vector.broadcast %cst_65 : f32 to vector<8x256xf32>
    %106 = arith.mulf %98, %105 : vector<8x256xf32>
    %107 = vector.shape_cast %106 : vector<8x256xf32> to vector<8x2x128xf32>
    %108 = tpu.transpose %107, [1, 0, 2] : vector<8x2x128xf32> -> vector<2x8x128xf32>
    %109 = arith.truncf %108 : vector<2x8x128xf32> to vector<2x8x128xbf16>
    %110 = vector.shape_cast %101 : vector<16x256xf32> to vector<16x2x128xf32>
    %111 = tpu.transpose %110, [1, 0, 2] : vector<16x2x128xf32> -> vector<2x16x128xf32>
    %112 = arith.truncf %111 : vector<2x16x128xf32> to vector<2x16x128xbf16>
    %113 = vector.shape_cast %104 : vector<16x256xf32> to vector<16x2x128xf32>
    %114 = tpu.transpose %113, [1, 0, 2] : vector<16x2x128xf32> -> vector<2x16x128xf32>
    %115 = arith.truncf %114 : vector<2x16x128xf32> to vector<2x16x128xbf16>
    "tpu.trace_start"() <{level = 10 : i32, message = "hqd,hkd->hqk"}> : () -> ()
    %cst_66 = arith.constant dense<0.000000e+00> : vector<2x8x16xf32>
    %116 = tpu.matmul %109, %112, %cst_66 {dimension_numbers = #tpu.dot_dimension_numbers<[2], [2], [1], [1], [0, 0, 0, 1, 1, 1], [0], [0]>} : vector<2x8x128xbf16>, vector<2x16x128xbf16>, vector<2x8x16xf32> -> vector<2x8x16xf32>
    "tpu.trace_stop"() : () -> ()
    %117 = vector.shape_cast %11 : vector<1x16xf32> to vector<1x1x16xf32>
    %118 = vector.broadcast %117 : vector<1x1x16xf32> to vector<2x8x16xf32>
    %119 = arith.addf %116, %118 : vector<2x8x16xf32>
    %cst_67 = arith.constant dense<0xFF800000> : vector<2x8xf32>
    %120 = vector.multi_reduction <maximumf>, %119, %cst_67 [2] : vector<2x8x16xf32> to vector<2x8xf32>
    %121 = vector.shape_cast %120 : vector<2x8xf32> to vector<2x8x1xf32>
    %122 = vector.broadcast %121 : vector<2x8x1xf32> to vector<2x8x16xf32>
    %123 = arith.subf %119, %122 : vector<2x8x16xf32>
    %124 = math.exp %123 : vector<2x8x16xf32>
    %cst_68 = arith.constant dense<0.000000e+00> : vector<2x8xf32>
    %125 = vector.multi_reduction <add>, %124, %cst_68 [2] : vector<2x8x16xf32> to vector<2x8xf32>
    %126 = vector.shape_cast %125 : vector<2x8xf32> to vector<2x8x1xf32>
    %127 = tpu.reciprocal %126 {approx = true} : vector<2x8x1xf32> -> vector<2x8x1xf32>
    %128 = vector.broadcast %127 : vector<2x8x1xf32> to vector<2x8x16xf32>
    %129 = arith.mulf %124, %128 : vector<2x8x16xf32>
    %130 = arith.truncf %129 : vector<2x8x16xf32> to vector<2x8x16xbf16>
    "tpu.trace_start"() <{level = 10 : i32, message = "hqk,hkd->hqd"}> : () -> ()
    %cst_69 = arith.constant dense<0.000000e+00> : vector<2x8x128xf32>
    %131 = tpu.matmul %130, %115, %cst_69 {dimension_numbers = #tpu.dot_dimension_numbers<[2], [1], [1], [2], [0, 0, 0, 1, 1, 2], [0], [0]>} : vector<2x8x16xbf16>, vector<2x16x128xbf16>, vector<2x8x128xf32> -> vector<2x8x128xf32>
    "tpu.trace_stop"() : () -> ()
    %132 = tpu.transpose %131, [1, 0, 2] : vector<2x8x128xf32> -> vector<8x2x128xf32>
    %133 = vector.shape_cast %132 : vector<8x2x128xf32> to vector<8x256xf32>
    %134 = arith.truncf %133 : vector<8x256xf32> to vector<8x256xbf16>
    %cst_70 = arith.constant dense<0.000000e+00> : vector<8x256xf32>
    %135 = tpu.matmul %134, %94, %cst_70 {dimension_numbers = #tpu.dot_dimension_numbers<[1], [0], [0], [1], [0, 0, 1, 1], [], []>} : vector<8x256xbf16>, vector<256x256xbf16>, vector<8x256xf32> -> vector<8x256xf32>
    %136 = vector.broadcast %95 : vector<1x256xf32> to vector<8x256xf32>
    %137 = arith.addf %135, %136 : vector<8x256xf32>
    %c0_71 = arith.constant 0 : index
    %c0_72 = arith.constant 0 : index
    %138 = vector.load %arg28[%c0_71, %c0_72] : memref<1x256xf32, #tpu.memory_space<vmem>>, vector<1x256xf32>
    %c0_73 = arith.constant 0 : index
    %c0_74 = arith.constant 0 : index
    %139 = vector.load %arg29[%c0_73, %c0_74] : memref<1x256xf32, #tpu.memory_space<vmem>>, vector<1x256xf32>
    %140 = arith.addf %86, %137 : vector<8x256xf32>
    %cst_75 = arith.constant dense<0.000000e+00> : vector<8xf32>
    %141 = vector.multi_reduction <add>, %140, %cst_75 [1] : vector<8x256xf32> to vector<8xf32>
    %142 = vector.shape_cast %141 : vector<8xf32> to vector<8x1xf32>
    %cst_76 = arith.constant 2.560000e+02 : f32
    %143 = vector.broadcast %cst_76 : f32 to vector<8x1xf32>
    %144 = arith.divf %142, %143 : vector<8x1xf32>
    %145 = vector.broadcast %144 : vector<8x1xf32> to vector<8x256xf32>
    %146 = arith.subf %140, %145 : vector<8x256xf32>
    %147 = arith.mulf %146, %146 : vector<8x256xf32>
    %cst_77 = arith.constant dense<0.000000e+00> : vector<8xf32>
    %148 = vector.multi_reduction <add>, %147, %cst_77 [1] : vector<8x256xf32> to vector<8xf32>
    %149 = vector.shape_cast %148 : vector<8xf32> to vector<8x1xf32>
    %cst_78 = arith.constant 2.560000e+02 : f32
    %150 = vector.broadcast %cst_78 : f32 to vector<8x1xf32>
    %151 = arith.divf %149, %150 : vector<8x1xf32>
    %152 = vector.broadcast %144 : vector<8x1xf32> to vector<8x256xf32>
    %153 = arith.subf %140, %152 : vector<8x256xf32>
    %cst_79 = arith.constant 9.99999974E-6 : f32
    %154 = vector.broadcast %cst_79 : f32 to vector<8x1xf32>
    %155 = arith.addf %151, %154 : vector<8x1xf32>
    %156 = math.rsqrt %155 : vector<8x1xf32>
    %157 = vector.broadcast %156 : vector<8x1xf32> to vector<8x256xf32>
    %158 = arith.mulf %153, %157 : vector<8x256xf32>
    %159 = vector.broadcast %138 : vector<1x256xf32> to vector<8x256xf32>
    %160 = arith.mulf %158, %159 : vector<8x256xf32>
    %161 = vector.broadcast %139 : vector<1x256xf32> to vector<8x256xf32>
    %162 = arith.addf %160, %161 : vector<8x256xf32>
    %163 = arith.truncf %162 : vector<8x256xf32> to vector<8x256xbf16>
    %c0_80 = arith.constant 0 : index
    %c0_81 = arith.constant 0 : index
    %164 = vector.load %arg22[%c0_80, %c0_81] : memref<256x512xbf16, #tpu.memory_space<vmem>>, vector<256x512xbf16>
    %cst_82 = arith.constant dense<0.000000e+00> : vector<8x512xf32>
    %165 = tpu.matmul %163, %164, %cst_82 {dimension_numbers = #tpu.dot_dimension_numbers<[1], [0], [0], [1], [0, 0, 1, 1], [], []>} : vector<8x256xbf16>, vector<256x512xbf16>, vector<8x512xf32> -> vector<8x512xf32>
    %c0_83 = arith.constant 0 : index
    %c0_84 = arith.constant 0 : index
    %166 = vector.load %arg23[%c0_83, %c0_84] : memref<1x512xf32, #tpu.memory_space<vmem>>, vector<1x512xf32>
    %167 = vector.broadcast %166 : vector<1x512xf32> to vector<8x512xf32>
    %168 = arith.addf %165, %167 : vector<8x512xf32>
    %cst_85 = arith.constant 0.000000e+00 : f32
    %169 = vector.broadcast %cst_85 : f32 to vector<8x512xf32>
    %170 = arith.maximumf %168, %169 : vector<8x512xf32>
    %171 = arith.truncf %170 : vector<8x512xf32> to vector<8x512xbf16>
    %c0_86 = arith.constant 0 : index
    %c0_87 = arith.constant 0 : index
    %172 = vector.load %arg24[%c0_86, %c0_87] : memref<512x256xbf16, #tpu.memory_space<vmem>>, vector<512x256xbf16>
    %cst_88 = arith.constant dense<0.000000e+00> : vector<8x256xf32>
    %173 = tpu.matmul %171, %172, %cst_88 {dimension_numbers = #tpu.dot_dimension_numbers<[1], [0], [0], [1], [0, 0, 1, 1], [], []>} : vector<8x512xbf16>, vector<512x256xbf16>, vector<8x256xf32> -> vector<8x256xf32>
    %c0_89 = arith.constant 0 : index
    %c0_90 = arith.constant 0 : index
    %174 = vector.load %arg25[%c0_89, %c0_90] : memref<1x256xf32, #tpu.memory_space<vmem>>, vector<1x256xf32>
    %175 = vector.broadcast %174 : vector<1x256xf32> to vector<8x256xf32>
    %176 = arith.addf %173, %175 : vector<8x256xf32>
    %c0_91 = arith.constant 0 : index
    %c0_92 = arith.constant 0 : index
    %177 = vector.load %arg30[%c0_91, %c0_92] : memref<1x256xf32, #tpu.memory_space<vmem>>, vector<1x256xf32>
    %c0_93 = arith.constant 0 : index
    %c0_94 = arith.constant 0 : index
    %178 = vector.load %arg31[%c0_93, %c0_94] : memref<1x256xf32, #tpu.memory_space<vmem>>, vector<1x256xf32>
    %179 = arith.addf %162, %176 : vector<8x256xf32>
    %cst_95 = arith.constant dense<0.000000e+00> : vector<8xf32>
    %180 = vector.multi_reduction <add>, %179, %cst_95 [1] : vector<8x256xf32> to vector<8xf32>
    %181 = vector.shape_cast %180 : vector<8xf32> to vector<8x1xf32>
    %cst_96 = arith.constant 2.560000e+02 : f32
    %182 = vector.broadcast %cst_96 : f32 to vector<8x1xf32>
    %183 = arith.divf %181, %182 : vector<8x1xf32>
    %184 = vector.broadcast %183 : vector<8x1xf32> to vector<8x256xf32>
    %185 = arith.subf %179, %184 : vector<8x256xf32>
    %186 = arith.mulf %185, %185 : vector<8x256xf32>
    %cst_97 = arith.constant dense<0.000000e+00> : vector<8xf32>
    %187 = vector.multi_reduction <add>, %186, %cst_97 [1] : vector<8x256xf32> to vector<8xf32>
    %188 = vector.shape_cast %187 : vector<8xf32> to vector<8x1xf32>
    %cst_98 = arith.constant 2.560000e+02 : f32
    %189 = vector.broadcast %cst_98 : f32 to vector<8x1xf32>
    %190 = arith.divf %188, %189 : vector<8x1xf32>
    %191 = vector.broadcast %183 : vector<8x1xf32> to vector<8x256xf32>
    %192 = arith.subf %179, %191 : vector<8x256xf32>
    %cst_99 = arith.constant 9.99999974E-6 : f32
    %193 = vector.broadcast %cst_99 : f32 to vector<8x1xf32>
    %194 = arith.addf %190, %193 : vector<8x1xf32>
    %195 = math.rsqrt %194 : vector<8x1xf32>
    %196 = vector.broadcast %195 : vector<8x1xf32> to vector<8x256xf32>
    %197 = arith.mulf %192, %196 : vector<8x256xf32>
    %198 = vector.broadcast %177 : vector<1x256xf32> to vector<8x256xf32>
    %199 = arith.mulf %197, %198 : vector<8x256xf32>
    %200 = vector.broadcast %178 : vector<1x256xf32> to vector<8x256xf32>
    %201 = arith.addf %199, %200 : vector<8x256xf32>
    %202 = arith.truncf %201 : vector<8x256xf32> to vector<8x256xbf16>
    %c0_100 = arith.constant 0 : index
    %c0_101 = arith.constant 0 : index
    %c0_102 = arith.constant 0 : index
    %203 = vector.load %arg32[%c0_100, %c0_101, %c0_102] : memref<1x8x256xbf16, #tpu.memory_space<vmem>>, vector<1x8x256xbf16>
    %204 = vector.shape_cast %203 : vector<1x8x256xbf16> to vector<8x256xbf16>
    %205 = vector.shape_cast %202 : vector<8x256xbf16> to vector<1x8x256xbf16>
    tpu.vector_store %arg32[%c0_100, %c0_101, %c0_102], %205 {strides = array<i32>} : memref<1x8x256xbf16, #tpu.memory_space<vmem>>, vector<1x8x256xbf16>,
    return
  }
  func.func @transform_0(%arg0: i32) -> (i32, i32, i32) {
    %c0_i32 = arith.constant 0 : i32
    %c0_i32_0 = arith.constant 0 : i32
    %c0_i32_1 = arith.constant 0 : i32
    return %arg0, %c0_i32, %c0_i32_0 : i32, i32, i32
  }
  func.func @transform_1(%arg0: i32) -> (i32, i32, i32) {
    %c0_i32 = arith.constant 0 : i32
    %c0_i32_0 = arith.constant 0 : i32
    %c0_i32_1 = arith.constant 0 : i32
    return %arg0, %c0_i32, %c0_i32_0 : i32, i32, i32
  }
  func.func @transform_2(%arg0: i32) -> (i32, i32) {
    %c0_i32 = arith.constant 0 : i32
    %c0_i32_0 = arith.constant 0 : i32
    %c0_i32_1 = arith.constant 0 : i32
    return %c0_i32, %c0_i32_0 : i32, i32
  }
  func.func @transform_3(%arg0: i32) -> (i32, i32, i32) {
    %c0_i32 = arith.constant 0 : i32
    %c0_i32_0 = arith.constant 0 : i32
    %c0_i32_1 = arith.constant 0 : i32
    return %arg0, %c0_i32, %c0_i32_0 : i32, i32, i32
  }
  func.func @transform_4(%arg0: i32) -> (i32, i32, i32) {
    %c0_i32 = arith.constant 0 : i32
    %c0_i32_0 = arith.constant 0 : i32
    %c0_i32_1 = arith.constant 0 : i32
    return %arg0, %c0_i32, %c0_i32_0 : i32, i32, i32
  }
  func.func @transform_5(%arg0: i32) -> (i32, i32) {
    %c0_i32 = arith.constant 0 : i32
    %c0_i32_0 = arith.constant 0 : i32
    %c0_i32_1 = arith.constant 0 : i32
    return %c0_i32, %c0_i32_0 : i32, i32
  }
  func.func @transform_6(%arg0: i32) -> (i32, i32) {
    %c0_i32 = arith.constant 0 : i32
    %c0_i32_0 = arith.constant 0 : i32
    %c0_i32_1 = arith.constant 0 : i32
    return %c0_i32, %c0_i32_0 : i32, i32
  }
  func.func @transform_7(%arg0: i32) -> (i32, i32) {
    %c0_i32 = arith.constant 0 : i32
    %c0_i32_0 = arith.constant 0 : i32
    %c0_i32_1 = arith.constant 0 : i32
    return %c0_i32, %c0_i32_0 : i32, i32
  }
  func.func @transform_8(%arg0: i32) -> (i32, i32) {
    %c0_i32 = arith.constant 0 : i32
    %c0_i32_0 = arith.constant 0 : i32
    %c0_i32_1 = arith.constant 0 : i32
    return %c0_i32, %c0_i32_0 : i32, i32
  }
  func.func @transform_9(%arg0: i32) -> (i32, i32) {
    %c0_i32 = arith.constant 0 : i32
    %c0_i32_0 = arith.constant 0 : i32
    %c0_i32_1 = arith.constant 0 : i32
    return %c0_i32, %c0_i32_0 : i32, i32
  }
  func.func @transform_10(%arg0: i32) -> (i32, i32) {
    %c0_i32 = arith.constant 0 : i32
    %c0_i32_0 = arith.constant 0 : i32
    %c0_i32_1 = arith.constant 0 : i32
    return %c0_i32, %c0_i32_0 : i32, i32
  }
  func.func @transform_11(%arg0: i32) -> (i32, i32) {
    %c0_i32 = arith.constant 0 : i32
    %c0_i32_0 = arith.constant 0 : i32
    %c0_i32_1 = arith.constant 0 : i32
    return %c0_i32, %c0_i32_0 : i32, i32
  }
  func.func @transform_12(%arg0: i32) -> (i32, i32) {
    %c0_i32 = arith.constant 0 : i32
    %c0_i32_0 = arith.constant 0 : i32
    %c0_i32_1 = arith.constant 0 : i32
    return %c0_i32, %c0_i32_0 : i32, i32
  }
  func.func @transform_13(%arg0: i32) -> (i32, i32) {
    %c0_i32 = arith.constant 0 : i32
    %c0_i32_0 = arith.constant 0 : i32
    %c0_i32_1 = arith.constant 0 : i32
    return %c0_i32, %c0_i32_0 : i32, i32
  }
  func.func @transform_14(%arg0: i32) -> (i32, i32) {
    %c0_i32 = arith.constant 0 : i32
    %c0_i32_0 = arith.constant 0 : i32
    %c0_i32_1 = arith.constant 0 : i32
    return %c0_i32, %c0_i32_0 : i32, i32
  }
  func.func @transform_15(%arg0: i32) -> (i32, i32) {
    %c0_i32 = arith.constant 0 : i32
    %c0_i32_0 = arith.constant 0 : i32
    %c0_i32_1 = arith.constant 0 : i32
    return %c0_i32, %c0_i32_0 : i32, i32
  }
  func.func @transform_16(%arg0: i32) -> (i32, i32) {
    %c0_i32 = arith.constant 0 : i32
    %c0_i32_0 = arith.constant 0 : i32
    %c0_i32_1 = arith.constant 0 : i32
    return %c0_i32, %c0_i32_0 : i32, i32
  }
  func.func @transform_17(%arg0: i32) -> (i32, i32) {
    %c0_i32 = arith.constant 0 : i32
    %c0_i32_0 = arith.constant 0 : i32
    %c0_i32_1 = arith.constant 0 : i32
    return %c0_i32, %c0_i32_0 : i32, i32
  }
  func.func @transform_18(%arg0: i32) -> (i32, i32) {
    %c0_i32 = arith.constant 0 : i32
    %c0_i32_0 = arith.constant 0 : i32
    %c0_i32_1 = arith.constant 0 : i32
    return %c0_i32, %c0_i32_0 : i32, i32
  }
  func.func @transform_19(%arg0: i32) -> (i32, i32) {
    %c0_i32 = arith.constant 0 : i32
    %c0_i32_0 = arith.constant 0 : i32
    %c0_i32_1 = arith.constant 0 : i32
    return %c0_i32, %c0_i32_0 : i32, i32
  }
  func.func @transform_20(%arg0: i32) -> (i32, i32) {
    %c0_i32 = arith.constant 0 : i32
    %c0_i32_0 = arith.constant 0 : i32
    %c0_i32_1 = arith.constant 0 : i32
    return %c0_i32, %c0_i32_0 : i32, i32
  }
  func.func @transform_21(%arg0: i32) -> (i32, i32) {
    %c0_i32 = arith.constant 0 : i32
    %c0_i32_0 = arith.constant 0 : i32
    %c0_i32_1 = arith.constant 0 : i32
    return %c0_i32, %c0_i32_0 : i32, i32
  }
  func.func @transform_22(%arg0: i32) -> (i32, i32) {
    %c0_i32 = arith.constant 0 : i32
    %c0_i32_0 = arith.constant 0 : i32
    %c0_i32_1 = arith.constant 0 : i32
    return %c0_i32, %c0_i32_0 : i32, i32
  }
  func.func @transform_23(%arg0: i32) -> (i32, i32) {
    %c0_i32 = arith.constant 0 : i32
    %c0_i32_0 = arith.constant 0 : i32
    %c0_i32_1 = arith.constant 0 : i32
    return %c0_i32, %c0_i32_0 : i32, i32
  }
  func.func @transform_24(%arg0: i32) -> (i32, i32) {
    %c0_i32 = arith.constant 0 : i32
    %c0_i32_0 = arith.constant 0 : i32
    %c0_i32_1 = arith.constant 0 : i32
    return %c0_i32, %c0_i32_0 : i32, i32
  }
  func.func @transform_25(%arg0: i32) -> (i32, i32) {
    %c0_i32 = arith.constant 0 : i32
    %c0_i32_0 = arith.constant 0 : i32
    %c0_i32_1 = arith.constant 0 : i32
    return %c0_i32, %c0_i32_0 : i32, i32
  }
  func.func @transform_26(%arg0: i32) -> (i32, i32) {
    %c0_i32 = arith.constant 0 : i32
    %c0_i32_0 = arith.constant 0 : i32
    %c0_i32_1 = arith.constant 0 : i32
    return %c0_i32, %c0_i32_0 : i32, i32
  }
  func.func @transform_27(%arg0: i32) -> (i32, i32) {
    %c0_i32 = arith.constant 0 : i32
    %c0_i32_0 = arith.constant 0 : i32
    %c0_i32_1 = arith.constant 0 : i32
    return %c0_i32, %c0_i32_0 : i32, i32
  }
  func.func @transform_28(%arg0: i32) -> (i32, i32) {
    %c0_i32 = arith.constant 0 : i32
    %c0_i32_0 = arith.constant 0 : i32
    %c0_i32_1 = arith.constant 0 : i32
    return %c0_i32, %c0_i32_0 : i32, i32
  }
  func.func @transform_29(%arg0: i32) -> (i32, i32) {
    %c0_i32 = arith.constant 0 : i32
    %c0_i32_0 = arith.constant 0 : i32
    %c0_i32_1 = arith.constant 0 : i32
    return %c0_i32, %c0_i32_0 : i32, i32
  }
  func.func @transform_30(%arg0: i32) -> (i32, i32) {
    %c0_i32 = arith.constant 0 : i32
    %c0_i32_0 = arith.constant 0 : i32
    %c0_i32_1 = arith.constant 0 : i32
    return %c0_i32, %c0_i32_0 : i32, i32
  }
  func.func @transform_31(%arg0: i32) -> (i32, i32, i32) {
    %c0_i32 = arith.constant 0 : i32
    %c0_i32_0 = arith.constant 0 : i32
    %c0_i32_1 = arith.constant 0 : i32
    return %arg0, %c0_i32, %c0_i32_0 : i32, i32, i32
  }
}

</mosaic_0001>

<llo_original>
// kernel: tpu_custom_call.1
$region0: #{tpu_custom_call.1}
  #allocation0 [shape = 'u32[]', space=smem, size = 0x4, offset = 0x4, fixed_abs, tag = 'smem constant byte address 0x4 - core index']
  #allocation1 [shape = 'u32[72,128]{1,0:T(1,128)}', space=vmem, size = 0x9000, scoped, tag = 'internal scratch']
  %s0 = inlined_call_operand.smem [shape: u32[32], index: -1, kind: input, shape index: {}]
  %s1 = sld [smem:[%s0]]
  %s2 = scalar_lea.smem %s0, 1
  %s3 = sld [smem:[%s2]]
  %s4 = scalar_lea.smem %s0, 2
  %s5 = sld [smem:[%s4]]
  %s6 = scalar_lea.smem %s0, 3
  %s7 = sld [smem:[%s6]]
  %s8 = scalar_lea.smem %s0, 4
  %s9 = sld [smem:[%s8]]
  %s10 = scalar_lea.smem %s0, 5
  %s11 = sld [smem:[%s10]]
  %s12 = scalar_lea.smem %s0, 6
  %s13 = sld [smem:[%s12]]
  %s14 = scalar_lea.smem %s0, 7
  %s15 = sld [smem:[%s14]]
  %s16 = scalar_lea.smem %s0, 8
  %s17 = sld [smem:[%s16]]
  %s18 = scalar_lea.smem %s0, 9
  %s19 = sld [smem:[%s18]]
  %s20 = scalar_lea.smem %s0, 10
  %s21 = sld [smem:[%s20]]
  %s22 = scalar_lea.smem %s0, 11
  %s23 = sld [smem:[%s22]]
  %s24 = scalar_lea.smem %s0, 12
  %s25 = sld [smem:[%s24]]
  %s26 = scalar_lea.smem %s0, 13
  %s27 = sld [smem:[%s26]]
  %s28 = scalar_lea.smem %s0, 14
  %s29 = sld [smem:[%s28]]
  %s30 = scalar_lea.smem %s0, 15
  %s31 = sld [smem:[%s30]]
  %s32 = scalar_lea.smem %s0, 16
  %s33 = sld [smem:[%s32]]
  %s34 = scalar_lea.smem %s0, 17
  %s35 = sld [smem:[%s34]]
  %s36 = scalar_lea.smem %s0, 18
  %s37 = sld [smem:[%s36]]
  %s38 = scalar_lea.smem %s0, 19
  %s39 = sld [smem:[%s38]]
  %s40 = scalar_lea.smem %s0, 20
  %s41 = sld [smem:[%s40]]
  %s42 = scalar_lea.smem %s0, 21
  %s43 = sld [smem:[%s42]]
  %s44 = scalar_lea.smem %s0, 22
  %s45 = sld [smem:[%s44]]
  %s46 = scalar_lea.smem %s0, 23
  %s47 = sld [smem:[%s46]]
  %s48 = scalar_lea.smem %s0, 24
  %s49 = sld [smem:[%s48]]
  %s50 = scalar_lea.smem %s0, 25
  %s51 = sld [smem:[%s50]]
  %s52 = scalar_lea.smem %s0, 26
  %s53 = sld [smem:[%s52]]
  %s54 = scalar_lea.smem %s0, 27
  %s55 = sld [smem:[%s54]]
  %s56 = scalar_lea.smem %s0, 28
  %s57 = sld [smem:[%s56]]
  %s58 = scalar_lea.smem %s0, 29
  %s59 = sld [smem:[%s58]]
  %s60 = scalar_lea.smem %s0, 30
  %s61 = sld [smem:[%s60]]
  %s62 = scalar_lea.smem %s0, 31
  %s63 = sld [smem:[%s62]]
  %s64 = sld [smem:[#allocation0]]
  $region229: #{tpu_custom_call.1} parent=0
    _
  %s66 = ssub.s32 1, %s64
  %s67 = scalar_select 0, %s66, %s64
  $region1: #{tpu_custom_call.1} parent=0
    #allocation2 [shape = 'u8[8192]{0}', space=vmem, size = 0x2000, scoped, tag = 'input window, operand 0']
    #allocation3 [shape = 's32[2]{0}', space=sflag, size = 0x8, scoped, tag = 'scoped memory for tpu_custom_call.1']
    #allocation4 [shape = 's32[2]{0}', space=sflag, size = 0x8, scoped, tag = 'scoped memory for tpu_custom_call.1']
    #allocation5 [shape = 'u8[16384]{0}', space=vmem, size = 0x4000, scoped, tag = 'input window, operand 1']
    #allocation6 [shape = 's32[2]{0}', space=sflag, size = 0x8, scoped, tag = 'scoped memory for tpu_custom_call.1']
    #allocation7 [shape = 'u8[4096]{0}', space=vmem, size = 0x1000, scoped, tag = 'input window, operand 2, single buffered']
    #allocation8 [shape = 'u8[1024]{0}', space=vmem, size = 0x400, scoped, tag = 'input window, operand 4']
    #allocation9 [shape = 's32[2]{0}', space=sflag, size = 0x8, scoped, tag = 'scoped memory for tpu_custom_call.1']
    #allocation10 [shape = 'u8[131072]{0}', space=vmem, size = 0x20000, scoped, tag = 'input window, operand 5, single buffered']
    #allocation11 [shape = 'u8[131072]{0}', space=vmem, size = 0x20000, scoped, tag = 'input window, operand 6, single buffered']
    #allocation12 [shape = 's32[1]{0}', space=sflag, size = 0x4, scoped, tag = 'scoped memory for tpu_custom_call.1']
    #allocation13 [shape = 'u8[131072]{0}', space=vmem, size = 0x20000, scoped, tag = 'input window, operand 7, single buffered']
    #allocation14 [shape = 'u8[1024]{0}', space=vmem, size = 0x400, scoped, tag = 'input window, operand 8, single buffered']
    #allocation15 [shape = 's32[1]{0}', space=sflag, size = 0x4, scoped, tag = 'scoped memory for tpu_custom_call.1']
    #allocation16 [shape = 'u8[1024]{0}', space=vmem, size = 0x400, scoped, tag = 'input window, operand 10, single buffered']
    #allocation17 [shape = 'u8[131072]{0}', space=vmem, size = 0x20000, scoped, tag = 'input window, operand 11, single buffered']
    #allocation18 [shape = 's32[1]{0}', space=sflag, size = 0x4, scoped, tag = 'scoped memory for tpu_custom_call.1']
    #allocation19 [shape = 'u8[131072]{0}', space=vmem, size = 0x20000, scoped, tag = 'input window, operand 13, single buffered']
    #allocation20 [shape = 'u8[131072]{0}', space=vmem, size = 0x20000, scoped, tag = 'input window, operand 14, single buffered']
    #allocation21 [shape = 's32[1]{0}', space=sflag, size = 0x4, scoped, tag = 'scoped memory for tpu_custom_call.1']
    #allocation22 [shape = 'u8[131072]{0}', space=vmem, size = 0x20000, scoped, tag = 'input window, operand 15, single buffered']
    #allocation23 [shape = 'u8[131072]{0}', space=vmem, size = 0x20000, scoped, tag = 'input window, operand 19, single buffered']
    #allocation24 [shape = 's32[1]{0}', space=sflag, size = 0x4, scoped, tag = 'scoped memory for tpu_custom_call.1']
    #allocation25 [shape = 'u8[262144]{0}', space=vmem, size = 0x40000, scoped, tag = 'input window, operand 21, single buffered']
    #allocation26 [shape = 'u8[262144]{0}', space=vmem, size = 0x40000, scoped, tag = 'input window, operand 23, single buffered']
    #allocation27 [shape = 's32[1]{0}', space=sflag, size = 0x4, scoped, tag = 'scoped memory for tpu_custom_call.1']
    #allocation28 [shape = 'u8[1024]{0}', space=vmem, size = 0x400, scoped, tag = 'input window, operand 27, single buffered']
    #allocation29 [shape = 'u8[1024]{0}', space=vmem, size = 0x400, scoped, tag = 'input window, operand 29, single buffered']
    #allocation30 [shape = 's32[1]{0}', space=sflag, size = 0x4, scoped, tag = 'scoped memory for tpu_custom_call.1']
    #allocation31 [shape = 'u8[8192]{0}', space=vmem, size = 0x2000, scoped, tag = 'output window, operand 0']
    %68 = vsyncpa [#allocation3], 0
    %s69 = scalar_lea.sflag [#allocation3], 1
    %70 = vsyncpa %s69, 0
    %71 = vsyncpa [#allocation6], 0
    %s72 = scalar_lea.sflag [#allocation6], 1
    %73 = vsyncpa %s72, 0
    %74 = vsyncpa [#allocation9], 0
    %s75 = scalar_lea.sflag [#allocation9], 1
    %76 = vsyncpa %s75, 0
    %77 = vsyncpa [#allocation12], 0
    %78 = vsyncpa [#allocation15], 0
    %79 = vsyncpa [#allocation18], 0
    %80 = vsyncpa [#allocation21], 0
    %81 = vsyncpa [#allocation24], 0
    %82 = vsyncpa [#allocation27], 0
    %83 = vsyncpa [#allocation30], 0
    %84 = vsyncpa [#allocation4], 0
    %s85 = scalar_lea.sflag [#allocation4], 1
    %86 = vsyncpa %s85, 0
    loop: start=0, step=1, limit=4
    $region2: #{tpu_custom_call.1} parent=1 // loop_pre_header
      _
    $region3: #{tpu_custom_call.1} parent=1 // loop_header
      %s88 = sphi 0, %s92
      %p89 = scmp.ge.s32.totalorder %s88, 4
      %s98 = sphi 0, %s100
      %s101 = sphi 0, %s98
      %s102 = sphi 0, %s101
      %s118 = sphi 0, %s102
      %s124 = sphi 0, %s126
      %s127 = sphi 0, %s124
      %s128 = sphi 0, %s127
      %s144 = sphi 0, %s128
      %s148 = sphi 0, %s148
      %s150 = sphi 0, %s148
      %s151 = sphi 0, %s150
      %s165 = sphi 0, %s151
      %s171 = sphi 0, %s173
      %s174 = sphi 0, %s171
      %s175 = sphi 0, %s174
      %s191 = sphi 0, %s175
      %s197 = sphi 0, %s199
      %s200 = sphi 0, %s197
      %s201 = sphi 0, %s200
      %s217 = sphi 0, %s201
      %s221 = sphi 0, %s221
      %s223 = sphi 0, %s221
      %s224 = sphi 0, %s223
      %s238 = sphi 0, %s224
      %s242 = sphi 0, %s242
      %s244 = sphi 0, %s242
      %s245 = sphi 0, %s244
      %s259 = sphi 0, %s245
      %s263 = sphi 0, %s263
      %s265 = sphi 0, %s263
      %s266 = sphi 0, %s265
      %s280 = sphi 0, %s266
      %s284 = sphi 0, %s284
      %s286 = sphi 0, %s284
      %s287 = sphi 0, %s286
      %s301 = sphi 0, %s287
      %s305 = sphi 0, %s305
      %s307 = sphi 0, %s305
      %s308 = sphi 0, %s307
      %s322 = sphi 0, %s308
      %s326 = sphi 0, %s326
      %s328 = sphi 0, %s326
      %s329 = sphi 0, %s328
      %s343 = sphi 0, %s329
      %s347 = sphi 0, %s347
      %s349 = sphi 0, %s347
      %s350 = sphi 0, %s349
      %s364 = sphi 0, %s350
      %s368 = sphi 0, %s368
      %s370 = sphi 0, %s368
      %s371 = sphi 0, %s370
      %s385 = sphi 0, %s371
      %s389 = sphi 0, %s389
      %s391 = sphi 0, %s389
      %s392 = sphi 0, %s391
      %s406 = sphi 0, %s392
      %s410 = sphi 0, %s410
      %s412 = sphi 0, %s410
      %s413 = sphi 0, %s412
      %s427 = sphi 0, %s413
      %s431 = sphi 0, %s431
      %s433 = sphi 0, %s431
      %s434 = sphi 0, %s433
      %s448 = sphi 0, %s434
      %s452 = sphi 0, %s452
      %s454 = sphi 0, %s452
      %s455 = sphi 0, %s454
      %s469 = sphi 0, %s455
      %s473 = sphi 0, %s473
      %s475 = sphi 0, %s473
      %s476 = sphi 0, %s475
      %s490 = sphi 0, %s476
      %s494 = sphi 0, %s494
      %s496 = sphi 0, %s494
      %s497 = sphi 0, %s496
      %s511 = sphi 0, %s497
      %s515 = sphi 0, %s515
      %s517 = sphi 0, %s515
      %s518 = sphi 0, %s517
      %s532 = sphi 0, %s518
      %s536 = sphi 0, %s536
      %s538 = sphi 0, %s536
      %s539 = sphi 0, %s538
      %s553 = sphi 0, %s539
      %s557 = sphi 0, %s557
      %s559 = sphi 0, %s557
      %s560 = sphi 0, %s559
      %s574 = sphi 0, %s560
      %s578 = sphi 0, %s578
      %s580 = sphi 0, %s578
      %s581 = sphi 0, %s580
      %s595 = sphi 0, %s581
      %s599 = sphi 0, %s599
      %s601 = sphi 0, %s599
      %s602 = sphi 0, %s601
      %s616 = sphi 0, %s602
      %s620 = sphi 0, %s620
      %s622 = sphi 0, %s620
      %s623 = sphi 0, %s622
      %s637 = sphi 0, %s623
      %s641 = sphi 0, %s641
      %s643 = sphi 0, %s641
      %s644 = sphi 0, %s643
      %s658 = sphi 0, %s644
      %s662 = sphi 0, %s662
      %s664 = sphi 0, %s662
      %s665 = sphi 0, %s664
      %s679 = sphi 0, %s665
      %s683 = sphi 0, %s683
      %s685 = sphi 0, %s683
      %s686 = sphi 0, %s685
      %s700 = sphi 0, %s686
      %s704 = sphi 0, %s704
      %s706 = sphi 0, %s704
      %s707 = sphi 0, %s706
      %s721 = sphi 0, %s707
      %s725 = sphi 0, %s725
      %s727 = sphi 0, %s725
      %s728 = sphi 0, %s727
      %s742 = sphi 0, %s728
      %s746 = sphi 0, %s746
      %s748 = sphi 0, %s746
      %s749 = sphi 0, %s748
      %s763 = sphi 0, %s749
      %s769 = sphi 0, %s771
      %s772 = sphi 0, %s769
      %s773 = sphi 0, %s772
      %s789 = sphi 0, %s773
    $region4: #{tpu_custom_call.1} parent=1 // loop_header_branch
      %91 = sbr.rel (%p89) target = $region8
    $region5: #{tpu_custom_call.1} parent=1 // loop_body
      %s93 = ssub.s32 %s88, 1
      %s94 = ssub.s32 %s88, 2
      %s95 = sadd.s32 %s88, 1
      %s96 = ssub.s32 %s88, %s95
      %p97 = scmp.eq.s32.totalorder %s96, 0
      %s99 = sadd.s32 %s98, 1
      %s100 = scalar_select %p97, %s98, %s99
      %p103 = pneg %p97
      %p104 = scmp.eq.s32.totalorder %s88, 1
      %p105 = por %p103, %p104
      %p106 = scmp.ne.s32.totalorder %s98, %s101
      %p107 = scmp.eq.s32.totalorder %s88, 0
      %p108 = por %p106, %p107
      %p109 = scmp.ne.s32.totalorder %s98, %s101
      %p110 = scmp.eq.s32.totalorder %s93, 1
      %p111 = por %p109, %p110
      %p112 = scmp.ne.s32.totalorder %s101, %s102
      %p113 = scmp.eq.s32.totalorder %s93, 0
      %p114 = por %p112, %p113
      %p115 = scmp.ne.s32.totalorder %s101, %s102
      %p116 = scmp.eq.s32.totalorder %s94, 1
      %p117 = por %p115, %p116
      %p119 = scmp.ne.s32.totalorder %s102, %s118
      %p120 = scmp.eq.s32.totalorder %s94, 0
      %p121 = por %p119, %p120
      %s122 = ssub.s32 %s88, %s95
      %p123 = scmp.eq.s32.totalorder %s122, 0
      %s125 = sadd.s32 %s124, 1
      %s126 = scalar_select %p123, %s124, %s125
      %p129 = pneg %p123
      %p130 = scmp.eq.s32.totalorder %s88, 1
      %p131 = por %p129, %p130
      %p132 = scmp.ne.s32.totalorder %s124, %s127
      %p133 = scmp.eq.s32.totalorder %s88, 0
      %p134 = por %p132, %p133
      %p135 = scmp.ne.s32.totalorder %s124, %s127
      %p136 = scmp.eq.s32.totalorder %s93, 1
      %p137 = por %p135, %p136
      %p138 = scmp.ne.s32.totalorder %s127, %s128
      %p139 = scmp.eq.s32.totalorder %s93, 0
      %p140 = por %p138, %p139
      %p141 = scmp.ne.s32.totalorder %s127, %s128
      %p142 = scmp.eq.s32.totalorder %s94, 1
      %p143 = por %p141, %p142
      %p145 = scmp.ne.s32.totalorder %s128, %s144
      %p146 = scmp.eq.s32.totalorder %s94, 0
      %p147 = por %p145, %p146
      %s149 = sadd.s32 %s148, 1
      %p152 = scmp.eq.s32.totalorder %s88, 1
      %p153 = scmp.ne.s32.totalorder %s148, %s150
      %p154 = scmp.eq.s32.totalorder %s88, 0
      %p155 = por %p153, %p154
      %p156 = scmp.ne.s32.totalorder %s148, %s150
      %p157 = scmp.eq.s32.totalorder %s93, 1
      %p158 = por %p156, %p157
      %p159 = scmp.ne.s32.totalorder %s150, %s151
      %p160 = scmp.eq.s32.totalorder %s93, 0
      %p161 = por %p159, %p160
      %p162 = scmp.ne.s32.totalorder %s150, %s151
      %p163 = scmp.eq.s32.totalorder %s94, 1
      %p164 = por %p162, %p163
      %p166 = scmp.ne.s32.totalorder %s151, %s165
      %p167 = scmp.eq.s32.totalorder %s94, 0
      %p168 = por %p166, %p167
      %s169 = ssub.s32 %s88, %s95
      %p170 = scmp.eq.s32.totalorder %s169, 0
      %s172 = sadd.s32 %s171, 1
      %s173 = scalar_select %p170, %s171, %s172
      %p176 = pneg %p170
      %p177 = scmp.eq.s32.totalorder %s88, 1
      %p178 = por %p176, %p177
      %p179 = scmp.ne.s32.totalorder %s171, %s174
      %p180 = scmp.eq.s32.totalorder %s88, 0
      %p181 = por %p179, %p180
      %p182 = scmp.ne.s32.totalorder %s171, %s174
      %p183 = scmp.eq.s32.totalorder %s93, 1
      %p184 = por %p182, %p183
      %p185 = scmp.ne.s32.totalorder %s174, %s175
      %p186 = scmp.eq.s32.totalorder %s93, 0
      %p187 = por %p185, %p186
      %p188 = scmp.ne.s32.totalorder %s174, %s175
      %p189 = scmp.eq.s32.totalorder %s94, 1
      %p190 = por %p188, %p189
      %p192 = scmp.ne.s32.totalorder %s175, %s191
      %p193 = scmp.eq.s32.totalorder %s94, 0
      %p194 = por %p192, %p193
      %s195 = ssub.s32 %s88, %s95
      %p196 = scmp.eq.s32.totalorder %s195, 0
      %s198 = sadd.s32 %s197, 1
      %s199 = scalar_select %p196, %s197, %s198
      %p202 = pneg %p196
      %p203 = scmp.eq.s32.totalorder %s88, 1
      %p204 = por %p202, %p203
      %p205 = scmp.ne.s32.totalorder %s197, %s200
      %p206 = scmp.eq.s32.totalorder %s88, 0
      %p207 = por %p205, %p206
      %p208 = scmp.ne.s32.totalorder %s197, %s200
      %p209 = scmp.eq.s32.totalorder %s93, 1
      %p210 = por %p208, %p209
      %p211 = scmp.ne.s32.totalorder %s200, %s201
      %p212 = scmp.eq.s32.totalorder %s93, 0
      %p213 = por %p211, %p212
      %p214 = scmp.ne.s32.totalorder %s200, %s201
      %p215 = scmp.eq.s32.totalorder %s94, 1
      %p216 = por %p214, %p215
      %p218 = scmp.ne.s32.totalorder %s201, %s217
      %p219 = scmp.eq.s32.totalorder %s94, 0
      %p220 = por %p218, %p219
      %s222 = sadd.s32 %s221, 1
      %p225 = scmp.eq.s32.totalorder %s88, 1
      %p226 = scmp.ne.s32.totalorder %s221, %s223
      %p227 = scmp.eq.s32.totalorder %s88, 0
      %p228 = por %p226, %p227
      %p229 = scmp.ne.s32.totalorder %s221, %s223
      %p230 = scmp.eq.s32.totalorder %s93, 1
      %p231 = por %p229, %p230
      %p232 = scmp.ne.s32.totalorder %s223, %s224
      %p233 = scmp.eq.s32.totalorder %s93, 0
      %p234 = por %p232, %p233
      %p235 = scmp.ne.s32.totalorder %s223, %s224
      %p236 = scmp.eq.s32.totalorder %s94, 1
      %p237 = por %p235, %p236
      %p239 = scmp.ne.s32.totalorder %s224, %s238
      %p240 = scmp.eq.s32.totalorder %s94, 0
      %p241 = por %p239, %p240
      %s243 = sadd.s32 %s242, 1
      %p246 = scmp.eq.s32.totalorder %s88, 1
      %p247 = scmp.ne.s32.totalorder %s242, %s244
      %p248 = scmp.eq.s32.totalorder %s88, 0
      %p249 = por %p247, %p248
      %p250 = scmp.ne.s32.totalorder %s242, %s244
      %p251 = scmp.eq.s32.totalorder %s93, 1
      %p252 = por %p250, %p251
      %p253 = scmp.ne.s32.totalorder %s244, %s245
      %p254 = scmp.eq.s32.totalorder %s93, 0
      %p255 = por %p253, %p254
      %p256 = scmp.ne.s32.totalorder %s244, %s245
      %p257 = scmp.eq.s32.totalorder %s94, 1
      %p258 = por %p256, %p257
      %p260 = scmp.ne.s32.totalorder %s245, %s259
      %p261 = scmp.eq.s32.totalorder %s94, 0
      %p262 = por %p260, %p261
      %s264 = sadd.s32 %s263, 1
      %p267 = scmp.eq.s32.totalorder %s88, 1
      %p268 = scmp.ne.s32.totalorder %s263, %s265
      %p269 = scmp.eq.s32.totalorder %s88, 0
      %p270 = por %p268, %p269
      %p271 = scmp.ne.s32.totalorder %s263, %s265
      %p272 = scmp.eq.s32.totalorder %s93, 1
      %p273 = por %p271, %p272
      %p274 = scmp.ne.s32.totalorder %s265, %s266
      %p275 = scmp.eq.s32.totalorder %s93, 0
      %p276 = por %p274, %p275
      %p277 = scmp.ne.s32.totalorder %s265, %s266
      %p278 = scmp.eq.s32.totalorder %s94, 1
      %p279 = por %p277, %p278
      %p281 = scmp.ne.s32.totalorder %s266, %s280
      %p282 = scmp.eq.s32.totalorder %s94, 0
      %p283 = por %p281, %p282
      %s285 = sadd.s32 %s284, 1
      %p288 = scmp.eq.s32.totalorder %s88, 1
      %p289 = scmp.ne.s32.totalorder %s284, %s286
      %p290 = scmp.eq.s32.totalorder %s88, 0
      %p291 = por %p289, %p290
      %p292 = scmp.ne.s32.totalorder %s284, %s286
      %p293 = scmp.eq.s32.totalorder %s93, 1
      %p294 = por %p292, %p293
      %p295 = scmp.ne.s32.totalorder %s286, %s287
      %p296 = scmp.eq.s32.totalorder %s93, 0
      %p297 = por %p295, %p296
      %p298 = scmp.ne.s32.totalorder %s286, %s287
      %p299 = scmp.eq.s32.totalorder %s94, 1
      %p300 = por %p298, %p299
      %p302 = scmp.ne.s32.totalorder %s287, %s301
      %p303 = scmp.eq.s32.totalorder %s94, 0
      %p304 = por %p302, %p303
      %s306 = sadd.s32 %s305, 1
      %p309 = scmp.eq.s32.totalorder %s88, 1
      %p310 = scmp.ne.s32.totalorder %s305, %s307
      %p311 = scmp.eq.s32.totalorder %s88, 0
      %p312 = por %p310, %p311
      %p313 = scmp.ne.s32.totalorder %s305, %s307
      %p314 = scmp.eq.s32.totalorder %s93, 1
      %p315 = por %p313, %p314
      %p316 = scmp.ne.s32.totalorder %s307, %s308
      %p317 = scmp.eq.s32.totalorder %s93, 0
      %p318 = por %p316, %p317
      %p319 = scmp.ne.s32.totalorder %s307, %s308
      %p320 = scmp.eq.s32.totalorder %s94, 1
      %p321 = por %p319, %p320
      %p323 = scmp.ne.s32.totalorder %s308, %s322
      %p324 = scmp.eq.s32.totalorder %s94, 0
      %p325 = por %p323, %p324
      %s327 = sadd.s32 %s326, 1
      %p330 = scmp.eq.s32.totalorder %s88, 1
      %p331 = scmp.ne.s32.totalorder %s326, %s328
      %p332 = scmp.eq.s32.totalorder %s88, 0
      %p333 = por %p331, %p332
      %p334 = scmp.ne.s32.totalorder %s326, %s328
      %p335 = scmp.eq.s32.totalorder %s93, 1
      %p336 = por %p334, %p335
      %p337 = scmp.ne.s32.totalorder %s328, %s329
      %p338 = scmp.eq.s32.totalorder %s93, 0
      %p339 = por %p337, %p338
      %p340 = scmp.ne.s32.totalorder %s328, %s329
      %p341 = scmp.eq.s32.totalorder %s94, 1
      %p342 = por %p340, %p341
      %p344 = scmp.ne.s32.totalorder %s329, %s343
      %p345 = scmp.eq.s32.totalorder %s94, 0
      %p346 = por %p344, %p345
      %s348 = sadd.s32 %s347, 1
      %p351 = scmp.eq.s32.totalorder %s88, 1
      %p352 = scmp.ne.s32.totalorder %s347, %s349
      %p353 = scmp.eq.s32.totalorder %s88, 0
      %p354 = por %p352, %p353
      %p355 = scmp.ne.s32.totalorder %s347, %s349
      %p356 = scmp.eq.s32.totalorder %s93, 1
      %p357 = por %p355, %p356
      %p358 = scmp.ne.s32.totalorder %s349, %s350
      %p359 = scmp.eq.s32.totalorder %s93, 0
      %p360 = por %p358, %p359
      %p361 = scmp.ne.s32.totalorder %s349, %s350
      %p362 = scmp.eq.s32.totalorder %s94, 1
      %p363 = por %p361, %p362
      %p365 = scmp.ne.s32.totalorder %s350, %s364
      %p366 = scmp.eq.s32.totalorder %s94, 0
      %p367 = por %p365, %p366
      %s369 = sadd.s32 %s368, 1
      %p372 = scmp.eq.s32.totalorder %s88, 1
      %p373 = scmp.ne.s32.totalorder %s368, %s370
      %p374 = scmp.eq.s32.totalorder %s88, 0
      %p375 = por %p373, %p374
      %p376 = scmp.ne.s32.totalorder %s368, %s370
      %p377 = scmp.eq.s32.totalorder %s93, 1
      %p378 = por %p376, %p377
      %p379 = scmp.ne.s32.totalorder %s370, %s371
      %p380 = scmp.eq.s32.totalorder %s93, 0
      %p381 = por %p379, %p380
      %p382 = scmp.ne.s32.totalorder %s370, %s371
      %p383 = scmp.eq.s32.totalorder %s94, 1
      %p384 = por %p382, %p383
      %p386 = scmp.ne.s32.totalorder %s371, %s385
      %p387 = scmp.eq.s32.totalorder %s94, 0
      %p388 = por %p386, %p387
      %s390 = sadd.s32 %s389, 1
      %p393 = scmp.eq.s32.totalorder %s88, 1
      %p394 = scmp.ne.s32.totalorder %s389, %s391
      %p395 = scmp.eq.s32.totalorder %s88, 0
      %p396 = por %p394, %p395
      %p397 = scmp.ne.s32.totalorder %s389, %s391
      %p398 = scmp.eq.s32.totalorder %s93, 1
      %p399 = por %p397, %p398
      %p400 = scmp.ne.s32.totalorder %s391, %s392
      %p401 = scmp.eq.s32.totalorder %s93, 0
      %p402 = por %p400, %p401
      %p403 = scmp.ne.s32.totalorder %s391, %s392
      %p404 = scmp.eq.s32.totalorder %s94, 1
      %p405 = por %p403, %p404
      %p407 = scmp.ne.s32.totalorder %s392, %s406
      %p408 = scmp.eq.s32.totalorder %s94, 0
      %p409 = por %p407, %p408
      %s411 = sadd.s32 %s410, 1
      %p414 = scmp.eq.s32.totalorder %s88, 1
      %p415 = scmp.ne.s32.totalorder %s410, %s412
      %p416 = scmp.eq.s32.totalorder %s88, 0
      %p417 = por %p415, %p416
      %p418 = scmp.ne.s32.totalorder %s410, %s412
      %p419 = scmp.eq.s32.totalorder %s93, 1
      %p420 = por %p418, %p419
      %p421 = scmp.ne.s32.totalorder %s412, %s413
      %p422 = scmp.eq.s32.totalorder %s93, 0
      %p423 = por %p421, %p422
      %p424 = scmp.ne.s32.totalorder %s412, %s413
      %p425 = scmp.eq.s32.totalorder %s94, 1
      %p426 = por %p424, %p425
      %p428 = scmp.ne.s32.totalorder %s413, %s427
      %p429 = scmp.eq.s32.totalorder %s94, 0
      %p430 = por %p428, %p429
      %s432 = sadd.s32 %s431, 1
      %p435 = scmp.eq.s32.totalorder %s88, 1
      %p436 = scmp.ne.s32.totalorder %s431, %s433
      %p437 = scmp.eq.s32.totalorder %s88, 0
      %p438 = por %p436, %p437
      %p439 = scmp.ne.s32.totalorder %s431, %s433
      %p440 = scmp.eq.s32.totalorder %s93, 1
      %p441 = por %p439, %p440
      %p442 = scmp.ne.s32.totalorder %s433, %s434
      %p443 = scmp.eq.s32.totalorder %s93, 0
      %p444 = por %p442, %p443
      %p445 = scmp.ne.s32.totalorder %s433, %s434
      %p446 = scmp.eq.s32.totalorder %s94, 1
      %p447 = por %p445, %p446
      %p449 = scmp.ne.s32.totalorder %s434, %s448
      %p450 = scmp.eq.s32.totalorder %s94, 0
      %p451 = por %p449, %p450
      %s453 = sadd.s32 %s452, 1
      %p456 = scmp.eq.s32.totalorder %s88, 1
      %p457 = scmp.ne.s32.totalorder %s452, %s454
      %p458 = scmp.eq.s32.totalorder %s88, 0
      %p459 = por %p457, %p458
      %p460 = scmp.ne.s32.totalorder %s452, %s454
      %p461 = scmp.eq.s32.totalorder %s93, 1
      %p462 = por %p460, %p461
      %p463 = scmp.ne.s32.totalorder %s454, %s455
      %p464 = scmp.eq.s32.totalorder %s93, 0
      %p465 = por %p463, %p464
      %p466 = scmp.ne.s32.totalorder %s454, %s455
      %p467 = scmp.eq.s32.totalorder %s94, 1
      %p468 = por %p466, %p467
      %p470 = scmp.ne.s32.totalorder %s455, %s469
      %p471 = scmp.eq.s32.totalorder %s94, 0
      %p472 = por %p470, %p471
      %s474 = sadd.s32 %s473, 1
      %p477 = scmp.eq.s32.totalorder %s88, 1
      %p478 = scmp.ne.s32.totalorder %s473, %s475
      %p479 = scmp.eq.s32.totalorder %s88, 0
      %p480 = por %p478, %p479
      %p481 = scmp.ne.s32.totalorder %s473, %s475
      %p482 = scmp.eq.s32.totalorder %s93, 1
      %p483 = por %p481, %p482
      %p484 = scmp.ne.s32.totalorder %s475, %s476
      %p485 = scmp.eq.s32.totalorder %s93, 0
      %p486 = por %p484, %p485
      %p487 = scmp.ne.s32.totalorder %s475, %s476
      %p488 = scmp.eq.s32.totalorder %s94, 1
      %p489 = por %p487, %p488
      %p491 = scmp.ne.s32.totalorder %s476, %s490
      %p492 = scmp.eq.s32.totalorder %s94, 0
      %p493 = por %p491, %p492
      %s495 = sadd.s32 %s494, 1
      %p498 = scmp.eq.s32.totalorder %s88, 1
      %p499 = scmp.ne.s32.totalorder %s494, %s496
      %p500 = scmp.eq.s32.totalorder %s88, 0
      %p501 = por %p499, %p500
      %p502 = scmp.ne.s32.totalorder %s494, %s496
      %p503 = scmp.eq.s32.totalorder %s93, 1
      %p504 = por %p502, %p503
      %p505 = scmp.ne.s32.totalorder %s496, %s497
      %p506 = scmp.eq.s32.totalorder %s93, 0
      %p507 = por %p505, %p506
      %p508 = scmp.ne.s32.totalorder %s496, %s497
      %p509 = scmp.eq.s32.totalorder %s94, 1
      %p510 = por %p508, %p509
      %p512 = scmp.ne.s32.totalorder %s497, %s511
      %p513 = scmp.eq.s32.totalorder %s94, 0
      %p514 = por %p512, %p513
      %s516 = sadd.s32 %s515, 1
      %p519 = scmp.eq.s32.totalorder %s88, 1
      %p520 = scmp.ne.s32.totalorder %s515, %s517
      %p521 = scmp.eq.s32.totalorder %s88, 0
      %p522 = por %p520, %p521
      %p523 = scmp.ne.s32.totalorder %s515, %s517
      %p524 = scmp.eq.s32.totalorder %s93, 1
      %p525 = por %p523, %p524
      %p526 = scmp.ne.s32.totalorder %s517, %s518
      %p527 = scmp.eq.s32.totalorder %s93, 0
      %p528 = por %p526, %p527
      %p529 = scmp.ne.s32.totalorder %s517, %s518
      %p530 = scmp.eq.s32.totalorder %s94, 1
      %p531 = por %p529, %p530
      %p533 = scmp.ne.s32.totalorder %s518, %s532
      %p534 = scmp.eq.s32.totalorder %s94, 0
      %p535 = por %p533, %p534
      %s537 = sadd.s32 %s536, 1
      %p540 = scmp.eq.s32.totalorder %s88, 1
      %p541 = scmp.ne.s32.totalorder %s536, %s538
      %p542 = scmp.eq.s32.totalorder %s88, 0
      %p543 = por %p541, %p542
      %p544 = scmp.ne.s32.totalorder %s536, %s538
      %p545 = scmp.eq.s32.totalorder %s93, 1
      %p546 = por %p544, %p545
      %p547 = scmp.ne.s32.totalorder %s538, %s539
      %p548 = scmp.eq.s32.totalorder %s93, 0
      %p549 = por %p547, %p548
      %p550 = scmp.ne.s32.totalorder %s538, %s539
      %p551 = scmp.eq.s32.totalorder %s94, 1
      %p552 = por %p550, %p551
      %p554 = scmp.ne.s32.totalorder %s539, %s553
      %p555 = scmp.eq.s32.totalorder %s94, 0
      %p556 = por %p554, %p555
      %s558 = sadd.s32 %s557, 1
      %p561 = scmp.eq.s32.totalorder %s88, 1
      %p562 = scmp.ne.s32.totalorder %s557, %s559
      %p563 = scmp.eq.s32.totalorder %s88, 0
      %p564 = por %p562, %p563
      %p565 = scmp.ne.s32.totalorder %s557, %s559
      %p566 = scmp.eq.s32.totalorder %s93, 1
      %p567 = por %p565, %p566
      %p568 = scmp.ne.s32.totalorder %s559, %s560
      %p569 = scmp.eq.s32.totalorder %s93, 0
      %p570 = por %p568, %p569
      %p571 = scmp.ne.s32.totalorder %s559, %s560
      %p572 = scmp.eq.s32.totalorder %s94, 1
      %p573 = por %p571, %p572
      %p575 = scmp.ne.s32.totalorder %s560, %s574
      %p576 = scmp.eq.s32.totalorder %s94, 0
      %p577 = por %p575, %p576
      %s579 = sadd.s32 %s578, 1
      %p582 = scmp.eq.s32.totalorder %s88, 1
      %p583 = scmp.ne.s32.totalorder %s578, %s580
      %p584 = scmp.eq.s32.totalorder %s88, 0
      %p585 = por %p583, %p584
      %p586 = scmp.ne.s32.totalorder %s578, %s580
      %p587 = scmp.eq.s32.totalorder %s93, 1
      %p588 = por %p586, %p587
      %p589 = scmp.ne.s32.totalorder %s580, %s581
      %p590 = scmp.eq.s32.totalorder %s93, 0
      %p591 = por %p589, %p590
      %p592 = scmp.ne.s32.totalorder %s580, %s581
      %p593 = scmp.eq.s32.totalorder %s94, 1
      %p594 = por %p592, %p593
      %p596 = scmp.ne.s32.totalorder %s581, %s595
      %p597 = scmp.eq.s32.totalorder %s94, 0
      %p598 = por %p596, %p597
      %s600 = sadd.s32 %s599, 1
      %p603 = scmp.eq.s32.totalorder %s88, 1
      %p604 = scmp.ne.s32.totalorder %s599, %s601
      %p605 = scmp.eq.s32.totalorder %s88, 0
      %p606 = por %p604, %p605
      %p607 = scmp.ne.s32.totalorder %s599, %s601
      %p608 = scmp.eq.s32.totalorder %s93, 1
      %p609 = por %p607, %p608
      %p610 = scmp.ne.s32.totalorder %s601, %s602
      %p611 = scmp.eq.s32.totalorder %s93, 0
      %p612 = por %p610, %p611
      %p613 = scmp.ne.s32.totalorder %s601, %s602
      %p614 = scmp.eq.s32.totalorder %s94, 1
      %p615 = por %p613, %p614
      %p617 = scmp.ne.s32.totalorder %s602, %s616
      %p618 = scmp.eq.s32.totalorder %s94, 0
      %p619 = por %p617, %p618
      %s621 = sadd.s32 %s620, 1
      %p624 = scmp.eq.s32.totalorder %s88, 1
      %p625 = scmp.ne.s32.totalorder %s620, %s622
      %p626 = scmp.eq.s32.totalorder %s88, 0
      %p627 = por %p625, %p626
      %p628 = scmp.ne.s32.totalorder %s620, %s622
      %p629 = scmp.eq.s32.totalorder %s93, 1
      %p630 = por %p628, %p629
      %p631 = scmp.ne.s32.totalorder %s622, %s623
      %p632 = scmp.eq.s32.totalorder %s93, 0
      %p633 = por %p631, %p632
      %p634 = scmp.ne.s32.totalorder %s622, %s623
      %p635 = scmp.eq.s32.totalorder %s94, 1
      %p636 = por %p634, %p635
      %p638 = scmp.ne.s32.totalorder %s623, %s637
      %p639 = scmp.eq.s32.totalorder %s94, 0
      %p640 = por %p638, %p639
      %s642 = sadd.s32 %s641, 1
      %p645 = scmp.eq.s32.totalorder %s88, 1
      %p646 = scmp.ne.s32.totalorder %s641, %s643
      %p647 = scmp.eq.s32.totalorder %s88, 0
      %p648 = por %p646, %p647
      %p649 = scmp.ne.s32.totalorder %s641, %s643
      %p650 = scmp.eq.s32.totalorder %s93, 1
      %p651 = por %p649, %p650
      %p652 = scmp.ne.s32.totalorder %s643, %s644
      %p653 = scmp.eq.s32.totalorder %s93, 0
      %p654 = por %p652, %p653
      %p655 = scmp.ne.s32.totalorder %s643, %s644
      %p656 = scmp.eq.s32.totalorder %s94, 1
      %p657 = por %p655, %p656
      %p659 = scmp.ne.s32.totalorder %s644, %s658
      %p660 = scmp.eq.s32.totalorder %s94, 0
      %p661 = por %p659, %p660
      %s663 = sadd.s32 %s662, 1
      %p666 = scmp.eq.s32.totalorder %s88, 1
      %p667 = scmp.ne.s32.totalorder %s662, %s664
      %p668 = scmp.eq.s32.totalorder %s88, 0
      %p669 = por %p667, %p668
      %p670 = scmp.ne.s32.totalorder %s662, %s664
      %p671 = scmp.eq.s32.totalorder %s93, 1
      %p672 = por %p670, %p671
      %p673 = scmp.ne.s32.totalorder %s664, %s665
      %p674 = scmp.eq.s32.totalorder %s93, 0
      %p675 = por %p673, %p674
      %p676 = scmp.ne.s32.totalorder %s664, %s665
      %p677 = scmp.eq.s32.totalorder %s94, 1
      %p678 = por %p676, %p677
      %p680 = scmp.ne.s32.totalorder %s665, %s679
      %p681 = scmp.eq.s32.totalorder %s94, 0
      %p682 = por %p680, %p681
      %s684 = sadd.s32 %s683, 1
      %p687 = scmp.eq.s32.totalorder %s88, 1
      %p688 = scmp.ne.s32.totalorder %s683, %s685
      %p689 = scmp.eq.s32.totalorder %s88, 0
      %p690 = por %p688, %p689
      %p691 = scmp.ne.s32.totalorder %s683, %s685
      %p692 = scmp.eq.s32.totalorder %s93, 1
      %p693 = por %p691, %p692
      %p694 = scmp.ne.s32.totalorder %s685, %s686
      %p695 = scmp.eq.s32.totalorder %s93, 0
      %p696 = por %p694, %p695
      %p697 = scmp.ne.s32.totalorder %s685, %s686
      %p698 = scmp.eq.s32.totalorder %s94, 1
      %p699 = por %p697, %p698
      %p701 = scmp.ne.s32.totalorder %s686, %s700
      %p702 = scmp.eq.s32.totalorder %s94, 0
      %p703 = por %p701, %p702
      %s705 = sadd.s32 %s704, 1
      %p708 = scmp.eq.s32.totalorder %s88, 1
      %p709 = scmp.ne.s32.totalorder %s704, %s706
      %p710 = scmp.eq.s32.totalorder %s88, 0
      %p711 = por %p709, %p710
      %p712 = scmp.ne.s32.totalorder %s704, %s706
      %p713 = scmp.eq.s32.totalorder %s93, 1
      %p714 = por %p712, %p713
      %p715 = scmp.ne.s32.totalorder %s706, %s707
      %p716 = scmp.eq.s32.totalorder %s93, 0
      %p717 = por %p715, %p716
      %p718 = scmp.ne.s32.totalorder %s706, %s707
      %p719 = scmp.eq.s32.totalorder %s94, 1
      %p720 = por %p718, %p719
      %p722 = scmp.ne.s32.totalorder %s707, %s721
      %p723 = scmp.eq.s32.totalorder %s94, 0
      %p724 = por %p722, %p723
      %s726 = sadd.s32 %s725, 1
      %p729 = scmp.eq.s32.totalorder %s88, 1
      %p730 = scmp.ne.s32.totalorder %s725, %s727
      %p731 = scmp.eq.s32.totalorder %s88, 0
      %p732 = por %p730, %p731
      %p733 = scmp.ne.s32.totalorder %s725, %s727
      %p734 = scmp.eq.s32.totalorder %s93, 1
      %p735 = por %p733, %p734
      %p736 = scmp.ne.s32.totalorder %s727, %s728
      %p737 = scmp.eq.s32.totalorder %s93, 0
      %p738 = por %p736, %p737
      %p739 = scmp.ne.s32.totalorder %s727, %s728
      %p740 = scmp.eq.s32.totalorder %s94, 1
      %p741 = por %p739, %p740
      %p743 = scmp.ne.s32.totalorder %s728, %s742
      %p744 = scmp.eq.s32.totalorder %s94, 0
      %p745 = por %p743, %p744
      %s747 = sadd.s32 %s746, 1
      %p750 = scmp.eq.s32.totalorder %s88, 1
      %p751 = scmp.ne.s32.totalorder %s746, %s748
      %p752 = scmp.eq.s32.totalorder %s88, 0
      %p753 = por %p751, %p752
      %p754 = scmp.ne.s32.totalorder %s746, %s748
      %p755 = scmp.eq.s32.totalorder %s93, 1
      %p756 = por %p754, %p755
      %p757 = scmp.ne.s32.totalorder %s748, %s749
      %p758 = scmp.eq.s32.totalorder %s93, 0
      %p759 = por %p757, %p758
      %p760 = scmp.ne.s32.totalorder %s748, %s749
      %p761 = scmp.eq.s32.totalorder %s94, 1
      %p762 = por %p760, %p761
      %p764 = scmp.ne.s32.totalorder %s749, %s763
      %p765 = scmp.eq.s32.totalorder %s94, 0
      %p766 = por %p764, %p765
      %s767 = ssub.s32 %s88, %s95
      %p768 = scmp.eq.s32.totalorder %s767, 0
      %s770 = sadd.s32 %s769, 1
      %s771 = scalar_select %p768, %s769, %s770
      %p774 = pneg %p768
      %p775 = scmp.eq.s32.totalorder %s88, 1
      %p776 = por %p774, %p775
      %p777 = scmp.ne.s32.totalorder %s769, %s772
      %p778 = scmp.eq.s32.totalorder %s88, 0
      %p779 = por %p777, %p778
      %p780 = scmp.ne.s32.totalorder %s769, %s772
      %p781 = scmp.eq.s32.totalorder %s93, 1
      %p782 = por %p780, %p781
      %p783 = scmp.ne.s32.totalorder %s772, %s773
      %p784 = scmp.eq.s32.totalorder %s93, 0
      %p785 = por %p783, %p784
      %p786 = scmp.ne.s32.totalorder %s772, %s773
      %p787 = scmp.eq.s32.totalorder %s94, 1
      %p788 = por %p786, %p787
      %p790 = scmp.ne.s32.totalorder %s773, %s789
      %p791 = scmp.eq.s32.totalorder %s94, 0
      %p792 = por %p790, %p791
      %p793 = scmp.le.s32.totalorder 1, %s88
      %p794 = scmp.lt.s32.totalorder %s88, 3
      %p795 = pnand %p793, %p794
      %p796 = pneg %p795
      // Predicated region
      $region9: #{tpu_custom_call.1} parent=5 // pred_check
        _
      $region10: #{tpu_custom_call.1} parent=5 // pred_check_branch
        %798 = sbr.rel (%p795) target = $region12
      $region11: #{tpu_custom_call.1} parent=5 // pred_region
        %s799 = ssub.s32 %s88, 1
        // Predicated region
        $region13: #{tpu_custom_call.1} parent=11 // pred_check
          %p800 = pneg %p161
        $region14: #{tpu_custom_call.1} parent=11 // pred_check_branch
          %802 = sbr.rel (%p800) target = $region16
        $region15: #{tpu_custom_call.1} parent=11 // pred_region
          %804 = vsyncadd [#allocation6], 0
          %s806 = sshll.u32 %s5, 4
          %s807 = int_to_ptr.hbm [resolvable:$true] %s806
          %s808 = sshll.u32 [#allocation7], 4
          %s809 = int_to_ptr.vmem [resolvable:$true] %s808
          %811 = dma.hbm_to_vmem [thread:$0]  %s807, 128, %s809, [#allocation6]
        $region16: #{tpu_custom_call.1} parent=11 // pred_fallthru
          _
        // Predicated region
        $region17: #{tpu_custom_call.1} parent=11 // pred_check
          %p812 = pneg %p234
        $region18: #{tpu_custom_call.1} parent=11 // pred_check_branch
          %814 = sbr.rel (%p812) target = $region20
        $region19: #{tpu_custom_call.1} parent=11 // pred_region
          %816 = vsyncadd [#allocation9], 0
          %s817 = sshll.u32 %s11, 4
          %s818 = int_to_ptr.hbm [resolvable:$true] %s817
          %s819 = sshll.u32 [#allocation10], 4
          %s820 = int_to_ptr.vmem [resolvable:$true] %s819
          %825 = dma.hbm_to_vmem [thread:$0]  %s818, 4096, %s820, [#allocation9], 128, 128, 8
        $region20: #{tpu_custom_call.1} parent=11 // pred_fallthru
          _
        // Predicated region
        $region21: #{tpu_custom_call.1} parent=11 // pred_check
          %p826 = pneg %p255
        $region22: #{tpu_custom_call.1} parent=11 // pred_check_branch
          %828 = sbr.rel (%p826) target = $region24
        $region23: #{tpu_custom_call.1} parent=11 // pred_region
          %830 = vsyncadd [#allocation12], 0
          %s831 = sshll.u32 %s13, 4
          %s832 = int_to_ptr.hbm [resolvable:$true] %s831
          %s833 = sshll.u32 [#allocation11], 4
          %s834 = int_to_ptr.vmem [resolvable:$true] %s833
          %839 = dma.hbm_to_vmem [thread:$0]  %s832, 4096, %s834, [#allocation12], 128, 128, 8
        $region24: #{tpu_custom_call.1} parent=11 // pred_fallthru
          _
        // Predicated region
        $region25: #{tpu_custom_call.1} parent=11 // pred_check
          %p840 = pneg %p276
        $region26: #{tpu_custom_call.1} parent=11 // pred_check_branch
          %842 = sbr.rel (%p840) target = $region28
        $region27: #{tpu_custom_call.1} parent=11 // pred_region
          %844 = vsyncadd [#allocation12], 0
          %s845 = sshll.u32 %s15, 4
          %s846 = int_to_ptr.hbm [resolvable:$true] %s845
          %s847 = sshll.u32 [#allocation13], 4
          %s848 = int_to_ptr.vmem [resolvable:$true] %s847
          %853 = dma.hbm_to_vmem [thread:$0]  %s846, 4096, %s848, [#allocation12], 128, 128, 8
        $region28: #{tpu_custom_call.1} parent=11 // pred_fallthru
          _
        // Predicated region
        $region29: #{tpu_custom_call.1} parent=11 // pred_check
          %p854 = pneg %p297
        $region30: #{tpu_custom_call.1} parent=11 // pred_check_branch
          %856 = sbr.rel (%p854) target = $region32
        $region31: #{tpu_custom_call.1} parent=11 // pred_region
          %858 = vsyncadd [#allocation15], 0
          %s860 = sshll.u32 %s17, 4
          %s861 = int_to_ptr.hbm [resolvable:$true] %s860
          %s862 = sshll.u32 [#allocation14], 4
          %s863 = int_to_ptr.vmem [resolvable:$true] %s862
          %865 = dma.hbm_to_vmem [thread:$0]  %s861, 32, %s863, [#allocation15]
        $region32: #{tpu_custom_call.1} parent=11 // pred_fallthru
          _
        // Predicated region
        $region33: #{tpu_custom_call.1} parent=11 // pred_check
          %p866 = pneg %p318
        $region34: #{tpu_custom_call.1} parent=11 // pred_check_branch
          %868 = sbr.rel (%p866) target = $region36
        $region35: #{tpu_custom_call.1} parent=11 // pred_region
          _
        $region36: #{tpu_custom_call.1} parent=11 // pred_fallthru
          _
        // Predicated region
        $region37: #{tpu_custom_call.1} parent=11 // pred_check
          %p869 = pneg %p339
        $region38: #{tpu_custom_call.1} parent=11 // pred_check_branch
          %871 = sbr.rel (%p869) target = $region40
        $region39: #{tpu_custom_call.1} parent=11 // pred_region
          %873 = vsyncadd [#allocation15], 0
          %s875 = sshll.u32 %s21, 4
          %s876 = int_to_ptr.hbm [resolvable:$true] %s875
          %s877 = sshll.u32 [#allocation16], 4
          %s878 = int_to_ptr.vmem [resolvable:$true] %s877
          %880 = dma.hbm_to_vmem [thread:$0]  %s876, 32, %s878, [#allocation15]
        $region40: #{tpu_custom_call.1} parent=11 // pred_fallthru
          _
        // Predicated region
        $region41: #{tpu_custom_call.1} parent=11 // pred_check
          %p881 = pneg %p360
        $region42: #{tpu_custom_call.1} parent=11 // pred_check_branch
          %883 = sbr.rel (%p881) target = $region44
        $region43: #{tpu_custom_call.1} parent=11 // pred_region
          %885 = vsyncadd [#allocation18], 0
          %s886 = sshll.u32 %s23, 4
          %s887 = int_to_ptr.hbm [resolvable:$true] %s886
          %s888 = sshll.u32 [#allocation17], 4
          %s889 = int_to_ptr.vmem [resolvable:$true] %s888
          %894 = dma.hbm_to_vmem [thread:$0]  %s887, 4096, %s889, [#allocation18], 128, 128, 8
        $region44: #{tpu_custom_call.1} parent=11 // pred_fallthru
          _
        // Predicated region
        $region45: #{tpu_custom_call.1} parent=11 // pred_check
          %p895 = pneg %p381
        $region46: #{tpu_custom_call.1} parent=11 // pred_check_branch
          %897 = sbr.rel (%p895) target = $region48
        $region47: #{tpu_custom_call.1} parent=11 // pred_region
          _
        $region48: #{tpu_custom_call.1} parent=11 // pred_fallthru
          _
        // Predicated region
        $region49: #{tpu_custom_call.1} parent=11 // pred_check
          %p898 = pneg %p402
        $region50: #{tpu_custom_call.1} parent=11 // pred_check_branch
          %900 = sbr.rel (%p898) target = $region52
        $region51: #{tpu_custom_call.1} parent=11 // pred_region
          %902 = vsyncadd [#allocation18], 0
          %s903 = sshll.u32 %s27, 4
          %s904 = int_to_ptr.hbm [resolvable:$true] %s903
          %s905 = sshll.u32 [#allocation19], 4
          %s906 = int_to_ptr.vmem [resolvable:$true] %s905
          %911 = dma.hbm_to_vmem [thread:$0]  %s904, 4096, %s906, [#allocation18], 128, 128, 8
        $region52: #{tpu_custom_call.1} parent=11 // pred_fallthru
          _
        // Predicated region
        $region53: #{tpu_custom_call.1} parent=11 // pred_check
          %p912 = pneg %p423
        $region54: #{tpu_custom_call.1} parent=11 // pred_check_branch
          %914 = sbr.rel (%p912) target = $region56
        $region55: #{tpu_custom_call.1} parent=11 // pred_region
          %916 = vsyncadd [#allocation21], 0
          %s917 = sshll.u32 %s29, 4
          %s918 = int_to_ptr.hbm [resolvable:$true] %s917
          %s919 = sshll.u32 [#allocation20], 4
          %s920 = int_to_ptr.vmem [resolvable:$true] %s919
          %925 = dma.hbm_to_vmem [thread:$0]  %s918, 4096, %s920, [#allocation21], 128, 128, 8
        $region56: #{tpu_custom_call.1} parent=11 // pred_fallthru
          _
        // Predicated region
        $region57: #{tpu_custom_call.1} parent=11 // pred_check
          %p926 = pneg %p444
        $region58: #{tpu_custom_call.1} parent=11 // pred_check_branch
          %928 = sbr.rel (%p926) target = $region60
        $region59: #{tpu_custom_call.1} parent=11 // pred_region
          %930 = vsyncadd [#allocation21], 0
          %s931 = sshll.u32 %s31, 4
          %s932 = int_to_ptr.hbm [resolvable:$true] %s931
          %s933 = sshll.u32 [#allocation22], 4
          %s934 = int_to_ptr.vmem [resolvable:$true] %s933
          %939 = dma.hbm_to_vmem [thread:$0]  %s932, 4096, %s934, [#allocation21], 128, 128, 8
        $region60: #{tpu_custom_call.1} parent=11 // pred_fallthru
          _
        // Predicated region
        $region61: #{tpu_custom_call.1} parent=11 // pred_check
          %p940 = pneg %p465
        $region62: #{tpu_custom_call.1} parent=11 // pred_check_branch
          %942 = sbr.rel (%p940) target = $region64
        $region63: #{tpu_custom_call.1} parent=11 // pred_region
          _
        $region64: #{tpu_custom_call.1} parent=11 // pred_fallthru
          _
        // Predicated region
        $region65: #{tpu_custom_call.1} parent=11 // pred_check
          %p943 = pneg %p486
        $region66: #{tpu_custom_call.1} parent=11 // pred_check_branch
          %945 = sbr.rel (%p943) target = $region68
        $region67: #{tpu_custom_call.1} parent=11 // pred_region
          _
        $region68: #{tpu_custom_call.1} parent=11 // pred_fallthru
          _
        // Predicated region
        $region69: #{tpu_custom_call.1} parent=11 // pred_check
          %p946 = pneg %p507
        $region70: #{tpu_custom_call.1} parent=11 // pred_check_branch
          %948 = sbr.rel (%p946) target = $region72
        $region71: #{tpu_custom_call.1} parent=11 // pred_region
          _
        $region72: #{tpu_custom_call.1} parent=11 // pred_fallthru
          _
        // Predicated region
        $region73: #{tpu_custom_call.1} parent=11 // pred_check
          %p949 = pneg %p528
        $region74: #{tpu_custom_call.1} parent=11 // pred_check_branch
          %951 = sbr.rel (%p949) target = $region76
        $region75: #{tpu_custom_call.1} parent=11 // pred_region
          %953 = vsyncadd [#allocation24], 0
          %s954 = sshll.u32 %s39, 4
          %s955 = int_to_ptr.hbm [resolvable:$true] %s954
          %s956 = sshll.u32 [#allocation23], 4
          %s957 = int_to_ptr.vmem [resolvable:$true] %s956
          %962 = dma.hbm_to_vmem [thread:$0]  %s955, 4096, %s957, [#allocation24], 128, 128, 8
        $region76: #{tpu_custom_call.1} parent=11 // pred_fallthru
          _
        // Predicated region
        $region77: #{tpu_custom_call.1} parent=11 // pred_check
          %p963 = pneg %p549
        $region78: #{tpu_custom_call.1} parent=11 // pred_check_branch
          %965 = sbr.rel (%p963) target = $region80
        $region79: #{tpu_custom_call.1} parent=11 // pred_region
          _
        $region80: #{tpu_custom_call.1} parent=11 // pred_fallthru
          _
        // Predicated region
        $region81: #{tpu_custom_call.1} parent=11 // pred_check
          %p966 = pneg %p570
        $region82: #{tpu_custom_call.1} parent=11 // pred_check_branch
          %968 = sbr.rel (%p966) target = $region84
        $region83: #{tpu_custom_call.1} parent=11 // pred_region
          %970 = vsyncadd [#allocation24], 0
          %s971 = sshll.u32 %s43, 4
          %s972 = int_to_ptr.hbm [resolvable:$true] %s971
          %s973 = sshll.u32 [#allocation25], 4
          %s974 = int_to_ptr.vmem [resolvable:$true] %s973
          %979 = dma.hbm_to_vmem [thread:$0]  %s972, 8192, %s974, [#allocation24], 256, 256, 16
        $region84: #{tpu_custom_call.1} parent=11 // pred_fallthru
          _
        // Predicated region
        $region85: #{tpu_custom_call.1} parent=11 // pred_check
          %p980 = pneg %p591
        $region86: #{tpu_custom_call.1} parent=11 // pred_check_branch
          %982 = sbr.rel (%p980) target = $region88
        $region87: #{tpu_custom_call.1} parent=11 // pred_region
          _
        $region88: #{tpu_custom_call.1} parent=11 // pred_fallthru
          _
        // Predicated region
        $region89: #{tpu_custom_call.1} parent=11 // pred_check
          %p983 = pneg %p612
        $region90: #{tpu_custom_call.1} parent=11 // pred_check_branch
          %985 = sbr.rel (%p983) target = $region92
        $region91: #{tpu_custom_call.1} parent=11 // pred_region
          %987 = vsyncadd [#allocation27], 0
          %s988 = sshll.u32 %s47, 4
          %s989 = int_to_ptr.hbm [resolvable:$true] %s988
          %s990 = sshll.u32 [#allocation26], 4
          %s991 = int_to_ptr.vmem [resolvable:$true] %s990
          %996 = dma.hbm_to_vmem [thread:$0]  %s989, 8192, %s991, [#allocation27], 128, 128, 8
        $region92: #{tpu_custom_call.1} parent=11 // pred_fallthru
          _
        // Predicated region
        $region93: #{tpu_custom_call.1} parent=11 // pred_check
          %p997 = pneg %p633
        $region94: #{tpu_custom_call.1} parent=11 // pred_check_branch
          %999 = sbr.rel (%p997) target = $region96
        $region95: #{tpu_custom_call.1} parent=11 // pred_region
          _
        $region96: #{tpu_custom_call.1} parent=11 // pred_fallthru
          _
        // Predicated region
        $region97: #{tpu_custom_call.1} parent=11 // pred_check
          %p1000 = pneg %p654
        $region98: #{tpu_custom_call.1} parent=11 // pred_check_branch
          %1002 = sbr.rel (%p1000) target = $region100
        $region99: #{tpu_custom_call.1} parent=11 // pred_region
          _
        $region100: #{tpu_custom_call.1} parent=11 // pred_fallthru
          _
        // Predicated region
        $region101: #{tpu_custom_call.1} parent=11 // pred_check
          %p1003 = pneg %p675
        $region102: #{tpu_custom_call.1} parent=11 // pred_check_branch
          %1005 = sbr.rel (%p1003) target = $region104
        $region103: #{tpu_custom_call.1} parent=11 // pred_region
          _
        $region104: #{tpu_custom_call.1} parent=11 // pred_fallthru
          _
        // Predicated region
        $region105: #{tpu_custom_call.1} parent=11 // pred_check
          %p1006 = pneg %p696
        $region106: #{tpu_custom_call.1} parent=11 // pred_check_branch
          %1008 = sbr.rel (%p1006) target = $region108
        $region107: #{tpu_custom_call.1} parent=11 // pred_region
          %1010 = vsyncadd [#allocation27], 0
          %s1012 = sshll.u32 %s55, 4
          %s1013 = int_to_ptr.hbm [resolvable:$true] %s1012
          %s1014 = sshll.u32 [#allocation28], 4
          %s1015 = int_to_ptr.vmem [resolvable:$true] %s1014
          %1017 = dma.hbm_to_vmem [thread:$0]  %s1013, 32, %s1015, [#allocation27]
        $region108: #{tpu_custom_call.1} parent=11 // pred_fallthru
          _
        // Predicated region
        $region109: #{tpu_custom_call.1} parent=11 // pred_check
          %p1018 = pneg %p717
        $region110: #{tpu_custom_call.1} parent=11 // pred_check_branch
          %1020 = sbr.rel (%p1018) target = $region112
        $region111: #{tpu_custom_call.1} parent=11 // pred_region
          _
        $region112: #{tpu_custom_call.1} parent=11 // pred_fallthru
          _
        // Predicated region
        $region113: #{tpu_custom_call.1} parent=11 // pred_check
          %p1021 = pneg %p738
        $region114: #{tpu_custom_call.1} parent=11 // pred_check_branch
          %1023 = sbr.rel (%p1021) target = $region116
        $region115: #{tpu_custom_call.1} parent=11 // pred_region
          %1025 = vsyncadd [#allocation30], 0
          %s1027 = sshll.u32 %s59, 4
          %s1028 = int_to_ptr.hbm [resolvable:$true] %s1027
          %s1029 = sshll.u32 [#allocation29], 4
          %s1030 = int_to_ptr.vmem [resolvable:$true] %s1029
          %1032 = dma.hbm_to_vmem [thread:$0]  %s1028, 32, %s1030, [#allocation30]
        $region116: #{tpu_custom_call.1} parent=11 // pred_fallthru
          _
        // Predicated region
        $region117: #{tpu_custom_call.1} parent=11 // pred_check
          %p1033 = pneg %p759
        $region118: #{tpu_custom_call.1} parent=11 // pred_check_branch
          %1035 = sbr.rel (%p1033) target = $region120
        $region119: #{tpu_custom_call.1} parent=11 // pred_region
          _
        $region120: #{tpu_custom_call.1} parent=11 // pred_fallthru
          _
      $region12: #{tpu_custom_call.1} parent=5 // pred_fallthru
        _
      %p1036 = scmp.lt.s32.totalorder %s88, 2
      // Predicated region
      $region121: #{tpu_custom_call.1} parent=5 // pred_check
        %p1037 = pneg %p1036
      $region122: #{tpu_custom_call.1} parent=5 // pred_check_branch
        %1039 = sbr.rel (%p1037) target = $region124
      $region123: #{tpu_custom_call.1} parent=5 // pred_region
        // Predicated region
        $region125: #{tpu_custom_call.1} parent=123 // pred_check
          %p1040 = pneg %p108
        $region126: #{tpu_custom_call.1} parent=123 // pred_check_branch
          %1042 = sbr.rel (%p1040) target = $region128
        $region127: #{tpu_custom_call.1} parent=123 // pred_region
          %s1043 = sand.u32 %s98, 1
          %s1044 = scalar_lea.sflag [#allocation3], %s1043
          %s1045 = sand.u32 %s98, 1
          %s1046 = smul.addr %s1045, 8
          %s1047 = scalar_lea.vmem [#allocation2], %s1046
          %1049 = vsyncadd %s1044, 0
          %s1050 = smul.addr %s88, 2
          %s1051 = smul.addr %s1050, 4
          %s1052 = scalar_lea.hbm %s1, %s1051
          %s1054 = sshll.u32 %s1052, 4
          %s1055 = int_to_ptr.hbm [resolvable:$true] %s1054
          %s1056 = sshll.u32 %s1047, 4
          %s1057 = int_to_ptr.vmem [resolvable:$true] %s1056
          %1059 = dma.hbm_to_vmem [thread:$0]  %s1055, 128, %s1057, %s1044
        $region128: #{tpu_custom_call.1} parent=123 // pred_fallthru
          _
        // Predicated region
        $region129: #{tpu_custom_call.1} parent=123 // pred_check
          %p1060 = pneg %p134
        $region130: #{tpu_custom_call.1} parent=123 // pred_check_branch
          %1062 = sbr.rel (%p1060) target = $region132
        $region131: #{tpu_custom_call.1} parent=123 // pred_region
          %s1063 = sand.u32 %s88, 1
          %s1064 = scalar_lea.sflag [#allocation6], %s1063
          %s1065 = sand.u32 %s124, 1
          %s1066 = smul.addr %s1065, 16
          %s1067 = scalar_lea.vmem [#allocation5], %s1066
          %1069 = vsyncadd %s1064, 0
          %s1070 = smul.addr %s88, 4
          %s1071 = smul.addr %s1070, 4
          %s1072 = scalar_lea.hbm %s3, %s1071
          %s1073 = sshll.u32 %s1072, 4
          %s1074 = int_to_ptr.hbm [resolvable:$true] %s1073
          %s1075 = sshll.u32 %s1067, 4
          %s1076 = int_to_ptr.vmem [resolvable:$true] %s1075
          %1081 = dma.hbm_to_vmem [thread:$0]  %s1074, 256, %s1076, %s1064, 128, 128, 8
        $region132: #{tpu_custom_call.1} parent=123 // pred_fallthru
          _
        // Predicated region
        $region133: #{tpu_custom_call.1} parent=123 // pred_check
          %p1082 = pneg %p181
        $region134: #{tpu_custom_call.1} parent=123 // pred_check_branch
          %1084 = sbr.rel (%p1082) target = $region136
        $region135: #{tpu_custom_call.1} parent=123 // pred_region
          %p1085 = scmp.lt.s32.totalorder %s88, 1
          %s1086 = scalar_select %p1085, %s88, 1
          %s1087 = scalar_lea.vmem %s7, %s1086
        $region136: #{tpu_custom_call.1} parent=123 // pred_fallthru
          _
        // Predicated region
        $region137: #{tpu_custom_call.1} parent=123 // pred_check
          %p1088 = pneg %p207
        $region138: #{tpu_custom_call.1} parent=123 // pred_check_branch
          %1090 = sbr.rel (%p1088) target = $region140
        $region139: #{tpu_custom_call.1} parent=123 // pred_region
          %s1091 = sand.u32 %s88, 1
          %s1092 = scalar_lea.sflag [#allocation9], %s1091
          %s1093 = sand.u32 %s197, 1
          %s1094 = scalar_lea.vmem [#allocation8], %s1093
          %1096 = vsyncadd %s1092, 0
          %s1097 = scalar_lea.hbm %s9, %s88
          %s1099 = sshll.u32 %s1097, 4
          %s1100 = int_to_ptr.hbm [resolvable:$true] %s1099
          %s1101 = sshll.u32 %s1094, 4
          %s1102 = int_to_ptr.vmem [resolvable:$true] %s1101
          %1104 = dma.hbm_to_vmem [thread:$0]  %s1100, 16, %s1102, %s1092
        $region140: #{tpu_custom_call.1} parent=123 // pred_fallthru
          _
      $region124: #{tpu_custom_call.1} parent=5 // pred_fallthru
        _
      %p1105 = scmp.le.s32.totalorder 1, %s88
      %p1106 = scmp.lt.s32.totalorder %s88, 3
      %p1107 = pnand %p1105, %p1106
      %p1108 = pneg %p1107
      // Predicated region
      $region141: #{tpu_custom_call.1} parent=5 // pred_check
        _
      $region142: #{tpu_custom_call.1} parent=5 // pred_check_branch
        %1110 = sbr.rel (%p1107) target = $region144
      $region143: #{tpu_custom_call.1} parent=5 // pred_region
        %s1111 = ssub.s32 %s88, 1
        %s1112 = sand.u32 %s101, 1
        %s1113 = scalar_lea.sflag [#allocation3], %s1112
        %s1114 = sand.u32 %s101, 1
        %s1115 = smul.addr %s1114, 8
        %s1116 = scalar_lea.vmem [#allocation2], %s1115
        // Predicated region
        $region145: #{tpu_custom_call.1} parent=143 // pred_check
          %p1117 = pneg %p114
        $region146: #{tpu_custom_call.1} parent=143 // pred_check_branch
          %1119 = sbr.rel (%p1117) target = $region148
        $region147: #{tpu_custom_call.1} parent=143 // pred_region
          %1121 = dma.done %s1113, 128
        $region148: #{tpu_custom_call.1} parent=143 // pred_fallthru
          _
        %s1122 = sand.u32 %s93, 1
        %s1123 = scalar_lea.sflag [#allocation6], %s1122
        %s1124 = sand.u32 %s127, 1
        %s1125 = smul.addr %s1124, 16
        %s1126 = scalar_lea.vmem [#allocation5], %s1125
        // Predicated region
        $region149: #{tpu_custom_call.1} parent=143 // pred_check
          %p1127 = pneg %p140
        $region150: #{tpu_custom_call.1} parent=143 // pred_check_branch
          %1129 = sbr.rel (%p1127) target = $region152
        $region151: #{tpu_custom_call.1} parent=143 // pred_region
          %1131 = dma.done %s1123, 256
        $region152: #{tpu_custom_call.1} parent=143 // pred_fallthru
          _
        // Predicated region
        $region153: #{tpu_custom_call.1} parent=143 // pred_check
          %p1132 = pneg %p161
        $region154: #{tpu_custom_call.1} parent=143 // pred_check_branch
          %1134 = sbr.rel (%p1132) target = $region156
        $region155: #{tpu_custom_call.1} parent=143 // pred_region
          %1136 = dma.done [#allocation6], 128
        $region156: #{tpu_custom_call.1} parent=143 // pred_fallthru
          _
        %s1137 = sand.u32 %s93, 1
        %s1138 = scalar_lea.sflag [#allocation9], %s1137
        %s1139 = sand.u32 %s200, 1
        %s1140 = scalar_lea.vmem [#allocation8], %s1139
        // Predicated region
        $region157: #{tpu_custom_call.1} parent=143 // pred_check
          %p1141 = pneg %p213
        $region158: #{tpu_custom_call.1} parent=143 // pred_check_branch
          %1143 = sbr.rel (%p1141) target = $region160
        $region159: #{tpu_custom_call.1} parent=143 // pred_region
          %1145 = dma.done %s1138, 16
        $region160: #{tpu_custom_call.1} parent=143 // pred_fallthru
          _
        // Predicated region
        $region161: #{tpu_custom_call.1} parent=143 // pred_check
          %p1146 = pneg %p234
        $region162: #{tpu_custom_call.1} parent=143 // pred_check_branch
          %1148 = sbr.rel (%p1146) target = $region164
        $region163: #{tpu_custom_call.1} parent=143 // pred_region
          %1150 = dma.done [#allocation9], 4096
        $region164: #{tpu_custom_call.1} parent=143 // pred_fallthru
          _
        // Predicated region
        $region165: #{tpu_custom_call.1} parent=143 // pred_check
          %p1151 = pneg %p255
        $region166: #{tpu_custom_call.1} parent=143 // pred_check_branch
          %1153 = sbr.rel (%p1151) target = $region168
        $region167: #{tpu_custom_call.1} parent=143 // pred_region
          %1155 = dma.done [#allocation12], 4096
        $region168: #{tpu_custom_call.1} parent=143 // pred_fallthru
          _
        // Predicated region
        $region169: #{tpu_custom_call.1} parent=143 // pred_check
          %p1156 = pneg %p276
        $region170: #{tpu_custom_call.1} parent=143 // pred_check_branch
          %1158 = sbr.rel (%p1156) target = $region172
        $region171: #{tpu_custom_call.1} parent=143 // pred_region
          %1160 = dma.done [#allocation12], 4096
        $region172: #{tpu_custom_call.1} parent=143 // pred_fallthru
          _
        // Predicated region
        $region173: #{tpu_custom_call.1} parent=143 // pred_check
          %p1161 = pneg %p297
        $region174: #{tpu_custom_call.1} parent=143 // pred_check_branch
          %1163 = sbr.rel (%p1161) target = $region176
        $region175: #{tpu_custom_call.1} parent=143 // pred_region
          %1165 = dma.done [#allocation15], 32
        $region176: #{tpu_custom_call.1} parent=143 // pred_fallthru
          _
        // Predicated region
        $region177: #{tpu_custom_call.1} parent=143 // pred_check
          %p1166 = pneg %p339
        $region178: #{tpu_custom_call.1} parent=143 // pred_check_branch
          %1168 = sbr.rel (%p1166) target = $region180
        $region179: #{tpu_custom_call.1} parent=143 // pred_region
          %1170 = dma.done [#allocation15], 32
        $region180: #{tpu_custom_call.1} parent=143 // pred_fallthru
          _
        // Predicated region
        $region181: #{tpu_custom_call.1} parent=143 // pred_check
          %p1171 = pneg %p360
        $region182: #{tpu_custom_call.1} parent=143 // pred_check_branch
          %1173 = sbr.rel (%p1171) target = $region184
        $region183: #{tpu_custom_call.1} parent=143 // pred_region
          %1175 = dma.done [#allocation18], 4096
        $region184: #{tpu_custom_call.1} parent=143 // pred_fallthru
          _
        // Predicated region
        $region185: #{tpu_custom_call.1} parent=143 // pred_check
          %p1176 = pneg %p402
        $region186: #{tpu_custom_call.1} parent=143 // pred_check_branch
          %1178 = sbr.rel (%p1176) target = $region188
        $region187: #{tpu_custom_call.1} parent=143 // pred_region
          %1180 = dma.done [#allocation18], 4096
        $region188: #{tpu_custom_call.1} parent=143 // pred_fallthru
          _
        // Predicated region
        $region189: #{tpu_custom_call.1} parent=143 // pred_check
          %p1181 = pneg %p423
        $region190: #{tpu_custom_call.1} parent=143 // pred_check_branch
          %1183 = sbr.rel (%p1181) target = $region192
        $region191: #{tpu_custom_call.1} parent=143 // pred_region
          %1185 = dma.done [#allocation21], 4096
        $region192: #{tpu_custom_call.1} parent=143 // pred_fallthru
          _
        // Predicated region
        $region193: #{tpu_custom_call.1} parent=143 // pred_check
          %p1186 = pneg %p444
        $region194: #{tpu_custom_call.1} parent=143 // pred_check_branch
          %1188 = sbr.rel (%p1186) target = $region196
        $region195: #{tpu_custom_call.1} parent=143 // pred_region
          %1190 = dma.done [#allocation21], 4096
        $region196: #{tpu_custom_call.1} parent=143 // pred_fallthru
          _
        // Predicated region
        $region197: #{tpu_custom_call.1} parent=143 // pred_check
          %p1191 = pneg %p528
        $region198: #{tpu_custom_call.1} parent=143 // pred_check_branch
          %1193 = sbr.rel (%p1191) target = $region200
        $region199: #{tpu_custom_call.1} parent=143 // pred_region
          %1195 = dma.done [#allocation24], 4096
        $region200: #{tpu_custom_call.1} parent=143 // pred_fallthru
          _
        // Predicated region
        $region201: #{tpu_custom_call.1} parent=143 // pred_check
          %p1196 = pneg %p570
        $region202: #{tpu_custom_call.1} parent=143 // pred_check_branch
          %1198 = sbr.rel (%p1196) target = $region204
        $region203: #{tpu_custom_call.1} parent=143 // pred_region
          %1200 = dma.done [#allocation24], 8192
        $region204: #{tpu_custom_call.1} parent=143 // pred_fallthru
          _
        // Predicated region
        $region205: #{tpu_custom_call.1} parent=143 // pred_check
          %p1201 = pneg %p612
        $region206: #{tpu_custom_call.1} parent=143 // pred_check_branch
          %1203 = sbr.rel (%p1201) target = $region208
        $region207: #{tpu_custom_call.1} parent=143 // pred_region
          %1205 = dma.done [#allocation27], 8192
        $region208: #{tpu_custom_call.1} parent=143 // pred_fallthru
          _
        // Predicated region
        $region209: #{tpu_custom_call.1} parent=143 // pred_check
          %p1206 = pneg %p696
        $region210: #{tpu_custom_call.1} parent=143 // pred_check_branch
          %1208 = sbr.rel (%p1206) target = $region212
        $region211: #{tpu_custom_call.1} parent=143 // pred_region
          %1210 = dma.done [#allocation27], 32
        $region212: #{tpu_custom_call.1} parent=143 // pred_fallthru
          _
        // Predicated region
        $region213: #{tpu_custom_call.1} parent=143 // pred_check
          %p1211 = pneg %p738
        $region214: #{tpu_custom_call.1} parent=143 // pred_check_branch
          %1213 = sbr.rel (%p1211) target = $region216
        $region215: #{tpu_custom_call.1} parent=143 // pred_region
          %1215 = dma.done [#allocation30], 32
        $region216: #{tpu_custom_call.1} parent=143 // pred_fallthru
          _
        %s1216 = sand.u32 %s101, 1
        %s1217 = scalar_lea.sflag [#allocation3], %s1216
        %s1218 = sand.u32 %s101, 1
        %s1219 = smul.addr %s1218, 8
        %s1220 = scalar_lea.vmem [#allocation2], %s1219
        %p1221 = pneg %p114
        %p1222 = pneg %p111
        %s1223 = sand.u32 %s93, 1
        %s1224 = scalar_lea.sflag [#allocation6], %s1223
        %s1225 = sand.u32 %s127, 1
        %s1226 = smul.addr %s1225, 16
        %s1227 = scalar_lea.vmem [#allocation5], %s1226
        %p1228 = pneg %p140
        %p1229 = pneg %p137
        %p1230 = pneg %p161
        %p1231 = pneg %p158
        %p1232 = scmp.lt.s32.totalorder %s93, 1
        %s1233 = scalar_select %p1232, %s93, 1
        %s1234 = scalar_lea.vmem %s7, %s1233
        %p1235 = pneg %p187
        %p1236 = pneg %p184
        %s1237 = sand.u32 %s93, 1
        %s1238 = scalar_lea.sflag [#allocation9], %s1237
        %s1239 = sand.u32 %s200, 1
        %s1240 = scalar_lea.vmem [#allocation8], %s1239
        %p1241 = pneg %p213
        %p1242 = pneg %p210
        %p1243 = pneg %p234
        %p1244 = pneg %p231
        %p1245 = pneg %p255
        %p1246 = pneg %p252
        %p1247 = pneg %p276
        %p1248 = pneg %p273
        %p1249 = pneg %p297
        %p1250 = pneg %p294
        %p1251 = pneg %p318
        %p1252 = pneg %p315
        %p1253 = pneg %p339
        %p1254 = pneg %p336
        %p1255 = pneg %p360
        %p1256 = pneg %p357
        %p1257 = pneg %p381
        %p1258 = pneg %p378
        %p1259 = pneg %p402
        %p1260 = pneg %p399
        %p1261 = pneg %p423
        %p1262 = pneg %p420
        %p1263 = pneg %p444
        %p1264 = pneg %p441
        %p1265 = pneg %p465
        %p1266 = pneg %p462
        %p1267 = pneg %p486
        %p1268 = pneg %p483
        %p1269 = pneg %p507
        %p1270 = pneg %p504
        %p1271 = pneg %p528
        %p1272 = pneg %p525
        %p1273 = pneg %p549
        %p1274 = pneg %p546
        %p1275 = pneg %p570
        %p1276 = pneg %p567
        %p1277 = pneg %p591
        %p1278 = pneg %p588
        %p1279 = pneg %p612
        %p1280 = pneg %p609
        %p1281 = pneg %p633
        %p1282 = pneg %p630
        %p1283 = pneg %p654
        %p1284 = pneg %p651
        %p1285 = pneg %p675
        %p1286 = pneg %p672
        %p1287 = pneg %p696
        %p1288 = pneg %p693
        %p1289 = pneg %p717
        %p1290 = pneg %p714
        %p1291 = pneg %p738
        %p1292 = pneg %p735
        %p1293 = pneg %p759
        %p1294 = pneg %p756
        %p1295 = pneg %p785
        %p1296 = pneg %p782
        %s1297 = sand.u32 %s772, 1
        %s1298 = scalar_lea.sflag [#allocation4], %s1297
        %s1299 = sand.u32 %s772, 1
        %s1300 = smul.addr %s1299, 8
        %s1301 = scalar_lea.vmem [#allocation31], %s1300
        %p1302 = scmp.lt.s32.totalorder %s93, 1
        %s1303 = scalar_select %p1302, %s93, 1
        %s1304 = scalar_lea.vmem %s7, %s1303
        %v1306 = vld [vmem:[%s1116] sm:$0xff]
        %v1307 = vld [vmem:[%s1126] sm:$0xff]
        %v1308 = vld [vmem:[%s1126 + $0x8] sm:$0xff]
        %v1309 = vunpack.c.l.bf16 %v1306
        %v1310 = vunpack.c.h.bf16 %v1306
        %v1311 = vld [vmem:[#allocation7] sm:$0xff]
        %v1312 = vld [vmem:[%s1304] sm:$0x1]
        %v1314 = vperm.slane %v1312, 0
        %v1316 = vadd.f32 %v1311, %v1314
        %v1317 = vld [vmem:[%s1140] sm:$0x1]
        %v1318 = vld [vmem:[#allocation10] sm:$0xff]
        %v1319 = vld [vmem:[#allocation10 + $0x8] sm:$0xff]
        %v1320 = vld [vmem:[#allocation10 + $0x10] sm:$0xff]
        %v1321 = vld [vmem:[#allocation10 + $0x18] sm:$0xff]
        %v1322 = vld [vmem:[#allocation10 + $0x20] sm:$0xff]
        %v1323 = vld [vmem:[#allocation10 + $0x28] sm:$0xff]
        %v1324 = vld [vmem:[#allocation10 + $0x30] sm:$0xff]
        %v1325 = vld [vmem:[#allocation10 + $0x38] sm:$0xff]
        %v1326 = vld [vmem:[#allocation10 + $0x40] sm:$0xff]
        %v1327 = vld [vmem:[#allocation10 + $0x48] sm:$0xff]
        %v1328 = vld [vmem:[#allocation10 + $0x50] sm:$0xff]
        %v1329 = vld [vmem:[#allocation10 + $0x58] sm:$0xff]
        %v1330 = vld [vmem:[#allocation10 + $0x60] sm:$0xff]
        %v1331 = vld [vmem:[#allocation10 + $0x68] sm:$0xff]
        %v1332 = vld [vmem:[#allocation10 + $0x70] sm:$0xff]
        %v1333 = vld [vmem:[#allocation10 + $0x78] sm:$0xff]
        %v1334 = vld [vmem:[#allocation10 + $0x80] sm:$0xff]
        %v1335 = vld [vmem:[#allocation10 + $0x88] sm:$0xff]
        %v1336 = vld [vmem:[#allocation10 + $0x90] sm:$0xff]
        %v1337 = vld [vmem:[#allocation10 + $0x98] sm:$0xff]
        %v1338 = vld [vmem:[#allocation10 + $0xa0] sm:$0xff]
        %v1339 = vld [vmem:[#allocation10 + $0xa8] sm:$0xff]
        %v1340 = vld [vmem:[#allocation10 + $0xb0] sm:$0xff]
        %v1341 = vld [vmem:[#allocation10 + $0xb8] sm:$0xff]
        %v1342 = vld [vmem:[#allocation10 + $0xc0] sm:$0xff]
        %v1343 = vld [vmem:[#allocation10 + $0xc8] sm:$0xff]
        %v1344 = vld [vmem:[#allocation10 + $0xd0] sm:$0xff]
        %v1345 = vld [vmem:[#allocation10 + $0xd8] sm:$0xff]
        %v1346 = vld [vmem:[#allocation10 + $0xe0] sm:$0xff]
        %v1347 = vld [vmem:[#allocation10 + $0xe8] sm:$0xff]
        %v1348 = vld [vmem:[#allocation10 + $0xf0] sm:$0xff]
        %v1349 = vld [vmem:[#allocation10 + $0xf8] sm:$0xff]
        %v1350 = vld [vmem:[#allocation11] sm:$0xff]
        %v1351 = vld [vmem:[#allocation11 + $0x8] sm:$0xff]
        %v1352 = vld [vmem:[#allocation11 + $0x10] sm:$0xff]
        %v1353 = vld [vmem:[#allocation11 + $0x18] sm:$0xff]
        %v1354 = vld [vmem:[#allocation11 + $0x20] sm:$0xff]
        %v1355 = vld [vmem:[#allocation11 + $0x28] sm:$0xff]
        %v1356 = vld [vmem:[#allocation11 + $0x30] sm:$0xff]
        %v1357 = vld [vmem:[#allocation11 + $0x38] sm:$0xff]
        %v1358 = vld [vmem:[#allocation11 + $0x40] sm:$0xff]
        %v1359 = vld [vmem:[#allocation11 + $0x48] sm:$0xff]
        %v1360 = vld [vmem:[#allocation11 + $0x50] sm:$0xff]
        %v1361 = vld [vmem:[#allocation11 + $0x58] sm:$0xff]
        %v1362 = vld [vmem:[#allocation11 + $0x60] sm:$0xff]
        %v1363 = vld [vmem:[#allocation11 + $0x68] sm:$0xff]
        %v1364 = vld [vmem:[#allocation11 + $0x70] sm:$0xff]
        %v1365 = vld [vmem:[#allocation11 + $0x78] sm:$0xff]
        %v1366 = vld [vmem:[#allocation11 + $0x80] sm:$0xff]
        %v1367 = vld [vmem:[#allocation11 + $0x88] sm:$0xff]
        %v1368 = vld [vmem:[#allocation11 + $0x90] sm:$0xff]
        %v1369 = vld [vmem:[#allocation11 + $0x98] sm:$0xff]
        %v1370 = vld [vmem:[#allocation11 + $0xa0] sm:$0xff]
        %v1371 = vld [vmem:[#allocation11 + $0xa8] sm:$0xff]
        %v1372 = vld [vmem:[#allocation11 + $0xb0] sm:$0xff]
        %v1373 = vld [vmem:[#allocation11 + $0xb8] sm:$0xff]
        %v1374 = vld [vmem:[#allocation11 + $0xc0] sm:$0xff]
        %v1375 = vld [vmem:[#allocation11 + $0xc8] sm:$0xff]
        %v1376 = vld [vmem:[#allocation11 + $0xd0] sm:$0xff]
        %v1377 = vld [vmem:[#allocation11 + $0xd8] sm:$0xff]
        %v1378 = vld [vmem:[#allocation11 + $0xe0] sm:$0xff]
        %v1379 = vld [vmem:[#allocation11 + $0xe8] sm:$0xff]
        %v1380 = vld [vmem:[#allocation11 + $0xf0] sm:$0xff]
        %v1381 = vld [vmem:[#allocation11 + $0xf8] sm:$0xff]
        %v1382 = vld [vmem:[#allocation13] sm:$0xff]
        %v1383 = vld [vmem:[#allocation13 + $0x8] sm:$0xff]
        %v1384 = vld [vmem:[#allocation13 + $0x10] sm:$0xff]
        %v1385 = vld [vmem:[#allocation13 + $0x18] sm:$0xff]
        %v1386 = vld [vmem:[#allocation13 + $0x20] sm:$0xff]
        %v1387 = vld [vmem:[#allocation13 + $0x28] sm:$0xff]
        %v1388 = vld [vmem:[#allocation13 + $0x30] sm:$0xff]
        %v1389 = vld [vmem:[#allocation13 + $0x38] sm:$0xff]
        %v1390 = vld [vmem:[#allocation13 + $0x40] sm:$0xff]
        %v1391 = vld [vmem:[#allocation13 + $0x48] sm:$0xff]
        %v1392 = vld [vmem:[#allocation13 + $0x50] sm:$0xff]
        %v1393 = vld [vmem:[#allocation13 + $0x58] sm:$0xff]
        %v1394 = vld [vmem:[#allocation13 + $0x60] sm:$0xff]
        %v1395 = vld [vmem:[#allocation13 + $0x68] sm:$0xff]
        %v1396 = vld [vmem:[#allocation13 + $0x70] sm:$0xff]
        %v1397 = vld [vmem:[#allocation13 + $0x78] sm:$0xff]
        %v1398 = vld [vmem:[#allocation13 + $0x80] sm:$0xff]
        %v1399 = vld [vmem:[#allocation13 + $0x88] sm:$0xff]
        %v1400 = vld [vmem:[#allocation13 + $0x90] sm:$0xff]
        %v1401 = vld [vmem:[#allocation13 + $0x98] sm:$0xff]
        %v1402 = vld [vmem:[#allocation13 + $0xa0] sm:$0xff]
        %v1403 = vld [vmem:[#allocation13 + $0xa8] sm:$0xff]
        %v1404 = vld [vmem:[#allocation13 + $0xb0] sm:$0xff]
        %v1405 = vld [vmem:[#allocation13 + $0xb8] sm:$0xff]
        %v1406 = vld [vmem:[#allocation13 + $0xc0] sm:$0xff]
        %v1407 = vld [vmem:[#allocation13 + $0xc8] sm:$0xff]
        %v1408 = vld [vmem:[#allocation13 + $0xd0] sm:$0xff]
        %v1409 = vld [vmem:[#allocation13 + $0xd8] sm:$0xff]
        %v1410 = vld [vmem:[#allocation13 + $0xe0] sm:$0xff]
        %v1411 = vld [vmem:[#allocation13 + $0xe8] sm:$0xff]
        %v1412 = vld [vmem:[#allocation13 + $0xf0] sm:$0xff]
        %v1413 = vld [vmem:[#allocation13 + $0xf8] sm:$0xff]
        %v1414 = vld [vmem:[#allocation14] sm:$0x3]
        %v1415 = vld [vmem:[%s19] sm:$0x3]
        %v1416 = vld [vmem:[#allocation16] sm:$0x3]
        %v1417 = vld [vmem:[#allocation17] sm:$0xff]
        %v1418 = vld [vmem:[#allocation17 + $0x8] sm:$0xff]
        %v1419 = vld [vmem:[#allocation17 + $0x10] sm:$0xff]
        %v1420 = vld [vmem:[#allocation17 + $0x18] sm:$0xff]
        %v1421 = vld [vmem:[#allocation17 + $0x20] sm:$0xff]
        %v1422 = vld [vmem:[#allocation17 + $0x28] sm:$0xff]
        %v1423 = vld [vmem:[#allocation17 + $0x30] sm:$0xff]
        %v1424 = vld [vmem:[#allocation17 + $0x38] sm:$0xff]
        %v1425 = vld [vmem:[#allocation17 + $0x40] sm:$0xff]
        %v1426 = vld [vmem:[#allocation17 + $0x48] sm:$0xff]
        %v1427 = vld [vmem:[#allocation17 + $0x50] sm:$0xff]
        %v1428 = vld [vmem:[#allocation17 + $0x58] sm:$0xff]
        %v1429 = vld [vmem:[#allocation17 + $0x60] sm:$0xff]
        %v1430 = vld [vmem:[#allocation17 + $0x68] sm:$0xff]
        %v1431 = vld [vmem:[#allocation17 + $0x70] sm:$0xff]
        %v1432 = vld [vmem:[#allocation17 + $0x78] sm:$0xff]
        %v1433 = vld [vmem:[#allocation17 + $0x80] sm:$0xff]
        %v1434 = vld [vmem:[#allocation17 + $0x88] sm:$0xff]
        %v1435 = vld [vmem:[#allocation17 + $0x90] sm:$0xff]
        %v1436 = vld [vmem:[#allocation17 + $0x98] sm:$0xff]
        %v1437 = vld [vmem:[#allocation17 + $0xa0] sm:$0xff]
        %v1438 = vld [vmem:[#allocation17 + $0xa8] sm:$0xff]
        %v1439 = vld [vmem:[#allocation17 + $0xb0] sm:$0xff]
        %v1440 = vld [vmem:[#allocation17 + $0xb8] sm:$0xff]
        %v1441 = vld [vmem:[#allocation17 + $0xc0] sm:$0xff]
        %v1442 = vld [vmem:[#allocation17 + $0xc8] sm:$0xff]
        %v1443 = vld [vmem:[#allocation17 + $0xd0] sm:$0xff]
        %v1444 = vld [vmem:[#allocation17 + $0xd8] sm:$0xff]
        %v1445 = vld [vmem:[#allocation17 + $0xe0] sm:$0xff]
        %v1446 = vld [vmem:[#allocation17 + $0xe8] sm:$0xff]
        %v1447 = vld [vmem:[#allocation17 + $0xf0] sm:$0xff]
        %v1448 = vld [vmem:[#allocation17 + $0xf8] sm:$0xff]
        %v1449 = vld [vmem:[%s25] sm:$0x3]
        %v1451 = vperm.slane %v1414, 0
        %v1452 = vperm.slane %v1414, 1
        %v1456 = vunpack.c.l.b16 %v1306
        %v1457 = vunpack.c.h.b16 %v1306
        %v1458 = vpack.c.b16 %v1456, %v1456
        %v1459 = vpack.c.b16 %v1457, %v1457
        %v1494 = vunpack.c.l.b16 %v1318
        %v1495 = vunpack.c.h.b16 %v1318
        %v1496 = vunpack.c.l.b16 %v1319
        %v1497 = vunpack.c.h.b16 %v1319
        %v1498 = vunpack.c.l.b16 %v1320
        %v1499 = vunpack.c.h.b16 %v1320
        %v1500 = vunpack.c.l.b16 %v1321
        %v1501 = vunpack.c.h.b16 %v1321
        %v1502 = vunpack.c.l.b16 %v1322
        %v1503 = vunpack.c.h.b16 %v1322
        %v1504 = vunpack.c.l.b16 %v1323
        %v1505 = vunpack.c.h.b16 %v1323
        %v1506 = vunpack.c.l.b16 %v1324
        %v1507 = vunpack.c.h.b16 %v1324
        %v1508 = vunpack.c.l.b16 %v1325
        %v1509 = vunpack.c.h.b16 %v1325
        %v1510 = vunpack.c.l.b16 %v1326
        %v1511 = vunpack.c.h.b16 %v1326
        %v1512 = vunpack.c.l.b16 %v1327
        %v1513 = vunpack.c.h.b16 %v1327
        %v1514 = vunpack.c.l.b16 %v1328
        %v1515 = vunpack.c.h.b16 %v1328
        %v1516 = vunpack.c.l.b16 %v1329
        %v1517 = vunpack.c.h.b16 %v1329
        %v1518 = vunpack.c.l.b16 %v1330
        %v1519 = vunpack.c.h.b16 %v1330
        %v1520 = vunpack.c.l.b16 %v1331
        %v1521 = vunpack.c.h.b16 %v1331
        %v1522 = vunpack.c.l.b16 %v1332
        %v1523 = vunpack.c.h.b16 %v1332
        %v1524 = vunpack.c.l.b16 %v1333
        %v1525 = vunpack.c.h.b16 %v1333
        %v1526 = vunpack.c.l.b16 %v1334
        %v1527 = vunpack.c.h.b16 %v1334
        %v1528 = vunpack.c.l.b16 %v1335
        %v1529 = vunpack.c.h.b16 %v1335
        %v1530 = vunpack.c.l.b16 %v1336
        %v1531 = vunpack.c.h.b16 %v1336
        %v1532 = vunpack.c.l.b16 %v1337
        %v1533 = vunpack.c.h.b16 %v1337
        %v1534 = vunpack.c.l.b16 %v1338
        %v1535 = vunpack.c.h.b16 %v1338
        %v1536 = vunpack.c.l.b16 %v1339
        %v1537 = vunpack.c.h.b16 %v1339
        %v1538 = vunpack.c.l.b16 %v1340
        %v1539 = vunpack.c.h.b16 %v1340
        %v1540 = vunpack.c.l.b16 %v1341
        %v1541 = vunpack.c.h.b16 %v1341
        %v1542 = vunpack.c.l.b16 %v1342
        %v1543 = vunpack.c.h.b16 %v1342
        %v1544 = vunpack.c.l.b16 %v1343
        %v1545 = vunpack.c.h.b16 %v1343
        %v1546 = vunpack.c.l.b16 %v1344
        %v1547 = vunpack.c.h.b16 %v1344
        %v1548 = vunpack.c.l.b16 %v1345
        %v1549 = vunpack.c.h.b16 %v1345
        %v1550 = vunpack.c.l.b16 %v1346
        %v1551 = vunpack.c.h.b16 %v1346
        %v1552 = vunpack.c.l.b16 %v1347
        %v1553 = vunpack.c.h.b16 %v1347
        %v1554 = vunpack.c.l.b16 %v1348
        %v1555 = vunpack.c.h.b16 %v1348
        %v1556 = vunpack.c.l.b16 %v1349
        %v1557 = vunpack.c.h.b16 %v1349
        %v1558 = vpack.c.b16 %v1496, %v1494
        %v1559 = vpack.c.b16 %v1497, %v1495
        %v1560 = vpack.c.b16 %v1500, %v1498
        %v1561 = vpack.c.b16 %v1501, %v1499
        %v1562 = vpack.c.b16 %v1504, %v1502
        %v1563 = vpack.c.b16 %v1505, %v1503
        %v1564 = vpack.c.b16 %v1508, %v1506
        %v1565 = vpack.c.b16 %v1509, %v1507
        %v1566 = vpack.c.b16 %v1512, %v1510
        %v1567 = vpack.c.b16 %v1513, %v1511
        %v1568 = vpack.c.b16 %v1516, %v1514
        %v1569 = vpack.c.b16 %v1517, %v1515
        %v1570 = vpack.c.b16 %v1520, %v1518
        %v1571 = vpack.c.b16 %v1521, %v1519
        %v1572 = vpack.c.b16 %v1524, %v1522
        %v1573 = vpack.c.b16 %v1525, %v1523
        %v1574 = vpack.c.b16 %v1528, %v1526
        %v1575 = vpack.c.b16 %v1529, %v1527
        %v1576 = vpack.c.b16 %v1532, %v1530
        %v1577 = vpack.c.b16 %v1533, %v1531
        %v1578 = vpack.c.b16 %v1536, %v1534
        %v1579 = vpack.c.b16 %v1537, %v1535
        %v1580 = vpack.c.b16 %v1540, %v1538
        %v1581 = vpack.c.b16 %v1541, %v1539
        %v1582 = vpack.c.b16 %v1544, %v1542
        %v1583 = vpack.c.b16 %v1545, %v1543
        %v1584 = vpack.c.b16 %v1548, %v1546
        %v1585 = vpack.c.b16 %v1549, %v1547
        %v1586 = vpack.c.b16 %v1552, %v1550
        %v1587 = vpack.c.b16 %v1553, %v1551
        %v1588 = vpack.c.b16 %v1556, %v1554
        %v1589 = vpack.c.b16 %v1557, %v1555
        %1622 = vmatpush.bf16.msra.mxu0 %v1572
        %1623 = vmatpush.bf16.msra.mxu0 %v1570
        %1624 = vmatpush.bf16.msra.mxu0 %v1568
        %1625 = vmatpush.bf16.msra.mxu0 %v1566
        %1626 = vmatpush.bf16.msra.mxu0 %v1564
        %1627 = vmatpush.bf16.msra.mxu0 %v1562
        %1628 = vmatpush.bf16.msra.mxu0 %v1560
        %1629 = vmatpush.bf16.msra.mxu0 %v1558
        %1630 = vmatmul.bf16.gmra.mxu0 %v1458
        %v1631 = vpop.f32.mrf.mxu0
        %v1632 = vadd.f32 %v1451, %v1631
        %v1633 = vpop.f32.mrf.mxu0
        %1634 = vdwg.mxu0
        %1635 = vmatpush.bf16.msra.mxu0 %v1588
        %1636 = vmatpush.bf16.msra.mxu0 %v1586
        %1637 = vmatpush.bf16.msra.mxu0 %v1584
        %1638 = vmatpush.bf16.msra.mxu0 %v1582
        %1639 = vmatpush.bf16.msra.mxu0 %v1580
        %1640 = vmatpush.bf16.msra.mxu0 %v1578
        %1641 = vmatpush.bf16.msra.mxu0 %v1576
        %1642 = vmatpush.bf16.msra.mxu0 %v1574
        %1643 = vmatmul.bf16.gmra.mxu0 %v1459
        %v1644 = vpop.f32.mrf.mxu0
        %v1645 = vadd.f32 %v1632, %v1644
        %v1646 = vpop.f32.mrf.mxu0
        %1647 = vdwg.mxu0
        %1648 = vmatpush.bf16.msra.mxu0 %v1573
        %1649 = vmatpush.bf16.msra.mxu0 %v1571
        %1650 = vmatpush.bf16.msra.mxu0 %v1569
        %1651 = vmatpush.bf16.msra.mxu0 %v1567
        %1652 = vmatpush.bf16.msra.mxu0 %v1565
        %1653 = vmatpush.bf16.msra.mxu0 %v1563
        %1654 = vmatpush.bf16.msra.mxu0 %v1561
        %1655 = vmatpush.bf16.msra.mxu0 %v1559
        %1656 = vmatmul.bf16.gmra.mxu0 %v1458
        %v1657 = vpop.f32.mrf.mxu0
        %v1658 = vadd.f32 %v1452, %v1657
        %v1659 = vpop.f32.mrf.mxu0
        %1660 = vdwg.mxu0
        %1661 = vmatpush.bf16.msra.mxu0 %v1589
        %1662 = vmatpush.bf16.msra.mxu0 %v1587
        %1663 = vmatpush.bf16.msra.mxu0 %v1585
        %1664 = vmatpush.bf16.msra.mxu0 %v1583
        %1665 = vmatpush.bf16.msra.mxu0 %v1581
        %1666 = vmatpush.bf16.msra.mxu0 %v1579
        %1667 = vmatpush.bf16.msra.mxu0 %v1577
        %1668 = vmatpush.bf16.msra.mxu0 %v1575
        %1669 = vmatmul.bf16.gmra.mxu0 %v1459
        %v1670 = vpop.f32.mrf.mxu0
        %v1671 = vadd.f32 %v1658, %v1670
        %v1672 = vpop.f32.mrf.mxu0
        %1673 = vdwg.mxu0
        %v1675 = vperm.slane %v1415, 0
        %v1676 = vperm.slane %v1415, 1
        %v1711 = vunpack.c.l.b16 %v1350
        %v1712 = vunpack.c.h.b16 %v1350
        %v1713 = vunpack.c.l.b16 %v1351
        %v1714 = vunpack.c.h.b16 %v1351
        %v1715 = vunpack.c.l.b16 %v1352
        %v1716 = vunpack.c.h.b16 %v1352
        %v1717 = vunpack.c.l.b16 %v1353
        %v1718 = vunpack.c.h.b16 %v1353
        %v1719 = vunpack.c.l.b16 %v1354
        %v1720 = vunpack.c.h.b16 %v1354
        %v1721 = vunpack.c.l.b16 %v1355
        %v1722 = vunpack.c.h.b16 %v1355
        %v1723 = vunpack.c.l.b16 %v1356
        %v1724 = vunpack.c.h.b16 %v1356
        %v1725 = vunpack.c.l.b16 %v1357
        %v1726 = vunpack.c.h.b16 %v1357
        %v1727 = vunpack.c.l.b16 %v1358
        %v1728 = vunpack.c.h.b16 %v1358
        %v1729 = vunpack.c.l.b16 %v1359
        %v1730 = vunpack.c.h.b16 %v1359
        %v1731 = vunpack.c.l.b16 %v1360
        %v1732 = vunpack.c.h.b16 %v1360
        %v1733 = vunpack.c.l.b16 %v1361
        %v1734 = vunpack.c.h.b16 %v1361
        %v1735 = vunpack.c.l.b16 %v1362
        %v1736 = vunpack.c.h.b16 %v1362
        %v1737 = vunpack.c.l.b16 %v1363
        %v1738 = vunpack.c.h.b16 %v1363
        %v1739 = vunpack.c.l.b16 %v1364
        %v1740 = vunpack.c.h.b16 %v1364
        %v1741 = vunpack.c.l.b16 %v1365
        %v1742 = vunpack.c.h.b16 %v1365
        %v1743 = vunpack.c.l.b16 %v1366
        %v1744 = vunpack.c.h.b16 %v1366
        %v1745 = vunpack.c.l.b16 %v1367
        %v1746 = vunpack.c.h.b16 %v1367
        %v1747 = vunpack.c.l.b16 %v1368
        %v1748 = vunpack.c.h.b16 %v1368
        %v1749 = vunpack.c.l.b16 %v1369
        %v1750 = vunpack.c.h.b16 %v1369
        %v1751 = vunpack.c.l.b16 %v1370
        %v1752 = vunpack.c.h.b16 %v1370
        %v1753 = vunpack.c.l.b16 %v1371
        %v1754 = vunpack.c.h.b16 %v1371
        %v1755 = vunpack.c.l.b16 %v1372
        %v1756 = vunpack.c.h.b16 %v1372
        %v1757 = vunpack.c.l.b16 %v1373
        %v1758 = vunpack.c.h.b16 %v1373
        %v1759 = vunpack.c.l.b16 %v1374
        %v1760 = vunpack.c.h.b16 %v1374
        %v1761 = vunpack.c.l.b16 %v1375
        %v1762 = vunpack.c.h.b16 %v1375
        %v1763 = vunpack.c.l.b16 %v1376
        %v1764 = vunpack.c.h.b16 %v1376
        %v1765 = vunpack.c.l.b16 %v1377
        %v1766 = vunpack.c.h.b16 %v1377
        %v1767 = vunpack.c.l.b16 %v1378
        %v1768 = vunpack.c.h.b16 %v1378
        %v1769 = vunpack.c.l.b16 %v1379
        %v1770 = vunpack.c.h.b16 %v1379
        %v1771 = vunpack.c.l.b16 %v1380
        %v1772 = vunpack.c.h.b16 %v1380
        %v1773 = vunpack.c.l.b16 %v1381
        %v1774 = vunpack.c.h.b16 %v1381
        %v1775 = vpack.c.b16 %v1713, %v1711
        %v1776 = vpack.c.b16 %v1714, %v1712
        %v1777 = vpack.c.b16 %v1717, %v1715
        %v1778 = vpack.c.b16 %v1718, %v1716
        %v1779 = vpack.c.b16 %v1721, %v1719
        %v1780 = vpack.c.b16 %v1722, %v1720
        %v1781 = vpack.c.b16 %v1725, %v1723
        %v1782 = vpack.c.b16 %v1726, %v1724
        %v1783 = vpack.c.b16 %v1729, %v1727
        %v1784 = vpack.c.b16 %v1730, %v1728
        %v1785 = vpack.c.b16 %v1733, %v1731
        %v1786 = vpack.c.b16 %v1734, %v1732
        %v1787 = vpack.c.b16 %v1737, %v1735
        %v1788 = vpack.c.b16 %v1738, %v1736
        %v1789 = vpack.c.b16 %v1741, %v1739
        %v1790 = vpack.c.b16 %v1742, %v1740
        %v1791 = vpack.c.b16 %v1745, %v1743
        %v1792 = vpack.c.b16 %v1746, %v1744
        %v1793 = vpack.c.b16 %v1749, %v1747
        %v1794 = vpack.c.b16 %v1750, %v1748
        %v1795 = vpack.c.b16 %v1753, %v1751
        %v1796 = vpack.c.b16 %v1754, %v1752
        %v1797 = vpack.c.b16 %v1757, %v1755
        %v1798 = vpack.c.b16 %v1758, %v1756
        %v1799 = vpack.c.b16 %v1761, %v1759
        %v1800 = vpack.c.b16 %v1762, %v1760
        %v1801 = vpack.c.b16 %v1765, %v1763
        %v1802 = vpack.c.b16 %v1766, %v1764
        %v1803 = vpack.c.b16 %v1769, %v1767
        %v1804 = vpack.c.b16 %v1770, %v1768
        %v1805 = vpack.c.b16 %v1773, %v1771
        %v1806 = vpack.c.b16 %v1774, %v1772
        %1839 = vmatpush.bf16.msra.mxu0 %v1789
        %1840 = vmatpush.bf16.msra.mxu0 %v1787
        %1841 = vmatpush.bf16.msra.mxu0 %v1785
        %1842 = vmatpush.bf16.msra.mxu0 %v1783
        %1843 = vmatpush.bf16.msra.mxu0 %v1781
        %1844 = vmatpush.bf16.msra.mxu0 %v1779
        %1845 = vmatpush.bf16.msra.mxu0 %v1777
        %1846 = vmatpush.bf16.msra.mxu0 %v1775
        %1847 = vmatmul.bf16.gmra.mxu0 %v1458
        %v1848 = vpop.f32.mrf.mxu0
        %v1849 = vadd.f32 %v1675, %v1848
        %v1850 = vpop.f32.mrf.mxu0
        %1851 = vdwg.mxu0
        %1852 = vmatpush.bf16.msra.mxu0 %v1805
        %1853 = vmatpush.bf16.msra.mxu0 %v1803
        %1854 = vmatpush.bf16.msra.mxu0 %v1801
        %1855 = vmatpush.bf16.msra.mxu0 %v1799
        %1856 = vmatpush.bf16.msra.mxu0 %v1797
        %1857 = vmatpush.bf16.msra.mxu0 %v1795
        %1858 = vmatpush.bf16.msra.mxu0 %v1793
        %1859 = vmatpush.bf16.msra.mxu0 %v1791
        %1860 = vmatmul.bf16.gmra.mxu0 %v1459
        %v1861 = vpop.f32.mrf.mxu0
        %v1862 = vadd.f32 %v1849, %v1861
        %v1863 = vpop.f32.mrf.mxu0
        %1864 = vdwg.mxu0
        %1865 = vmatpush.bf16.msra.mxu0 %v1790
        %1866 = vmatpush.bf16.msra.mxu0 %v1788
        %1867 = vmatpush.bf16.msra.mxu0 %v1786
        %1868 = vmatpush.bf16.msra.mxu0 %v1784
        %1869 = vmatpush.bf16.msra.mxu0 %v1782
        %1870 = vmatpush.bf16.msra.mxu0 %v1780
        %1871 = vmatpush.bf16.msra.mxu0 %v1778
        %1872 = vmatpush.bf16.msra.mxu0 %v1776
        %1873 = vmatmul.bf16.gmra.mxu0 %v1458
        %v1874 = vpop.f32.mrf.mxu0
        %v1875 = vadd.f32 %v1676, %v1874
        %v1876 = vpop.f32.mrf.mxu0
        %1877 = vdwg.mxu0
        %1878 = vmatpush.bf16.msra.mxu0 %v1806
        %1879 = vmatpush.bf16.msra.mxu0 %v1804
        %1880 = vmatpush.bf16.msra.mxu0 %v1802
        %1881 = vmatpush.bf16.msra.mxu0 %v1800
        %1882 = vmatpush.bf16.msra.mxu0 %v1798
        %1883 = vmatpush.bf16.msra.mxu0 %v1796
        %1884 = vmatpush.bf16.msra.mxu0 %v1794
        %1885 = vmatpush.bf16.msra.mxu0 %v1792
        %1886 = vmatmul.bf16.gmra.mxu0 %v1459
        %v1887 = vpop.f32.mrf.mxu0
        %v1888 = vadd.f32 %v1875, %v1887
        %v1889 = vpop.f32.mrf.mxu0
        %1890 = vdwg.mxu0
        %v1892 = vperm.slane %v1416, 0
        %v1893 = vperm.slane %v1416, 1
        %v1928 = vunpack.c.l.b16 %v1382
        %v1929 = vunpack.c.h.b16 %v1382
        %v1930 = vunpack.c.l.b16 %v1383
        %v1931 = vunpack.c.h.b16 %v1383
        %v1932 = vunpack.c.l.b16 %v1384
        %v1933 = vunpack.c.h.b16 %v1384
        %v1934 = vunpack.c.l.b16 %v1385
        %v1935 = vunpack.c.h.b16 %v1385
        %v1936 = vunpack.c.l.b16 %v1386
        %v1937 = vunpack.c.h.b16 %v1386
        %v1938 = vunpack.c.l.b16 %v1387
        %v1939 = vunpack.c.h.b16 %v1387
        %v1940 = vunpack.c.l.b16 %v1388
        %v1941 = vunpack.c.h.b16 %v1388
        %v1942 = vunpack.c.l.b16 %v1389
        %v1943 = vunpack.c.h.b16 %v1389
        %v1944 = vunpack.c.l.b16 %v1390
        %v1945 = vunpack.c.h.b16 %v1390
        %v1946 = vunpack.c.l.b16 %v1391
        %v1947 = vunpack.c.h.b16 %v1391
        %v1948 = vunpack.c.l.b16 %v1392
        %v1949 = vunpack.c.h.b16 %v1392
        %v1950 = vunpack.c.l.b16 %v1393
        %v1951 = vunpack.c.h.b16 %v1393
        %v1952 = vunpack.c.l.b16 %v1394
        %v1953 = vunpack.c.h.b16 %v1394
        %v1954 = vunpack.c.l.b16 %v1395
        %v1955 = vunpack.c.h.b16 %v1395
        %v1956 = vunpack.c.l.b16 %v1396
        %v1957 = vunpack.c.h.b16 %v1396
        %v1958 = vunpack.c.l.b16 %v1397
        %v1959 = vunpack.c.h.b16 %v1397
        %v1960 = vunpack.c.l.b16 %v1398
        %v1961 = vunpack.c.h.b16 %v1398
        %v1962 = vunpack.c.l.b16 %v1399
        %v1963 = vunpack.c.h.b16 %v1399
        %v1964 = vunpack.c.l.b16 %v1400
        %v1965 = vunpack.c.h.b16 %v1400
        %v1966 = vunpack.c.l.b16 %v1401
        %v1967 = vunpack.c.h.b16 %v1401
        %v1968 = vunpack.c.l.b16 %v1402
        %v1969 = vunpack.c.h.b16 %v1402
        %v1970 = vunpack.c.l.b16 %v1403
        %v1971 = vunpack.c.h.b16 %v1403
        %v1972 = vunpack.c.l.b16 %v1404
        %v1973 = vunpack.c.h.b16 %v1404
        %v1974 = vunpack.c.l.b16 %v1405
        %v1975 = vunpack.c.h.b16 %v1405
        %v1976 = vunpack.c.l.b16 %v1406
        %v1977 = vunpack.c.h.b16 %v1406
        %v1978 = vunpack.c.l.b16 %v1407
        %v1979 = vunpack.c.h.b16 %v1407
        %v1980 = vunpack.c.l.b16 %v1408
        %v1981 = vunpack.c.h.b16 %v1408
        %v1982 = vunpack.c.l.b16 %v1409
        %v1983 = vunpack.c.h.b16 %v1409
        %v1984 = vunpack.c.l.b16 %v1410
        %v1985 = vunpack.c.h.b16 %v1410
        %v1986 = vunpack.c.l.b16 %v1411
        %v1987 = vunpack.c.h.b16 %v1411
        %v1988 = vunpack.c.l.b16 %v1412
        %v1989 = vunpack.c.h.b16 %v1412
        %v1990 = vunpack.c.l.b16 %v1413
        %v1991 = vunpack.c.h.b16 %v1413
        %v1992 = vpack.c.b16 %v1930, %v1928
        %v1993 = vpack.c.b16 %v1931, %v1929
        %v1994 = vpack.c.b16 %v1934, %v1932
        %v1995 = vpack.c.b16 %v1935, %v1933
        %v1996 = vpack.c.b16 %v1938, %v1936
        %v1997 = vpack.c.b16 %v1939, %v1937
        %v1998 = vpack.c.b16 %v1942, %v1940
        %v1999 = vpack.c.b16 %v1943, %v1941
        %v2000 = vpack.c.b16 %v1946, %v1944
        %v2001 = vpack.c.b16 %v1947, %v1945
        %v2002 = vpack.c.b16 %v1950, %v1948
        %v2003 = vpack.c.b16 %v1951, %v1949
        %v2004 = vpack.c.b16 %v1954, %v1952
        %v2005 = vpack.c.b16 %v1955, %v1953
        %v2006 = vpack.c.b16 %v1958, %v1956
        %v2007 = vpack.c.b16 %v1959, %v1957
        %v2008 = vpack.c.b16 %v1962, %v1960
        %v2009 = vpack.c.b16 %v1963, %v1961
        %v2010 = vpack.c.b16 %v1966, %v1964
        %v2011 = vpack.c.b16 %v1967, %v1965
        %v2012 = vpack.c.b16 %v1970, %v1968
        %v2013 = vpack.c.b16 %v1971, %v1969
        %v2014 = vpack.c.b16 %v1974, %v1972
        %v2015 = vpack.c.b16 %v1975, %v1973
        %v2016 = vpack.c.b16 %v1978, %v1976
        %v2017 = vpack.c.b16 %v1979, %v1977
        %v2018 = vpack.c.b16 %v1982, %v1980
        %v2019 = vpack.c.b16 %v1983, %v1981
        %v2020 = vpack.c.b16 %v1986, %v1984
        %v2021 = vpack.c.b16 %v1987, %v1985
        %v2022 = vpack.c.b16 %v1990, %v1988
        %v2023 = vpack.c.b16 %v1991, %v1989
        %2056 = vmatpush.bf16.msra.mxu0 %v2006
        %2057 = vmatpush.bf16.msra.mxu0 %v2004
        %2058 = vmatpush.bf16.msra.mxu0 %v2002
        %2059 = vmatpush.bf16.msra.mxu0 %v2000
        %2060 = vmatpush.bf16.msra.mxu0 %v1998
        %2061 = vmatpush.bf16.msra.mxu0 %v1996
        %2062 = vmatpush.bf16.msra.mxu0 %v1994
        %2063 = vmatpush.bf16.msra.mxu0 %v1992
        %2064 = vmatmul.bf16.gmra.mxu0 %v1458
        %v2065 = vpop.f32.mrf.mxu0
        %v2066 = vadd.f32 %v1892, %v2065
        %v2067 = vpop.f32.mrf.mxu0
        %2068 = vdwg.mxu0
        %2069 = vmatpush.bf16.msra.mxu0 %v2022
        %2070 = vmatpush.bf16.msra.mxu0 %v2020
        %2071 = vmatpush.bf16.msra.mxu0 %v2018
        %2072 = vmatpush.bf16.msra.mxu0 %v2016
        %2073 = vmatpush.bf16.msra.mxu0 %v2014
        %2074 = vmatpush.bf16.msra.mxu0 %v2012
        %2075 = vmatpush.bf16.msra.mxu0 %v2010
        %2076 = vmatpush.bf16.msra.mxu0 %v2008
        %2077 = vmatmul.bf16.gmra.mxu0 %v1459
        %v2078 = vpop.f32.mrf.mxu0
        %v2079 = vadd.f32 %v2066, %v2078
        %v2080 = vpop.f32.mrf.mxu0
        %2081 = vdwg.mxu0
        %2082 = vmatpush.bf16.msra.mxu0 %v2007
        %2083 = vmatpush.bf16.msra.mxu0 %v2005
        %2084 = vmatpush.bf16.msra.mxu0 %v2003
        %2085 = vmatpush.bf16.msra.mxu0 %v2001
        %2086 = vmatpush.bf16.msra.mxu0 %v1999
        %2087 = vmatpush.bf16.msra.mxu0 %v1997
        %2088 = vmatpush.bf16.msra.mxu0 %v1995
        %2089 = vmatpush.bf16.msra.mxu0 %v1993
        %2090 = vmatmul.bf16.gmra.mxu0 %v1458
        %v2091 = vpop.f32.mrf.mxu0
        %v2092 = vadd.f32 %v1893, %v2091
        %v2093 = vpop.f32.mrf.mxu0
        %2094 = vdwg.mxu0
        %2095 = vmatpush.bf16.msra.mxu0 %v2023
        %2096 = vmatpush.bf16.msra.mxu0 %v2021
        %2097 = vmatpush.bf16.msra.mxu0 %v2019
        %2098 = vmatpush.bf16.msra.mxu0 %v2017
        %2099 = vmatpush.bf16.msra.mxu0 %v2015
        %2100 = vmatpush.bf16.msra.mxu0 %v2013
        %2101 = vmatpush.bf16.msra.mxu0 %v2011
        %2102 = vmatpush.bf16.msra.mxu0 %v2009
        %2103 = vmatmul.bf16.gmra.mxu0 %v1459
        %v2104 = vpop.f32.mrf.mxu0
        %v2105 = vadd.f32 %v2092, %v2104
        %v2106 = vpop.f32.mrf.mxu0
        %2107 = vdwg.mxu0
        %v2108 = vmul.f32 %v1645, 0.088388346
        %v2109 = vmul.f32 %v1671, 0.088388346
        %v2110 = vrot.slane %v2108, 4
        %vm2111 = vcmask 1047556
        %v2112 = vsel %vm2111, 0.0, %v2110
        %v2114 = vunpack.c.l.s4 1983009808
        %v2115 = vunpack.c.0.s8 %v2114
        %v2116 = vperm.slane %v2108, %v2115
        %v2118 = vunpack.c.l.s4 1983009808
        %v2119 = vunpack.c.0.s8 %v2118
        %v2120 = vperm.slane %v2112, %v2119
        %v2121 = vrot.slane %v2109, 4
        %v2122 = vsel %vm2111, 0.0, %v2121
        %v2124 = vunpack.c.l.s4 1983009808
        %v2125 = vunpack.c.0.s8 %v2124
        %v2126 = vperm.slane %v2109, %v2125
        %v2128 = vunpack.c.l.s4 1983009808
        %v2129 = vunpack.c.0.s8 %v2128
        %v2130 = vperm.slane %v2122, %v2129
        %v2131 = vrot.slane %v2126, 4
        %v2132 = vsel %vm2111, %v2131, %v2116
        %v2133 = vrot.slane %v2116, 4
        %v2134 = vsel %vm2111, %v2126, %v2133
        %v2136 = vunpack.c.l.s4 1934713408
        %v2137 = vunpack.c.0.s8 %v2136
        %v2138 = vperm.slane %v2132, %v2137
        %v2140 = vunpack.c.l.s4 1934713408
        %v2141 = vunpack.c.0.s8 %v2140
        %v2142 = vperm.slane %v2134, %v2141
        %v2143 = vrot.slane %v2130, 4
        %v2144 = vsel %vm2111, %v2143, %v2120
        %v2145 = vrot.slane %v2120, 4
        %v2146 = vsel %vm2111, %v2130, %v2145
        %v2148 = vunpack.c.l.s4 1934713408
        %v2149 = vunpack.c.0.s8 %v2148
        %v2150 = vperm.slane %v2144, %v2149
        %v2152 = vunpack.c.l.s4 1934713408
        %v2153 = vunpack.c.0.s8 %v2152
        %v2154 = vperm.slane %v2146, %v2153
        %v2155 = vrot.slane %v2138, 4
        %v2156 = vsel %vm2111, 0.0, %v2155
        %v2157 = vrot.slane %v2142, 4
        %v2158 = vsel %vm2111, 0.0, %v2157
        %v2159 = vrot.slane %v2150, 4
        %v2160 = vsel %vm2111, 0.0, %v2159
        %v2161 = vrot.slane %v2154, 4
        %v2162 = vsel %vm2111, 0.0, %v2161
        %v2163 = vsel %vm2111, %v2157, %v2138
        %v2165 = vunpack.c.l.s4 1983009808
        %v2166 = vunpack.c.0.s8 %v2165
        %v2167 = vperm.slane %v2163, %v2166
        %v2168 = vrot.slane %v2158, 4
        %v2169 = vsel %vm2111, %v2168, %v2156
        %v2171 = vunpack.c.l.s4 1983009808
        %v2172 = vunpack.c.0.s8 %v2171
        %v2173 = vperm.slane %v2169, %v2172
        %v2174 = vsel %vm2111, %v2161, %v2150
        %v2176 = vunpack.c.l.s4 1983009808
        %v2177 = vunpack.c.0.s8 %v2176
        %v2178 = vperm.slane %v2174, %v2177
        %v2179 = vrot.slane %v2162, 4
        %v2180 = vsel %vm2111, %v2179, %v2160
        %v2182 = vunpack.c.l.s4 1983009808
        %v2183 = vunpack.c.0.s8 %v2182
        %v2184 = vperm.slane %v2180, %v2183
        %v2185 = vrot.slane %v2173, 4
        %v2186 = vsel %vm2111, %v2185, %v2167
        %v2188 = vunpack.c.l.s4 1934713408
        %v2189 = vunpack.c.0.s8 %v2188
        %v2190 = vperm.slane %v2186, %v2189
        %v2191 = vrot.slane %v2184, 4
        %v2192 = vsel %vm2111, %v2191, %v2178
        %v2194 = vunpack.c.l.s4 1934713408
        %v2195 = vunpack.c.0.s8 %v2194
        %v2196 = vperm.slane %v2192, %v2195
        %v2197 = vrot.slane %v2196, 4
        %v2198 = vsel %vm2111, %v2197, %v2190
        %v2199 = vrot.slane %v2190, 4
        %v2200 = vsel %vm2111, %v2196, %v2199
        %v2201 = vpack.c.bf16 %v2198, %v2198
        %v2202 = vpack.c.bf16 %v2200, %v2200
        %v2203 = vrot.slane %v1862, 4
        %v2204 = vsel %vm2111, 0.0, %v2203
        %v2206 = vunpack.c.l.s4 1983009808
        %v2207 = vunpack.c.0.s8 %v2206
        %v2208 = vperm.slane %v1862, %v2207
        %v2210 = vunpack.c.l.s4 1983009808
        %v2211 = vunpack.c.0.s8 %v2210
        %v2212 = vperm.slane %v2204, %v2211
        %v2213 = vrot.slane %v1888, 4
        %v2214 = vsel %vm2111, 0.0, %v2213
        %v2216 = vunpack.c.l.s4 1983009808
        %v2217 = vunpack.c.0.s8 %v2216
        %v2218 = vperm.slane %v1888, %v2217
        %v2220 = vunpack.c.l.s4 1983009808
        %v2221 = vunpack.c.0.s8 %v2220
        %v2222 = vperm.slane %v2214, %v2221
        %v2223 = vrot.slane %v2218, 4
        %v2224 = vsel %vm2111, %v2223, %v2208
        %v2225 = vrot.slane %v2208, 4
        %v2226 = vsel %vm2111, %v2218, %v2225
        %v2228 = vunpack.c.l.s4 1934713408
        %v2229 = vunpack.c.0.s8 %v2228
        %v2230 = vperm.slane %v2224, %v2229
        %v2232 = vunpack.c.l.s4 1934713408
        %v2233 = vunpack.c.0.s8 %v2232
        %v2234 = vperm.slane %v2226, %v2233
        %v2235 = vrot.slane %v2222, 4
        %v2236 = vsel %vm2111, %v2235, %v2212
        %v2237 = vrot.slane %v2212, 4
        %v2238 = vsel %vm2111, %v2222, %v2237
        %v2240 = vunpack.c.l.s4 1934713408
        %v2241 = vunpack.c.0.s8 %v2240
        %v2242 = vperm.slane %v2236, %v2241
        %v2244 = vunpack.c.l.s4 1934713408
        %v2245 = vunpack.c.0.s8 %v2244
        %v2246 = vperm.slane %v2238, %v2245
        %v2247 = vrot.slane %v2230, 4
        %v2248 = vsel %vm2111, 0.0, %v2247
        %v2249 = vrot.slane %v2234, 4
        %v2250 = vsel %vm2111, 0.0, %v2249
        %v2251 = vrot.slane %v2242, 4
        %v2252 = vsel %vm2111, 0.0, %v2251
        %v2253 = vrot.slane %v2246, 4
        %v2254 = vsel %vm2111, 0.0, %v2253
        %v2255 = vsel %vm2111, %v2249, %v2230
        %v2257 = vunpack.c.l.s4 1983009808
        %v2258 = vunpack.c.0.s8 %v2257
        %v2259 = vperm.slane %v2255, %v2258
        %v2260 = vrot.slane %v2250, 4
        %v2261 = vsel %vm2111, %v2260, %v2248
        %v2263 = vunpack.c.l.s4 1983009808
        %v2264 = vunpack.c.0.s8 %v2263
        %v2265 = vperm.slane %v2261, %v2264
        %v2266 = vsel %vm2111, %v2253, %v2242
        %v2268 = vunpack.c.l.s4 1983009808
        %v2269 = vunpack.c.0.s8 %v2268
        %v2270 = vperm.slane %v2266, %v2269
        %v2271 = vrot.slane %v2254, 4
        %v2272 = vsel %vm2111, %v2271, %v2252
        %v2274 = vunpack.c.l.s4 1983009808
        %v2275 = vunpack.c.0.s8 %v2274
        %v2276 = vperm.slane %v2272, %v2275
        %v2277 = vrot.slane %v2265, 4
        %v2278 = vsel %vm2111, %v2277, %v2259
        %v2280 = vunpack.c.l.s4 1934713408
        %v2281 = vunpack.c.0.s8 %v2280
        %v2282 = vperm.slane %v2278, %v2281
        %v2283 = vrot.slane %v2276, 4
        %v2284 = vsel %vm2111, %v2283, %v2270
        %v2286 = vunpack.c.l.s4 1934713408
        %v2287 = vunpack.c.0.s8 %v2286
        %v2288 = vperm.slane %v2284, %v2287
        %v2289 = vrot.slane %v2288, 4
        %v2290 = vsel %vm2111, %v2289, %v2282
        %v2291 = vrot.slane %v2282, 4
        %v2292 = vsel %vm2111, %v2288, %v2291
        %v2293 = vpack.c.bf16 %v2290, %v2290
        %v2294 = vpack.c.bf16 %v2292, %v2292
        %v2295 = vrot.slane %v2079, 4
        %v2296 = vsel %vm2111, 0.0, %v2295
        %v2298 = vunpack.c.l.s4 1983009808
        %v2299 = vunpack.c.0.s8 %v2298
        %v2300 = vperm.slane %v2079, %v2299
        %v2302 = vunpack.c.l.s4 1983009808
        %v2303 = vunpack.c.0.s8 %v2302
        %v2304 = vperm.slane %v2296, %v2303
        %v2305 = vrot.slane %v2105, 4
        %v2306 = vsel %vm2111, 0.0, %v2305
        %v2308 = vunpack.c.l.s4 1983009808
        %v2309 = vunpack.c.0.s8 %v2308
        %v2310 = vperm.slane %v2105, %v2309
        %v2312 = vunpack.c.l.s4 1983009808
        %v2313 = vunpack.c.0.s8 %v2312
        %v2314 = vperm.slane %v2306, %v2313
        %v2315 = vrot.slane %v2310, 4
        %v2316 = vsel %vm2111, %v2315, %v2300
        %v2317 = vrot.slane %v2300, 4
        %v2318 = vsel %vm2111, %v2310, %v2317
        %v2320 = vunpack.c.l.s4 1934713408
        %v2321 = vunpack.c.0.s8 %v2320
        %v2322 = vperm.slane %v2316, %v2321
        %v2324 = vunpack.c.l.s4 1934713408
        %v2325 = vunpack.c.0.s8 %v2324
        %v2326 = vperm.slane %v2318, %v2325
        %v2327 = vrot.slane %v2314, 4
        %v2328 = vsel %vm2111, %v2327, %v2304
        %v2329 = vrot.slane %v2304, 4
        %v2330 = vsel %vm2111, %v2314, %v2329
        %v2332 = vunpack.c.l.s4 1934713408
        %v2333 = vunpack.c.0.s8 %v2332
        %v2334 = vperm.slane %v2328, %v2333
        %v2336 = vunpack.c.l.s4 1934713408
        %v2337 = vunpack.c.0.s8 %v2336
        %v2338 = vperm.slane %v2330, %v2337
        %v2339 = vrot.slane %v2322, 4
        %v2340 = vsel %vm2111, 0.0, %v2339
        %v2341 = vrot.slane %v2326, 4
        %v2342 = vsel %vm2111, 0.0, %v2341
        %v2343 = vrot.slane %v2334, 4
        %v2344 = vsel %vm2111, 0.0, %v2343
        %v2345 = vrot.slane %v2338, 4
        %v2346 = vsel %vm2111, 0.0, %v2345
        %v2347 = vsel %vm2111, %v2341, %v2322
        %v2349 = vunpack.c.l.s4 1983009808
        %v2350 = vunpack.c.0.s8 %v2349
        %v2351 = vperm.slane %v2347, %v2350
        %v2352 = vrot.slane %v2342, 4
        %v2353 = vsel %vm2111, %v2352, %v2340
        %v2355 = vunpack.c.l.s4 1983009808
        %v2356 = vunpack.c.0.s8 %v2355
        %v2357 = vperm.slane %v2353, %v2356
        %v2358 = vsel %vm2111, %v2345, %v2334
        %v2360 = vunpack.c.l.s4 1983009808
        %v2361 = vunpack.c.0.s8 %v2360
        %v2362 = vperm.slane %v2358, %v2361
        %v2363 = vrot.slane %v2346, 4
        %v2364 = vsel %vm2111, %v2363, %v2344
        %v2366 = vunpack.c.l.s4 1983009808
        %v2367 = vunpack.c.0.s8 %v2366
        %v2368 = vperm.slane %v2364, %v2367
        %v2369 = vrot.slane %v2357, 4
        %v2370 = vsel %vm2111, %v2369, %v2351
        %v2372 = vunpack.c.l.s4 1934713408
        %v2373 = vunpack.c.0.s8 %v2372
        %v2374 = vperm.slane %v2370, %v2373
        %v2375 = vrot.slane %v2368, 4
        %v2376 = vsel %vm2111, %v2375, %v2362
        %v2378 = vunpack.c.l.s4 1934713408
        %v2379 = vunpack.c.0.s8 %v2378
        %v2380 = vperm.slane %v2376, %v2379
        %v2381 = vrot.slane %v2380, 4
        %v2382 = vsel %vm2111, %v2381, %v2374
        %v2383 = vrot.slane %v2374, 4
        %v2384 = vsel %vm2111, %v2380, %v2383
        %v2385 = vpack.c.bf16 %v2382, %v2382
        %v2386 = vpack.c.bf16 %v2384, %v2384
        %2387 = vmatpush.bf16.xpose.msra.mxu0 0
        %2388 = vmatpush.bf16.xpose.msra.mxu0 0
        %2389 = vmatpush.bf16.xpose.msra.mxu0 0
        %2390 = vmatpush.bf16.xpose.msra.mxu0 0
        %2391 = vmatpush.bf16.xpose.msra.mxu0 0
        %2392 = vmatpush.bf16.xpose.msra.mxu0 0
        %2393 = vmatpush.bf16.xpose.msra.mxu0 0
        %2394 = vmatpush.bf16.xpose.msra.mxu0 %v2293
        %2395 = vmatmul.bf16.gmra.mxu0 %v2201
        %v2396 = vpop.f32.mrf.mxu0
        %v2397 = vadd.f32 %v1316, %v2396
        %v2398 = vpop.f32.mrf.mxu0
        %2399 = vdwg.mxu0
        %2400 = vmatpush.bf16.xpose.msra.mxu0 0
        %2401 = vmatpush.bf16.xpose.msra.mxu0 0
        %2402 = vmatpush.bf16.xpose.msra.mxu0 0
        %2403 = vmatpush.bf16.xpose.msra.mxu0 0
        %2404 = vmatpush.bf16.xpose.msra.mxu0 0
        %2405 = vmatpush.bf16.xpose.msra.mxu0 0
        %2406 = vmatpush.bf16.xpose.msra.mxu0 0
        %2407 = vmatpush.bf16.xpose.msra.mxu0 %v2294
        %2408 = vmatmul.bf16.gmra.mxu0 %v2202
        %v2409 = vpop.f32.mrf.mxu0
        %v2410 = vadd.f32 %v1316, %v2409
        %v2411 = vpop.f32.mrf.mxu0
        %2412 = vdwg.mxu0
        %vm2413 = vcmask 64512
        %v2414 = vsel %vm2413, %v2397, -inf
        %2415 = vmax.xlane.f32.xlu0 %v2414
        %v2416 = vpop.xlane.xlu0 %2415
        %v2417 = vsel %vm2413, %v2410, -inf
        %2418 = vmax.xlane.f32.xlu0 %v2417
        %v2419 = vpop.xlane.xlu0 %2418
        %v2420 = vsub.f32 %v2397, %v2416
        %v2421 = vsub.f32 %v2410, %v2419
        %v2422 = vmul.f32 %v2420, 1.442695
        %v2423 = vpow.pop %v2422
        %v2424 = vmul.f32 %v2421, 1.442695
        %v2425 = vpow.pop %v2424
        %v2426 = vsel %vm2413, %v2423, 0.0
        %2427 = vadd.xlane.f32.xlu0 %v2426
        %v2428 = vpop.xlane.xlu0 %2427
        %v2429 = vsel %vm2413, %v2425, 0.0
        %2430 = vadd.xlane.f32.xlu0 %v2429
        %v2431 = vpop.xlane.xlu0 %2430
        %v2432 = vrcp.pop %v2428
        %v2433 = vrcp.pop %v2431
        %v2434 = vmul.f32 %v2423, %v2432
        %v2435 = vmul.f32 %v2425, %v2433
        %v2436 = vpack.c.bf16 %v2434, %v2434
        %v2437 = vpack.c.bf16 %v2435, %v2435
        %v2439 = vsel %vm2413, %v2436, 0
        %vm2441 = vcmask 1043456
        %v2443 = vsel %vm2441, %v2385, 0
        %2445 = vmatpush.bf16.msra.mxu0 0
        %2446 = vmatpush.bf16.msra.mxu0 0
        %2447 = vmatpush.bf16.msra.mxu0 0
        %2448 = vmatpush.bf16.msra.mxu0 0
        %2449 = vmatpush.bf16.msra.mxu0 0
        %2450 = vmatpush.bf16.msra.mxu0 0
        %2451 = vmatpush.bf16.msra.mxu0 0
        %2452 = vmatpush.bf16.msra.mxu0 %v2443
        %2453 = vmatmul.bf16.gmra.mxu0 %v2439
        %v2454 = vpop.f32.mrf.mxu0
        %v2455 = vadd.f32 0.0, %v2454
        %v2456 = vpop.f32.mrf.mxu0
        %2457 = vdwg.mxu0
        %v2459 = vsel %vm2413, %v2437, 0
        %v2462 = vsel %vm2441, %v2386, 0
        %2464 = vmatpush.bf16.msra.mxu0 0
        %2465 = vmatpush.bf16.msra.mxu0 0
        %2466 = vmatpush.bf16.msra.mxu0 0
        %2467 = vmatpush.bf16.msra.mxu0 0
        %2468 = vmatpush.bf16.msra.mxu0 0
        %2469 = vmatpush.bf16.msra.mxu0 0
        %2470 = vmatpush.bf16.msra.mxu0 0
        %2471 = vmatpush.bf16.msra.mxu0 %v2462
        %2472 = vmatmul.bf16.gmra.mxu0 %v2459
        %v2473 = vpop.f32.mrf.mxu0
        %v2474 = vadd.f32 0.0, %v2473
        %v2475 = vpop.f32.mrf.mxu0
        %2476 = vdwg.mxu0
        %v2477 = vrot.slane %v2455, 4
        %v2478 = vsel %vm2111, 0.0, %v2477
        %v2480 = vunpack.c.l.s4 1983009808
        %v2481 = vunpack.c.0.s8 %v2480
        %v2482 = vperm.slane %v2455, %v2481
        %v2484 = vunpack.c.l.s4 1983009808
        %v2485 = vunpack.c.0.s8 %v2484
        %v2486 = vperm.slane %v2478, %v2485
        %v2487 = vrot.slane %v2474, 4
        %v2488 = vsel %vm2111, 0.0, %v2487
        %v2490 = vunpack.c.l.s4 1983009808
        %v2491 = vunpack.c.0.s8 %v2490
        %v2492 = vperm.slane %v2474, %v2491
        %v2494 = vunpack.c.l.s4 1983009808
        %v2495 = vunpack.c.0.s8 %v2494
        %v2496 = vperm.slane %v2488, %v2495
        %v2497 = vrot.slane %v2492, 4
        %v2498 = vsel %vm2111, %v2497, %v2482
        %v2499 = vrot.slane %v2482, 4
        %v2500 = vsel %vm2111, %v2492, %v2499
        %v2502 = vunpack.c.l.s4 1934713408
        %v2503 = vunpack.c.0.s8 %v2502
        %v2504 = vperm.slane %v2498, %v2503
        %v2506 = vunpack.c.l.s4 1934713408
        %v2507 = vunpack.c.0.s8 %v2506
        %v2508 = vperm.slane %v2500, %v2507
        %v2509 = vrot.slane %v2496, 4
        %v2510 = vsel %vm2111, %v2509, %v2486
        %v2511 = vrot.slane %v2486, 4
        %v2512 = vsel %vm2111, %v2496, %v2511
        %v2514 = vunpack.c.l.s4 1934713408
        %v2515 = vunpack.c.0.s8 %v2514
        %v2516 = vperm.slane %v2510, %v2515
        %v2518 = vunpack.c.l.s4 1934713408
        %v2519 = vunpack.c.0.s8 %v2518
        %v2520 = vperm.slane %v2512, %v2519
        %v2521 = vrot.slane %v2504, 4
        %v2522 = vsel %vm2111, 0.0, %v2521
        %v2523 = vrot.slane %v2508, 4
        %v2524 = vsel %vm2111, 0.0, %v2523
        %v2525 = vrot.slane %v2516, 4
        %v2526 = vsel %vm2111, 0.0, %v2525
        %v2527 = vrot.slane %v2520, 4
        %v2528 = vsel %vm2111, 0.0, %v2527
        %v2529 = vsel %vm2111, %v2523, %v2504
        %v2531 = vunpack.c.l.s4 1983009808
        %v2532 = vunpack.c.0.s8 %v2531
        %v2533 = vperm.slane %v2529, %v2532
        %v2534 = vrot.slane %v2524, 4
        %v2535 = vsel %vm2111, %v2534, %v2522
        %v2537 = vunpack.c.l.s4 1983009808
        %v2538 = vunpack.c.0.s8 %v2537
        %v2539 = vperm.slane %v2535, %v2538
        %v2540 = vsel %vm2111, %v2527, %v2516
        %v2542 = vunpack.c.l.s4 1983009808
        %v2543 = vunpack.c.0.s8 %v2542
        %v2544 = vperm.slane %v2540, %v2543
        %v2545 = vrot.slane %v2528, 4
        %v2546 = vsel %vm2111, %v2545, %v2526
        %v2548 = vunpack.c.l.s4 1983009808
        %v2549 = vunpack.c.0.s8 %v2548
        %v2550 = vperm.slane %v2546, %v2549
        %v2551 = vrot.slane %v2539, 4
        %v2552 = vsel %vm2111, %v2551, %v2533
        %v2554 = vunpack.c.l.s4 1934713408
        %v2555 = vunpack.c.0.s8 %v2554
        %v2556 = vperm.slane %v2552, %v2555
        %v2557 = vrot.slane %v2550, 4
        %v2558 = vsel %vm2111, %v2557, %v2544
        %v2560 = vunpack.c.l.s4 1934713408
        %v2561 = vunpack.c.0.s8 %v2560
        %v2562 = vperm.slane %v2558, %v2561
        %v2563 = vrot.slane %v2562, 4
        %v2564 = vsel %vm2111, %v2563, %v2556
        %v2565 = vrot.slane %v2556, 4
        %v2566 = vsel %vm2111, %v2562, %v2565
        %v2567 = vpack.c.bf16 %v2564, %v2564
        %v2568 = vpack.c.bf16 %v2566, %v2566
        %v2570 = vperm.slane %v1449, 0
        %v2571 = vperm.slane %v1449, 1
        %v2606 = vunpack.c.l.b16 %v1417
        %v2607 = vunpack.c.h.b16 %v1417
        %v2608 = vunpack.c.l.b16 %v1418
        %v2609 = vunpack.c.h.b16 %v1418
        %v2610 = vunpack.c.l.b16 %v1419
        %v2611 = vunpack.c.h.b16 %v1419
        %v2612 = vunpack.c.l.b16 %v1420
        %v2613 = vunpack.c.h.b16 %v1420
        %v2614 = vunpack.c.l.b16 %v1421
        %v2615 = vunpack.c.h.b16 %v1421
        %v2616 = vunpack.c.l.b16 %v1422
        %v2617 = vunpack.c.h.b16 %v1422
        %v2618 = vunpack.c.l.b16 %v1423
        %v2619 = vunpack.c.h.b16 %v1423
        %v2620 = vunpack.c.l.b16 %v1424
        %v2621 = vunpack.c.h.b16 %v1424
        %v2622 = vunpack.c.l.b16 %v1425
        %v2623 = vunpack.c.h.b16 %v1425
        %v2624 = vunpack.c.l.b16 %v1426
        %v2625 = vunpack.c.h.b16 %v1426
        %v2626 = vunpack.c.l.b16 %v1427
        %v2627 = vunpack.c.h.b16 %v1427
        %v2628 = vunpack.c.l.b16 %v1428
        %v2629 = vunpack.c.h.b16 %v1428
        %v2630 = vunpack.c.l.b16 %v1429
        %v2631 = vunpack.c.h.b16 %v1429
        %v2632 = vunpack.c.l.b16 %v1430
        %v2633 = vunpack.c.h.b16 %v1430
        %v2634 = vunpack.c.l.b16 %v1431
        %v2635 = vunpack.c.h.b16 %v1431
        %v2636 = vunpack.c.l.b16 %v1432
        %v2637 = vunpack.c.h.b16 %v1432
        %v2638 = vunpack.c.l.b16 %v1433
        %v2639 = vunpack.c.h.b16 %v1433
        %v2640 = vunpack.c.l.b16 %v1434
        %v2641 = vunpack.c.h.b16 %v1434
        %v2642 = vunpack.c.l.b16 %v1435
        %v2643 = vunpack.c.h.b16 %v1435
        %v2644 = vunpack.c.l.b16 %v1436
        %v2645 = vunpack.c.h.b16 %v1436
        %v2646 = vunpack.c.l.b16 %v1437
        %v2647 = vunpack.c.h.b16 %v1437
        %v2648 = vunpack.c.l.b16 %v1438
        %v2649 = vunpack.c.h.b16 %v1438
        %v2650 = vunpack.c.l.b16 %v1439
        %v2651 = vunpack.c.h.b16 %v1439
        %v2652 = vunpack.c.l.b16 %v1440
        %v2653 = vunpack.c.h.b16 %v1440
        %v2654 = vunpack.c.l.b16 %v1441
        %v2655 = vunpack.c.h.b16 %v1441
        %v2656 = vunpack.c.l.b16 %v1442
        %v2657 = vunpack.c.h.b16 %v1442
        %v2658 = vunpack.c.l.b16 %v1443
        %v2659 = vunpack.c.h.b16 %v1443
        %v2660 = vunpack.c.l.b16 %v1444
        %v2661 = vunpack.c.h.b16 %v1444
        %v2662 = vunpack.c.l.b16 %v1445
        %v2663 = vunpack.c.h.b16 %v1445
        %v2664 = vunpack.c.l.b16 %v1446
        %v2665 = vunpack.c.h.b16 %v1446
        %v2666 = vunpack.c.l.b16 %v1447
        %v2667 = vunpack.c.h.b16 %v1447
        %v2668 = vunpack.c.l.b16 %v1448
        %v2669 = vunpack.c.h.b16 %v1448
        %v2670 = vpack.c.b16 %v2608, %v2606
        %v2671 = vpack.c.b16 %v2609, %v2607
        %v2672 = vpack.c.b16 %v2612, %v2610
        %v2673 = vpack.c.b16 %v2613, %v2611
        %v2674 = vpack.c.b16 %v2616, %v2614
        %v2675 = vpack.c.b16 %v2617, %v2615
        %v2676 = vpack.c.b16 %v2620, %v2618
        %v2677 = vpack.c.b16 %v2621, %v2619
        %v2678 = vpack.c.b16 %v2624, %v2622
        %v2679 = vpack.c.b16 %v2625, %v2623
        %v2680 = vpack.c.b16 %v2628, %v2626
        %v2681 = vpack.c.b16 %v2629, %v2627
        %v2682 = vpack.c.b16 %v2632, %v2630
        %v2683 = vpack.c.b16 %v2633, %v2631
        %v2684 = vpack.c.b16 %v2636, %v2634
        %v2685 = vpack.c.b16 %v2637, %v2635
        %v2686 = vpack.c.b16 %v2640, %v2638
        %v2687 = vpack.c.b16 %v2641, %v2639
        %v2688 = vpack.c.b16 %v2644, %v2642
        %v2689 = vpack.c.b16 %v2645, %v2643
        %v2690 = vpack.c.b16 %v2648, %v2646
        %v2691 = vpack.c.b16 %v2649, %v2647
        %v2692 = vpack.c.b16 %v2652, %v2650
        %v2693 = vpack.c.b16 %v2653, %v2651
        %v2694 = vpack.c.b16 %v2656, %v2654
        %v2695 = vpack.c.b16 %v2657, %v2655
        %v2696 = vpack.c.b16 %v2660, %v2658
        %v2697 = vpack.c.b16 %v2661, %v2659
        %v2698 = vpack.c.b16 %v2664, %v2662
        %v2699 = vpack.c.b16 %v2665, %v2663
        %v2700 = vpack.c.b16 %v2668, %v2666
        %v2701 = vpack.c.b16 %v2669, %v2667
        %2734 = vmatpush.bf16.msra.mxu0 %v2684
        %2735 = vmatpush.bf16.msra.mxu0 %v2682
        %2736 = vmatpush.bf16.msra.mxu0 %v2680
        %2737 = vmatpush.bf16.msra.mxu0 %v2678
        %2738 = vmatpush.bf16.msra.mxu0 %v2676
        %2739 = vmatpush.bf16.msra.mxu0 %v2674
        %2740 = vmatpush.bf16.msra.mxu0 %v2672
        %2741 = vmatpush.bf16.msra.mxu0 %v2670
        %2742 = vmatmul.bf16.gmra.mxu0 %v2567
        %v2743 = vpop.f32.mrf.mxu0
        %v2744 = vadd.f32 %v2570, %v2743
        %v2745 = vpop.f32.mrf.mxu0
        %2746 = vdwg.mxu0
        %2747 = vmatpush.bf16.msra.mxu0 %v2700
        %2748 = vmatpush.bf16.msra.mxu0 %v2698
        %2749 = vmatpush.bf16.msra.mxu0 %v2696
        %2750 = vmatpush.bf16.msra.mxu0 %v2694
        %2751 = vmatpush.bf16.msra.mxu0 %v2692
        %2752 = vmatpush.bf16.msra.mxu0 %v2690
        %2753 = vmatpush.bf16.msra.mxu0 %v2688
        %2754 = vmatpush.bf16.msra.mxu0 %v2686
        %2755 = vmatmul.bf16.gmra.mxu0 %v2568
        %v2756 = vpop.f32.mrf.mxu0
        %v2757 = vadd.f32 %v2744, %v2756
        %v2758 = vpop.f32.mrf.mxu0
        %2759 = vdwg.mxu0
        %2760 = vmatpush.bf16.msra.mxu0 %v2685
        %2761 = vmatpush.bf16.msra.mxu0 %v2683
        %2762 = vmatpush.bf16.msra.mxu0 %v2681
        %2763 = vmatpush.bf16.msra.mxu0 %v2679
        %2764 = vmatpush.bf16.msra.mxu0 %v2677
        %2765 = vmatpush.bf16.msra.mxu0 %v2675
        %2766 = vmatpush.bf16.msra.mxu0 %v2673
        %2767 = vmatpush.bf16.msra.mxu0 %v2671
        %2768 = vmatmul.bf16.gmra.mxu0 %v2567
        %v2769 = vpop.f32.mrf.mxu0
        %v2770 = vadd.f32 %v2571, %v2769
        %v2771 = vpop.f32.mrf.mxu0
        %2772 = vdwg.mxu0
        %2773 = vmatpush.bf16.msra.mxu0 %v2701
        %2774 = vmatpush.bf16.msra.mxu0 %v2699
        %2775 = vmatpush.bf16.msra.mxu0 %v2697
        %2776 = vmatpush.bf16.msra.mxu0 %v2695
        %2777 = vmatpush.bf16.msra.mxu0 %v2693
        %2778 = vmatpush.bf16.msra.mxu0 %v2691
        %2779 = vmatpush.bf16.msra.mxu0 %v2689
        %2780 = vmatpush.bf16.msra.mxu0 %v2687
        %2781 = vmatmul.bf16.gmra.mxu0 %v2568
        %v2782 = vpop.f32.mrf.mxu0
        %v2783 = vadd.f32 %v2770, %v2782
        %v2784 = vpop.f32.mrf.mxu0
        %2785 = vdwg.mxu0
        %v2786 = vld [vmem:[%s51] sm:$0x3]
        %v2787 = vld [vmem:[%s53] sm:$0x3]
        %v2788 = vadd.f32 %v1309, %v2757
        %v2789 = vadd.f32 %v1310, %v2783
        %v2790 = vadd.f32 %v2788, %v2789
        %2791 = vadd.xlane.f32.xlu0 %v2790
        %v2792 = vpop.xlane.xlu0 %2791
        %v2793 = vrcp.pop 256.0
        %v2794 = vmul.f32 256.0, %v2793
        %v2795 = vsub.f32 1.0, %v2794
        %v2796 = vmul.f32 %v2793, %v2795
        %v2797 = vadd.f32 %v2793, %v2796
        %vm2798 = vweird.f32 %v2793
        %v2799 = vsel %vm2798, %v2793, %v2797
        %v2800 = vmul.f32 %v2792, %v2799
        %v2801 = vsub.f32 %v2788, %v2800
        %v2802 = vsub.f32 %v2789, %v2800
        %v2803 = vmul.f32 %v2801, %v2801
        %v2804 = vmul.f32 %v2802, %v2802
        %v2805 = vadd.f32 %v2803, %v2804
        %2806 = vadd.xlane.f32.xlu0 %v2805
        %v2807 = vpop.xlane.xlu0 %2806
        %v2808 = vmul.f32 %v2807, %v2799
        %v2809 = vadd.f32 %v2808, 1e-05
        %v2810 = vrsqrt.pop %v2809
        %v2811 = vmul.f32 %v2810, %v2809
        %v2812 = vmul.f32 %v2811, %v2810
        %v2813 = vmul.f32 0.5, %v2812
        %v2814 = vsub.f32 1.5, %v2813
        %v2815 = vmul.f32 %v2810, %v2814
        %vm2816 = vweird.f32 %v2809
        %vm2817 = vweird.f32 %v2810
        %vm2818 = vmor %vm2816, %vm2817
        %v2819 = vsel %vm2818, %v2810, %v2815
        %v2820 = vmul.f32 %v2801, %v2819
        %v2821 = vmul.f32 %v2802, %v2819
        %v2823 = vperm.slane %v2786, 0
        %v2824 = vperm.slane %v2786, 1
        %v2827 = vmul.f32 %v2820, %v2823
        %v2828 = vmul.f32 %v2821, %v2824
        %v2830 = vperm.slane %v2787, 0
        %v2831 = vperm.slane %v2787, 1
        %v2834 = vadd.f32 %v2827, %v2830
        %v2835 = vadd.f32 %v2828, %v2831
        %v2836 = vpack.c.bf16 %v2834, %v2834
        %v2837 = vpack.c.bf16 %v2835, %v2835
        %v2838 = vld [vmem:[#allocation19] sm:$0xff]
        %v2839 = vld [vmem:[#allocation19 + $0x8] sm:$0xff]
        %v2840 = vld [vmem:[#allocation19 + $0x10] sm:$0xff]
        %v2841 = vld [vmem:[#allocation19 + $0x18] sm:$0xff]
        %v2842 = vld [vmem:[#allocation19 + $0x20] sm:$0xff]
        %v2843 = vld [vmem:[#allocation19 + $0x28] sm:$0xff]
        %v2844 = vld [vmem:[#allocation19 + $0x30] sm:$0xff]
        %v2845 = vld [vmem:[#allocation19 + $0x38] sm:$0xff]
        %v2846 = vld [vmem:[#allocation19 + $0x40] sm:$0xff]
        %v2847 = vld [vmem:[#allocation19 + $0x48] sm:$0xff]
        %v2848 = vld [vmem:[#allocation19 + $0x50] sm:$0xff]
        %v2849 = vld [vmem:[#allocation19 + $0x58] sm:$0xff]
        %v2850 = vld [vmem:[#allocation19 + $0x60] sm:$0xff]
        %v2851 = vld [vmem:[#allocation19 + $0x68] sm:$0xff]
        %v2852 = vld [vmem:[#allocation19 + $0x70] sm:$0xff]
        %v2853 = vld [vmem:[#allocation19 + $0x78] sm:$0xff]
        %v2854 = vld [vmem:[#allocation19 + $0x80] sm:$0xff]
        %v2855 = vld [vmem:[#allocation19 + $0x88] sm:$0xff]
        %v2856 = vld [vmem:[#allocation19 + $0x90] sm:$0xff]
        %v2857 = vld [vmem:[#allocation19 + $0x98] sm:$0xff]
        %v2858 = vld [vmem:[#allocation19 + $0xa0] sm:$0xff]
        %v2859 = vld [vmem:[#allocation19 + $0xa8] sm:$0xff]
        %v2860 = vld [vmem:[#allocation19 + $0xb0] sm:$0xff]
        %v2861 = vld [vmem:[#allocation19 + $0xb8] sm:$0xff]
        %v2862 = vld [vmem:[#allocation19 + $0xc0] sm:$0xff]
        %v2863 = vld [vmem:[#allocation19 + $0xc8] sm:$0xff]
        %v2864 = vld [vmem:[#allocation19 + $0xd0] sm:$0xff]
        %v2865 = vld [vmem:[#allocation19 + $0xd8] sm:$0xff]
        %v2866 = vld [vmem:[#allocation19 + $0xe0] sm:$0xff]
        %v2867 = vld [vmem:[#allocation19 + $0xe8] sm:$0xff]
        %v2868 = vld [vmem:[#allocation19 + $0xf0] sm:$0xff]
        %v2869 = vld [vmem:[#allocation19 + $0xf8] sm:$0xff]
        %v2870 = vld [vmem:[#allocation20] sm:$0xff]
        %v2871 = vld [vmem:[#allocation20 + $0x8] sm:$0xff]
        %v2872 = vld [vmem:[#allocation20 + $0x10] sm:$0xff]
        %v2873 = vld [vmem:[#allocation20 + $0x18] sm:$0xff]
        %v2874 = vld [vmem:[#allocation20 + $0x20] sm:$0xff]
        %v2875 = vld [vmem:[#allocation20 + $0x28] sm:$0xff]
        %v2876 = vld [vmem:[#allocation20 + $0x30] sm:$0xff]
        %v2877 = vld [vmem:[#allocation20 + $0x38] sm:$0xff]
        %v2878 = vld [vmem:[#allocation20 + $0x40] sm:$0xff]
        %v2879 = vld [vmem:[#allocation20 + $0x48] sm:$0xff]
        %v2880 = vld [vmem:[#allocation20 + $0x50] sm:$0xff]
        %v2881 = vld [vmem:[#allocation20 + $0x58] sm:$0xff]
        %v2882 = vld [vmem:[#allocation20 + $0x60] sm:$0xff]
        %v2883 = vld [vmem:[#allocation20 + $0x68] sm:$0xff]
        %v2884 = vld [vmem:[#allocation20 + $0x70] sm:$0xff]
        %v2885 = vld [vmem:[#allocation20 + $0x78] sm:$0xff]
        %v2886 = vld [vmem:[#allocation20 + $0x80] sm:$0xff]
        %v2887 = vld [vmem:[#allocation20 + $0x88] sm:$0xff]
        %v2888 = vld [vmem:[#allocation20 + $0x90] sm:$0xff]
        %v2889 = vld [vmem:[#allocation20 + $0x98] sm:$0xff]
        %v2890 = vld [vmem:[#allocation20 + $0xa0] sm:$0xff]
        %v2891 = vld [vmem:[#allocation20 + $0xa8] sm:$0xff]
        %v2892 = vld [vmem:[#allocation20 + $0xb0] sm:$0xff]
        %v2893 = vld [vmem:[#allocation20 + $0xb8] sm:$0xff]
        %v2894 = vld [vmem:[#allocation20 + $0xc0] sm:$0xff]
        %v2895 = vld [vmem:[#allocation20 + $0xc8] sm:$0xff]
        %v2896 = vld [vmem:[#allocation20 + $0xd0] sm:$0xff]
        %v2897 = vld [vmem:[#allocation20 + $0xd8] sm:$0xff]
        %v2898 = vld [vmem:[#allocation20 + $0xe0] sm:$0xff]
        %v2899 = vld [vmem:[#allocation20 + $0xe8] sm:$0xff]
        %v2900 = vld [vmem:[#allocation20 + $0xf0] sm:$0xff]
        %v2901 = vld [vmem:[#allocation20 + $0xf8] sm:$0xff]
        %v2902 = vld [vmem:[#allocation22] sm:$0xff]
        %v2903 = vld [vmem:[#allocation22 + $0x8] sm:$0xff]
        %v2904 = vld [vmem:[#allocation22 + $0x10] sm:$0xff]
        %v2905 = vld [vmem:[#allocation22 + $0x18] sm:$0xff]
        %v2906 = vld [vmem:[#allocation22 + $0x20] sm:$0xff]
        %v2907 = vld [vmem:[#allocation22 + $0x28] sm:$0xff]
        %v2908 = vld [vmem:[#allocation22 + $0x30] sm:$0xff]
        %v2909 = vld [vmem:[#allocation22 + $0x38] sm:$0xff]
        %v2910 = vld [vmem:[#allocation22 + $0x40] sm:$0xff]
        %v2911 = vld [vmem:[#allocation22 + $0x48] sm:$0xff]
        %v2912 = vld [vmem:[#allocation22 + $0x50] sm:$0xff]
        %v2913 = vld [vmem:[#allocation22 + $0x58] sm:$0xff]
        %v2914 = vld [vmem:[#allocation22 + $0x60] sm:$0xff]
        %v2915 = vld [vmem:[#allocation22 + $0x68] sm:$0xff]
        %v2916 = vld [vmem:[#allocation22 + $0x70] sm:$0xff]
        %v2917 = vld [vmem:[#allocation22 + $0x78] sm:$0xff]
        %v2918 = vld [vmem:[#allocation22 + $0x80] sm:$0xff]
        %v2919 = vld [vmem:[#allocation22 + $0x88] sm:$0xff]
        %v2920 = vld [vmem:[#allocation22 + $0x90] sm:$0xff]
        %v2921 = vld [vmem:[#allocation22 + $0x98] sm:$0xff]
        %v2922 = vld [vmem:[#allocation22 + $0xa0] sm:$0xff]
        %v2923 = vld [vmem:[#allocation22 + $0xa8] sm:$0xff]
        %v2924 = vld [vmem:[#allocation22 + $0xb0] sm:$0xff]
        %v2925 = vld [vmem:[#allocation22 + $0xb8] sm:$0xff]
        %v2926 = vld [vmem:[#allocation22 + $0xc0] sm:$0xff]
        %v2927 = vld [vmem:[#allocation22 + $0xc8] sm:$0xff]
        %v2928 = vld [vmem:[#allocation22 + $0xd0] sm:$0xff]
        %v2929 = vld [vmem:[#allocation22 + $0xd8] sm:$0xff]
        %v2930 = vld [vmem:[#allocation22 + $0xe0] sm:$0xff]
        %v2931 = vld [vmem:[#allocation22 + $0xe8] sm:$0xff]
        %v2932 = vld [vmem:[#allocation22 + $0xf0] sm:$0xff]
        %v2933 = vld [vmem:[#allocation22 + $0xf8] sm:$0xff]
        %v2934 = vld [vmem:[%s33] sm:$0x3]
        %v2935 = vld [vmem:[%s35] sm:$0x3]
        %v2936 = vld [vmem:[%s37] sm:$0x3]
        %v2937 = vld [vmem:[#allocation23] sm:$0xff]
        %v2938 = vld [vmem:[#allocation23 + $0x8] sm:$0xff]
        %v2939 = vld [vmem:[#allocation23 + $0x10] sm:$0xff]
        %v2940 = vld [vmem:[#allocation23 + $0x18] sm:$0xff]
        %v2941 = vld [vmem:[#allocation23 + $0x20] sm:$0xff]
        %v2942 = vld [vmem:[#allocation23 + $0x28] sm:$0xff]
        %v2943 = vld [vmem:[#allocation23 + $0x30] sm:$0xff]
        %v2944 = vld [vmem:[#allocation23 + $0x38] sm:$0xff]
        %v2945 = vld [vmem:[#allocation23 + $0x40] sm:$0xff]
        %v2946 = vld [vmem:[#allocation23 + $0x48] sm:$0xff]
        %v2947 = vld [vmem:[#allocation23 + $0x50] sm:$0xff]
        %v2948 = vld [vmem:[#allocation23 + $0x58] sm:$0xff]
        %v2949 = vld [vmem:[#allocation23 + $0x60] sm:$0xff]
        %v2950 = vld [vmem:[#allocation23 + $0x68] sm:$0xff]
        %v2951 = vld [vmem:[#allocation23 + $0x70] sm:$0xff]
        %v2952 = vld [vmem:[#allocation23 + $0x78] sm:$0xff]
        %v2953 = vld [vmem:[#allocation23 + $0x80] sm:$0xff]
        %v2954 = vld [vmem:[#allocation23 + $0x88] sm:$0xff]
        %v2955 = vld [vmem:[#allocation23 + $0x90] sm:$0xff]
        %v2956 = vld [vmem:[#allocation23 + $0x98] sm:$0xff]
        %v2957 = vld [vmem:[#allocation23 + $0xa0] sm:$0xff]
        %v2958 = vld [vmem:[#allocation23 + $0xa8] sm:$0xff]
        %v2959 = vld [vmem:[#allocation23 + $0xb0] sm:$0xff]
        %v2960 = vld [vmem:[#allocation23 + $0xb8] sm:$0xff]
        %v2961 = vld [vmem:[#allocation23 + $0xc0] sm:$0xff]
        %v2962 = vld [vmem:[#allocation23 + $0xc8] sm:$0xff]
        %v2963 = vld [vmem:[#allocation23 + $0xd0] sm:$0xff]
        %v2964 = vld [vmem:[#allocation23 + $0xd8] sm:$0xff]
        %v2965 = vld [vmem:[#allocation23 + $0xe0] sm:$0xff]
        %v2966 = vld [vmem:[#allocation23 + $0xe8] sm:$0xff]
        %v2967 = vld [vmem:[#allocation23 + $0xf0] sm:$0xff]
        %v2968 = vld [vmem:[#allocation23 + $0xf8] sm:$0xff]
        %v2969 = vld [vmem:[%s41] sm:$0x3]
        %v2971 = vperm.slane %v2934, 0
        %v2972 = vperm.slane %v2934, 1
        %v3007 = vunpack.c.l.b16 %v2838
        %v3008 = vunpack.c.h.b16 %v2838
        %v3009 = vunpack.c.l.b16 %v2839
        %v3010 = vunpack.c.h.b16 %v2839
        %v3011 = vunpack.c.l.b16 %v2840
        %v3012 = vunpack.c.h.b16 %v2840
        %v3013 = vunpack.c.l.b16 %v2841
        %v3014 = vunpack.c.h.b16 %v2841
        %v3015 = vunpack.c.l.b16 %v2842
        %v3016 = vunpack.c.h.b16 %v2842
        %v3017 = vunpack.c.l.b16 %v2843
        %v3018 = vunpack.c.h.b16 %v2843
        %v3019 = vunpack.c.l.b16 %v2844
        %v3020 = vunpack.c.h.b16 %v2844
        %v3021 = vunpack.c.l.b16 %v2845
        %v3022 = vunpack.c.h.b16 %v2845
        %v3023 = vunpack.c.l.b16 %v2846
        %v3024 = vunpack.c.h.b16 %v2846
        %v3025 = vunpack.c.l.b16 %v2847
        %v3026 = vunpack.c.h.b16 %v2847
        %v3027 = vunpack.c.l.b16 %v2848
        %v3028 = vunpack.c.h.b16 %v2848
        %v3029 = vunpack.c.l.b16 %v2849
        %v3030 = vunpack.c.h.b16 %v2849
        %v3031 = vunpack.c.l.b16 %v2850
        %v3032 = vunpack.c.h.b16 %v2850
        %v3033 = vunpack.c.l.b16 %v2851
        %v3034 = vunpack.c.h.b16 %v2851
        %v3035 = vunpack.c.l.b16 %v2852
        %v3036 = vunpack.c.h.b16 %v2852
        %v3037 = vunpack.c.l.b16 %v2853
        %v3038 = vunpack.c.h.b16 %v2853
        %v3039 = vunpack.c.l.b16 %v2854
        %v3040 = vunpack.c.h.b16 %v2854
        %v3041 = vunpack.c.l.b16 %v2855
        %v3042 = vunpack.c.h.b16 %v2855
        %v3043 = vunpack.c.l.b16 %v2856
        %v3044 = vunpack.c.h.b16 %v2856
        %v3045 = vunpack.c.l.b16 %v2857
        %v3046 = vunpack.c.h.b16 %v2857
        %v3047 = vunpack.c.l.b16 %v2858
        %v3048 = vunpack.c.h.b16 %v2858
        %v3049 = vunpack.c.l.b16 %v2859
        %v3050 = vunpack.c.h.b16 %v2859
        %v3051 = vunpack.c.l.b16 %v2860
        %v3052 = vunpack.c.h.b16 %v2860
        %v3053 = vunpack.c.l.b16 %v2861
        %v3054 = vunpack.c.h.b16 %v2861
        %v3055 = vunpack.c.l.b16 %v2862
        %v3056 = vunpack.c.h.b16 %v2862
        %v3057 = vunpack.c.l.b16 %v2863
        %v3058 = vunpack.c.h.b16 %v2863
        %v3059 = vunpack.c.l.b16 %v2864
        %v3060 = vunpack.c.h.b16 %v2864
        %v3061 = vunpack.c.l.b16 %v2865
        %v3062 = vunpack.c.h.b16 %v2865
        %v3063 = vunpack.c.l.b16 %v2866
        %v3064 = vunpack.c.h.b16 %v2866
        %v3065 = vunpack.c.l.b16 %v2867
        %v3066 = vunpack.c.h.b16 %v2867
        %v3067 = vunpack.c.l.b16 %v2868
        %v3068 = vunpack.c.h.b16 %v2868
        %v3069 = vunpack.c.l.b16 %v2869
        %v3070 = vunpack.c.h.b16 %v2869
        %v3071 = vpack.c.b16 %v3009, %v3007
        %v3072 = vpack.c.b16 %v3010, %v3008
        %v3073 = vpack.c.b16 %v3013, %v3011
        %v3074 = vpack.c.b16 %v3014, %v3012
        %v3075 = vpack.c.b16 %v3017, %v3015
        %v3076 = vpack.c.b16 %v3018, %v3016
        %v3077 = vpack.c.b16 %v3021, %v3019
        %v3078 = vpack.c.b16 %v3022, %v3020
        %v3079 = vpack.c.b16 %v3025, %v3023
        %v3080 = vpack.c.b16 %v3026, %v3024
        %v3081 = vpack.c.b16 %v3029, %v3027
        %v3082 = vpack.c.b16 %v3030, %v3028
        %v3083 = vpack.c.b16 %v3033, %v3031
        %v3084 = vpack.c.b16 %v3034, %v3032
        %v3085 = vpack.c.b16 %v3037, %v3035
        %v3086 = vpack.c.b16 %v3038, %v3036
        %v3087 = vpack.c.b16 %v3041, %v3039
        %v3088 = vpack.c.b16 %v3042, %v3040
        %v3089 = vpack.c.b16 %v3045, %v3043
        %v3090 = vpack.c.b16 %v3046, %v3044
        %v3091 = vpack.c.b16 %v3049, %v3047
        %v3092 = vpack.c.b16 %v3050, %v3048
        %v3093 = vpack.c.b16 %v3053, %v3051
        %v3094 = vpack.c.b16 %v3054, %v3052
        %v3095 = vpack.c.b16 %v3057, %v3055
        %v3096 = vpack.c.b16 %v3058, %v3056
        %v3097 = vpack.c.b16 %v3061, %v3059
        %v3098 = vpack.c.b16 %v3062, %v3060
        %v3099 = vpack.c.b16 %v3065, %v3063
        %v3100 = vpack.c.b16 %v3066, %v3064
        %v3101 = vpack.c.b16 %v3069, %v3067
        %v3102 = vpack.c.b16 %v3070, %v3068
        %3135 = vmatpush.bf16.msra.mxu0 %v3085
        %3136 = vmatpush.bf16.msra.mxu0 %v3083
        %3137 = vmatpush.bf16.msra.mxu0 %v3081
        %3138 = vmatpush.bf16.msra.mxu0 %v3079
        %3139 = vmatpush.bf16.msra.mxu0 %v3077
        %3140 = vmatpush.bf16.msra.mxu0 %v3075
        %3141 = vmatpush.bf16.msra.mxu0 %v3073
        %3142 = vmatpush.bf16.msra.mxu0 %v3071
        %3143 = vmatmul.bf16.gmra.mxu0 %v2836
        %v3144 = vpop.f32.mrf.mxu0
        %v3145 = vadd.f32 %v2971, %v3144
        %v3146 = vpop.f32.mrf.mxu0
        %3147 = vdwg.mxu0
        %3148 = vmatpush.bf16.msra.mxu0 %v3101
        %3149 = vmatpush.bf16.msra.mxu0 %v3099
        %3150 = vmatpush.bf16.msra.mxu0 %v3097
        %3151 = vmatpush.bf16.msra.mxu0 %v3095
        %3152 = vmatpush.bf16.msra.mxu0 %v3093
        %3153 = vmatpush.bf16.msra.mxu0 %v3091
        %3154 = vmatpush.bf16.msra.mxu0 %v3089
        %3155 = vmatpush.bf16.msra.mxu0 %v3087
        %3156 = vmatmul.bf16.gmra.mxu0 %v2837
        %v3157 = vpop.f32.mrf.mxu0
        %v3158 = vadd.f32 %v3145, %v3157
        %v3159 = vpop.f32.mrf.mxu0
        %3160 = vdwg.mxu0
        %3161 = vmatpush.bf16.msra.mxu0 %v3086
        %3162 = vmatpush.bf16.msra.mxu0 %v3084
        %3163 = vmatpush.bf16.msra.mxu0 %v3082
        %3164 = vmatpush.bf16.msra.mxu0 %v3080
        %3165 = vmatpush.bf16.msra.mxu0 %v3078
        %3166 = vmatpush.bf16.msra.mxu0 %v3076
        %3167 = vmatpush.bf16.msra.mxu0 %v3074
        %3168 = vmatpush.bf16.msra.mxu0 %v3072
        %3169 = vmatmul.bf16.gmra.mxu0 %v2836
        %v3170 = vpop.f32.mrf.mxu0
        %v3171 = vadd.f32 %v2972, %v3170
        %v3172 = vpop.f32.mrf.mxu0
        %3173 = vdwg.mxu0
        %3174 = vmatpush.bf16.msra.mxu0 %v3102
        %3175 = vmatpush.bf16.msra.mxu0 %v3100
        %3176 = vmatpush.bf16.msra.mxu0 %v3098
        %3177 = vmatpush.bf16.msra.mxu0 %v3096
        %3178 = vmatpush.bf16.msra.mxu0 %v3094
        %3179 = vmatpush.bf16.msra.mxu0 %v3092
        %3180 = vmatpush.bf16.msra.mxu0 %v3090
        %3181 = vmatpush.bf16.msra.mxu0 %v3088
        %3182 = vmatmul.bf16.gmra.mxu0 %v2837
        %v3183 = vpop.f32.mrf.mxu0
        %v3184 = vadd.f32 %v3171, %v3183
        %v3185 = vpop.f32.mrf.mxu0
        %3186 = vdwg.mxu0
        %v3188 = vperm.slane %v2935, 0
        %v3189 = vperm.slane %v2935, 1
        %v3194 = vunpack.c.l.b16 %v1307
        %v3195 = vunpack.c.h.b16 %v1307
        %v3196 = vunpack.c.l.b16 %v1308
        %v3197 = vunpack.c.h.b16 %v1308
        %v3198 = vpack.c.b16 %v3196, %v3194
        %v3199 = vpack.c.b16 %v3197, %v3195
        %v3234 = vunpack.c.l.b16 %v2870
        %v3235 = vunpack.c.h.b16 %v2870
        %v3236 = vunpack.c.l.b16 %v2871
        %v3237 = vunpack.c.h.b16 %v2871
        %v3238 = vunpack.c.l.b16 %v2872
        %v3239 = vunpack.c.h.b16 %v2872
        %v3240 = vunpack.c.l.b16 %v2873
        %v3241 = vunpack.c.h.b16 %v2873
        %v3242 = vunpack.c.l.b16 %v2874
        %v3243 = vunpack.c.h.b16 %v2874
        %v3244 = vunpack.c.l.b16 %v2875
        %v3245 = vunpack.c.h.b16 %v2875
        %v3246 = vunpack.c.l.b16 %v2876
        %v3247 = vunpack.c.h.b16 %v2876
        %v3248 = vunpack.c.l.b16 %v2877
        %v3249 = vunpack.c.h.b16 %v2877
        %v3250 = vunpack.c.l.b16 %v2878
        %v3251 = vunpack.c.h.b16 %v2878
        %v3252 = vunpack.c.l.b16 %v2879
        %v3253 = vunpack.c.h.b16 %v2879
        %v3254 = vunpack.c.l.b16 %v2880
        %v3255 = vunpack.c.h.b16 %v2880
        %v3256 = vunpack.c.l.b16 %v2881
        %v3257 = vunpack.c.h.b16 %v2881
        %v3258 = vunpack.c.l.b16 %v2882
        %v3259 = vunpack.c.h.b16 %v2882
        %v3260 = vunpack.c.l.b16 %v2883
        %v3261 = vunpack.c.h.b16 %v2883
        %v3262 = vunpack.c.l.b16 %v2884
        %v3263 = vunpack.c.h.b16 %v2884
        %v3264 = vunpack.c.l.b16 %v2885
        %v3265 = vunpack.c.h.b16 %v2885
        %v3266 = vunpack.c.l.b16 %v2886
        %v3267 = vunpack.c.h.b16 %v2886
        %v3268 = vunpack.c.l.b16 %v2887
        %v3269 = vunpack.c.h.b16 %v2887
        %v3270 = vunpack.c.l.b16 %v2888
        %v3271 = vunpack.c.h.b16 %v2888
        %v3272 = vunpack.c.l.b16 %v2889
        %v3273 = vunpack.c.h.b16 %v2889
        %v3274 = vunpack.c.l.b16 %v2890
        %v3275 = vunpack.c.h.b16 %v2890
        %v3276 = vunpack.c.l.b16 %v2891
        %v3277 = vunpack.c.h.b16 %v2891
        %v3278 = vunpack.c.l.b16 %v2892
        %v3279 = vunpack.c.h.b16 %v2892
        %v3280 = vunpack.c.l.b16 %v2893
        %v3281 = vunpack.c.h.b16 %v2893
        %v3282 = vunpack.c.l.b16 %v2894
        %v3283 = vunpack.c.h.b16 %v2894
        %v3284 = vunpack.c.l.b16 %v2895
        %v3285 = vunpack.c.h.b16 %v2895
        %v3286 = vunpack.c.l.b16 %v2896
        %v3287 = vunpack.c.h.b16 %v2896
        %v3288 = vunpack.c.l.b16 %v2897
        %v3289 = vunpack.c.h.b16 %v2897
        %v3290 = vunpack.c.l.b16 %v2898
        %v3291 = vunpack.c.h.b16 %v2898
        %v3292 = vunpack.c.l.b16 %v2899
        %v3293 = vunpack.c.h.b16 %v2899
        %v3294 = vunpack.c.l.b16 %v2900
        %v3295 = vunpack.c.h.b16 %v2900
        %v3296 = vunpack.c.l.b16 %v2901
        %v3297 = vunpack.c.h.b16 %v2901
        %v3298 = vpack.c.b16 %v3236, %v3234
        %v3299 = vpack.c.b16 %v3237, %v3235
        %v3300 = vpack.c.b16 %v3240, %v3238
        %v3301 = vpack.c.b16 %v3241, %v3239
        %v3302 = vpack.c.b16 %v3244, %v3242
        %v3303 = vpack.c.b16 %v3245, %v3243
        %v3304 = vpack.c.b16 %v3248, %v3246
        %v3305 = vpack.c.b16 %v3249, %v3247
        %v3306 = vpack.c.b16 %v3252, %v3250
        %v3307 = vpack.c.b16 %v3253, %v3251
        %v3308 = vpack.c.b16 %v3256, %v3254
        %v3309 = vpack.c.b16 %v3257, %v3255
        %v3310 = vpack.c.b16 %v3260, %v3258
        %v3311 = vpack.c.b16 %v3261, %v3259
        %v3312 = vpack.c.b16 %v3264, %v3262
        %v3313 = vpack.c.b16 %v3265, %v3263
        %v3314 = vpack.c.b16 %v3268, %v3266
        %v3315 = vpack.c.b16 %v3269, %v3267
        %v3316 = vpack.c.b16 %v3272, %v3270
        %v3317 = vpack.c.b16 %v3273, %v3271
        %v3318 = vpack.c.b16 %v3276, %v3274
        %v3319 = vpack.c.b16 %v3277, %v3275
        %v3320 = vpack.c.b16 %v3280, %v3278
        %v3321 = vpack.c.b16 %v3281, %v3279
        %v3322 = vpack.c.b16 %v3284, %v3282
        %v3323 = vpack.c.b16 %v3285, %v3283
        %v3324 = vpack.c.b16 %v3288, %v3286
        %v3325 = vpack.c.b16 %v3289, %v3287
        %v3326 = vpack.c.b16 %v3292, %v3290
        %v3327 = vpack.c.b16 %v3293, %v3291
        %v3328 = vpack.c.b16 %v3296, %v3294
        %v3329 = vpack.c.b16 %v3297, %v3295
        %3362 = vmatpush.bf16.msra.mxu0 %v3312
        %3363 = vmatpush.bf16.msra.mxu0 %v3310
        %3364 = vmatpush.bf16.msra.mxu0 %v3308
        %3365 = vmatpush.bf16.msra.mxu0 %v3306
        %3366 = vmatpush.bf16.msra.mxu0 %v3304
        %3367 = vmatpush.bf16.msra.mxu0 %v3302
        %3368 = vmatpush.bf16.msra.mxu0 %v3300
        %3369 = vmatpush.bf16.msra.mxu0 %v3298
        %3370 = vmatmul.bf16.gmra.mxu0 %v3198
        %v3371 = vpop.f32.mrf.mxu0
        %v3372 = vadd.f32 %v3188, %v3371
        %v3373 = vpop.f32.mrf.mxu0
        %v3374 = vadd.f32 %v3188, %v3373
        %3375 = vdwg.mxu0
        %3376 = vmatpush.bf16.msra.mxu0 %v3328
        %3377 = vmatpush.bf16.msra.mxu0 %v3326
        %3378 = vmatpush.bf16.msra.mxu0 %v3324
        %3379 = vmatpush.bf16.msra.mxu0 %v3322
        %3380 = vmatpush.bf16.msra.mxu0 %v3320
        %3381 = vmatpush.bf16.msra.mxu0 %v3318
        %3382 = vmatpush.bf16.msra.mxu0 %v3316
        %3383 = vmatpush.bf16.msra.mxu0 %v3314
        %3384 = vmatmul.bf16.gmra.mxu0 %v3199
        %v3385 = vpop.f32.mrf.mxu0
        %v3386 = vadd.f32 %v3372, %v3385
        %v3387 = vpop.f32.mrf.mxu0
        %v3388 = vadd.f32 %v3374, %v3387
        %3389 = vdwg.mxu0
        %3390 = vmatpush.bf16.msra.mxu0 %v3313
        %3391 = vmatpush.bf16.msra.mxu0 %v3311
        %3392 = vmatpush.bf16.msra.mxu0 %v3309
        %3393 = vmatpush.bf16.msra.mxu0 %v3307
        %3394 = vmatpush.bf16.msra.mxu0 %v3305
        %3395 = vmatpush.bf16.msra.mxu0 %v3303
        %3396 = vmatpush.bf16.msra.mxu0 %v3301
        %3397 = vmatpush.bf16.msra.mxu0 %v3299
        %3398 = vmatmul.bf16.gmra.mxu0 %v3198
        %v3399 = vpop.f32.mrf.mxu0
        %v3400 = vadd.f32 %v3189, %v3399
        %v3401 = vpop.f32.mrf.mxu0
        %v3402 = vadd.f32 %v3189, %v3401
        %3403 = vdwg.mxu0
        %3404 = vmatpush.bf16.msra.mxu0 %v3329
        %3405 = vmatpush.bf16.msra.mxu0 %v3327
        %3406 = vmatpush.bf16.msra.mxu0 %v3325
        %3407 = vmatpush.bf16.msra.mxu0 %v3323
        %3408 = vmatpush.bf16.msra.mxu0 %v3321
        %3409 = vmatpush.bf16.msra.mxu0 %v3319
        %3410 = vmatpush.bf16.msra.mxu0 %v3317
        %3411 = vmatpush.bf16.msra.mxu0 %v3315
        %3412 = vmatmul.bf16.gmra.mxu0 %v3199
        %v3413 = vpop.f32.mrf.mxu0
        %v3414 = vadd.f32 %v3400, %v3413
        %v3415 = vpop.f32.mrf.mxu0
        %v3416 = vadd.f32 %v3402, %v3415
        %3417 = vdwg.mxu0
        %v3419 = vperm.slane %v2936, 0
        %v3420 = vperm.slane %v2936, 1
        %v3455 = vunpack.c.l.b16 %v2902
        %v3456 = vunpack.c.h.b16 %v2902
        %v3457 = vunpack.c.l.b16 %v2903
        %v3458 = vunpack.c.h.b16 %v2903
        %v3459 = vunpack.c.l.b16 %v2904
        %v3460 = vunpack.c.h.b16 %v2904
        %v3461 = vunpack.c.l.b16 %v2905
        %v3462 = vunpack.c.h.b16 %v2905
        %v3463 = vunpack.c.l.b16 %v2906
        %v3464 = vunpack.c.h.b16 %v2906
        %v3465 = vunpack.c.l.b16 %v2907
        %v3466 = vunpack.c.h.b16 %v2907
        %v3467 = vunpack.c.l.b16 %v2908
        %v3468 = vunpack.c.h.b16 %v2908
        %v3469 = vunpack.c.l.b16 %v2909
        %v3470 = vunpack.c.h.b16 %v2909
        %v3471 = vunpack.c.l.b16 %v2910
        %v3472 = vunpack.c.h.b16 %v2910
        %v3473 = vunpack.c.l.b16 %v2911
        %v3474 = vunpack.c.h.b16 %v2911
        %v3475 = vunpack.c.l.b16 %v2912
        %v3476 = vunpack.c.h.b16 %v2912
        %v3477 = vunpack.c.l.b16 %v2913
        %v3478 = vunpack.c.h.b16 %v2913
        %v3479 = vunpack.c.l.b16 %v2914
        %v3480 = vunpack.c.h.b16 %v2914
        %v3481 = vunpack.c.l.b16 %v2915
        %v3482 = vunpack.c.h.b16 %v2915
        %v3483 = vunpack.c.l.b16 %v2916
        %v3484 = vunpack.c.h.b16 %v2916
        %v3485 = vunpack.c.l.b16 %v2917
        %v3486 = vunpack.c.h.b16 %v2917
        %v3487 = vunpack.c.l.b16 %v2918
        %v3488 = vunpack.c.h.b16 %v2918
        %v3489 = vunpack.c.l.b16 %v2919
        %v3490 = vunpack.c.h.b16 %v2919
        %v3491 = vunpack.c.l.b16 %v2920
        %v3492 = vunpack.c.h.b16 %v2920
        %v3493 = vunpack.c.l.b16 %v2921
        %v3494 = vunpack.c.h.b16 %v2921
        %v3495 = vunpack.c.l.b16 %v2922
        %v3496 = vunpack.c.h.b16 %v2922
        %v3497 = vunpack.c.l.b16 %v2923
        %v3498 = vunpack.c.h.b16 %v2923
        %v3499 = vunpack.c.l.b16 %v2924
        %v3500 = vunpack.c.h.b16 %v2924
        %v3501 = vunpack.c.l.b16 %v2925
        %v3502 = vunpack.c.h.b16 %v2925
        %v3503 = vunpack.c.l.b16 %v2926
        %v3504 = vunpack.c.h.b16 %v2926
        %v3505 = vunpack.c.l.b16 %v2927
        %v3506 = vunpack.c.h.b16 %v2927
        %v3507 = vunpack.c.l.b16 %v2928
        %v3508 = vunpack.c.h.b16 %v2928
        %v3509 = vunpack.c.l.b16 %v2929
        %v3510 = vunpack.c.h.b16 %v2929
        %v3511 = vunpack.c.l.b16 %v2930
        %v3512 = vunpack.c.h.b16 %v2930
        %v3513 = vunpack.c.l.b16 %v2931
        %v3514 = vunpack.c.h.b16 %v2931
        %v3515 = vunpack.c.l.b16 %v2932
        %v3516 = vunpack.c.h.b16 %v2932
        %v3517 = vunpack.c.l.b16 %v2933
        %v3518 = vunpack.c.h.b16 %v2933
        %v3519 = vpack.c.b16 %v3457, %v3455
        %v3520 = vpack.c.b16 %v3458, %v3456
        %v3521 = vpack.c.b16 %v3461, %v3459
        %v3522 = vpack.c.b16 %v3462, %v3460
        %v3523 = vpack.c.b16 %v3465, %v3463
        %v3524 = vpack.c.b16 %v3466, %v3464
        %v3525 = vpack.c.b16 %v3469, %v3467
        %v3526 = vpack.c.b16 %v3470, %v3468
        %v3527 = vpack.c.b16 %v3473, %v3471
        %v3528 = vpack.c.b16 %v3474, %v3472
        %v3529 = vpack.c.b16 %v3477, %v3475
        %v3530 = vpack.c.b16 %v3478, %v3476
        %v3531 = vpack.c.b16 %v3481, %v3479
        %v3532 = vpack.c.b16 %v3482, %v3480
        %v3533 = vpack.c.b16 %v3485, %v3483
        %v3534 = vpack.c.b16 %v3486, %v3484
        %v3535 = vpack.c.b16 %v3489, %v3487
        %v3536 = vpack.c.b16 %v3490, %v3488
        %v3537 = vpack.c.b16 %v3493, %v3491
        %v3538 = vpack.c.b16 %v3494, %v3492
        %v3539 = vpack.c.b16 %v3497, %v3495
        %v3540 = vpack.c.b16 %v3498, %v3496
        %v3541 = vpack.c.b16 %v3501, %v3499
        %v3542 = vpack.c.b16 %v3502, %v3500
        %v3543 = vpack.c.b16 %v3505, %v3503
        %v3544 = vpack.c.b16 %v3506, %v3504
        %v3545 = vpack.c.b16 %v3509, %v3507
        %v3546 = vpack.c.b16 %v3510, %v3508
        %v3547 = vpack.c.b16 %v3513, %v3511
        %v3548 = vpack.c.b16 %v3514, %v3512
        %v3549 = vpack.c.b16 %v3517, %v3515
        %v3550 = vpack.c.b16 %v3518, %v3516
        %3583 = vmatpush.bf16.msra.mxu0 %v3533
        %3584 = vmatpush.bf16.msra.mxu0 %v3531
        %3585 = vmatpush.bf16.msra.mxu0 %v3529
        %3586 = vmatpush.bf16.msra.mxu0 %v3527
        %3587 = vmatpush.bf16.msra.mxu0 %v3525
        %3588 = vmatpush.bf16.msra.mxu0 %v3523
        %3589 = vmatpush.bf16.msra.mxu0 %v3521
        %3590 = vmatpush.bf16.msra.mxu0 %v3519
        %3591 = vmatmul.bf16.gmra.mxu0 %v3198
        %v3592 = vpop.f32.mrf.mxu0
        %v3593 = vadd.f32 %v3419, %v3592
        %v3594 = vpop.f32.mrf.mxu0
        %v3595 = vadd.f32 %v3419, %v3594
        %3596 = vdwg.mxu0
        %3597 = vmatpush.bf16.msra.mxu0 %v3549
        %3598 = vmatpush.bf16.msra.mxu0 %v3547
        %3599 = vmatpush.bf16.msra.mxu0 %v3545
        %3600 = vmatpush.bf16.msra.mxu0 %v3543
        %3601 = vmatpush.bf16.msra.mxu0 %v3541
        %3602 = vmatpush.bf16.msra.mxu0 %v3539
        %3603 = vmatpush.bf16.msra.mxu0 %v3537
        %3604 = vmatpush.bf16.msra.mxu0 %v3535
        %3605 = vmatmul.bf16.gmra.mxu0 %v3199
        %v3606 = vpop.f32.mrf.mxu0
        %v3607 = vadd.f32 %v3593, %v3606
        %v3608 = vpop.f32.mrf.mxu0
        %v3609 = vadd.f32 %v3595, %v3608
        %3610 = vdwg.mxu0
        %3611 = vmatpush.bf16.msra.mxu0 %v3534
        %3612 = vmatpush.bf16.msra.mxu0 %v3532
        %3613 = vmatpush.bf16.msra.mxu0 %v3530
        %3614 = vmatpush.bf16.msra.mxu0 %v3528
        %3615 = vmatpush.bf16.msra.mxu0 %v3526
        %3616 = vmatpush.bf16.msra.mxu0 %v3524
        %3617 = vmatpush.bf16.msra.mxu0 %v3522
        %3618 = vmatpush.bf16.msra.mxu0 %v3520
        %3619 = vmatmul.bf16.gmra.mxu0 %v3198
        %v3620 = vpop.f32.mrf.mxu0
        %v3621 = vadd.f32 %v3420, %v3620
        %v3622 = vpop.f32.mrf.mxu0
        %v3623 = vadd.f32 %v3420, %v3622
        %3624 = vdwg.mxu0
        %3625 = vmatpush.bf16.msra.mxu0 %v3550
        %3626 = vmatpush.bf16.msra.mxu0 %v3548
        %3627 = vmatpush.bf16.msra.mxu0 %v3546
        %3628 = vmatpush.bf16.msra.mxu0 %v3544
        %3629 = vmatpush.bf16.msra.mxu0 %v3542
        %3630 = vmatpush.bf16.msra.mxu0 %v3540
        %3631 = vmatpush.bf16.msra.mxu0 %v3538
        %3632 = vmatpush.bf16.msra.mxu0 %v3536
        %3633 = vmatmul.bf16.gmra.mxu0 %v3199
        %v3634 = vpop.f32.mrf.mxu0
        %v3635 = vadd.f32 %v3621, %v3634
        %v3636 = vpop.f32.mrf.mxu0
        %v3637 = vadd.f32 %v3623, %v3636
        %3638 = vdwg.mxu0
        %v3639 = vmul.f32 %v3158, 0.088388346
        %v3640 = vmul.f32 %v3184, 0.088388346
        %v3641 = vrot.slane %v3639, 4
        %v3642 = vsel %vm2111, 0.0, %v3641
        %v3644 = vunpack.c.l.s4 1983009808
        %v3645 = vunpack.c.0.s8 %v3644
        %v3646 = vperm.slane %v3639, %v3645
        %v3648 = vunpack.c.l.s4 1983009808
        %v3649 = vunpack.c.0.s8 %v3648
        %v3650 = vperm.slane %v3642, %v3649
        %v3651 = vrot.slane %v3640, 4
        %v3652 = vsel %vm2111, 0.0, %v3651
        %v3654 = vunpack.c.l.s4 1983009808
        %v3655 = vunpack.c.0.s8 %v3654
        %v3656 = vperm.slane %v3640, %v3655
        %v3658 = vunpack.c.l.s4 1983009808
        %v3659 = vunpack.c.0.s8 %v3658
        %v3660 = vperm.slane %v3652, %v3659
        %v3661 = vrot.slane %v3656, 4
        %v3662 = vsel %vm2111, %v3661, %v3646
        %v3663 = vrot.slane %v3646, 4
        %v3664 = vsel %vm2111, %v3656, %v3663
        %v3666 = vunpack.c.l.s4 1934713408
        %v3667 = vunpack.c.0.s8 %v3666
        %v3668 = vperm.slane %v3662, %v3667
        %v3670 = vunpack.c.l.s4 1934713408
        %v3671 = vunpack.c.0.s8 %v3670
        %v3672 = vperm.slane %v3664, %v3671
        %v3673 = vrot.slane %v3660, 4
        %v3674 = vsel %vm2111, %v3673, %v3650
        %v3675 = vrot.slane %v3650, 4
        %v3676 = vsel %vm2111, %v3660, %v3675
        %v3678 = vunpack.c.l.s4 1934713408
        %v3679 = vunpack.c.0.s8 %v3678
        %v3680 = vperm.slane %v3674, %v3679
        %v3682 = vunpack.c.l.s4 1934713408
        %v3683 = vunpack.c.0.s8 %v3682
        %v3684 = vperm.slane %v3676, %v3683
        %v3685 = vrot.slane %v3668, 4
        %v3686 = vsel %vm2111, 0.0, %v3685
        %v3687 = vrot.slane %v3672, 4
        %v3688 = vsel %vm2111, 0.0, %v3687
        %v3689 = vrot.slane %v3680, 4
        %v3690 = vsel %vm2111, 0.0, %v3689
        %v3691 = vrot.slane %v3684, 4
        %v3692 = vsel %vm2111, 0.0, %v3691
        %v3693 = vsel %vm2111, %v3687, %v3668
        %v3695 = vunpack.c.l.s4 1983009808
        %v3696 = vunpack.c.0.s8 %v3695
        %v3697 = vperm.slane %v3693, %v3696
        %v3698 = vrot.slane %v3688, 4
        %v3699 = vsel %vm2111, %v3698, %v3686
        %v3701 = vunpack.c.l.s4 1983009808
        %v3702 = vunpack.c.0.s8 %v3701
        %v3703 = vperm.slane %v3699, %v3702
        %v3704 = vsel %vm2111, %v3691, %v3680
        %v3706 = vunpack.c.l.s4 1983009808
        %v3707 = vunpack.c.0.s8 %v3706
        %v3708 = vperm.slane %v3704, %v3707
        %v3709 = vrot.slane %v3692, 4
        %v3710 = vsel %vm2111, %v3709, %v3690
        %v3712 = vunpack.c.l.s4 1983009808
        %v3713 = vunpack.c.0.s8 %v3712
        %v3714 = vperm.slane %v3710, %v3713
        %v3715 = vrot.slane %v3703, 4
        %v3716 = vsel %vm2111, %v3715, %v3697
        %v3718 = vunpack.c.l.s4 1934713408
        %v3719 = vunpack.c.0.s8 %v3718
        %v3720 = vperm.slane %v3716, %v3719
        %v3721 = vrot.slane %v3714, 4
        %v3722 = vsel %vm2111, %v3721, %v3708
        %v3724 = vunpack.c.l.s4 1934713408
        %v3725 = vunpack.c.0.s8 %v3724
        %v3726 = vperm.slane %v3722, %v3725
        %v3727 = vrot.slane %v3726, 4
        %v3728 = vsel %vm2111, %v3727, %v3720
        %v3729 = vrot.slane %v3720, 4
        %v3730 = vsel %vm2111, %v3726, %v3729
        %v3731 = vpack.c.bf16 %v3728, %v3728
        %v3732 = vpack.c.bf16 %v3730, %v3730
        %v3733 = vrot.slane %v3386, 4
        %v3734 = vsel %vm2111, 0.0, %v3733
        %v3736 = vunpack.c.l.s4 1983009808
        %v3737 = vunpack.c.0.s8 %v3736
        %v3738 = vperm.slane %v3386, %v3737
        %v3740 = vunpack.c.l.s4 1983009808
        %v3741 = vunpack.c.0.s8 %v3740
        %v3742 = vperm.slane %v3734, %v3741
        %v3743 = vrot.slane %v3414, 4
        %v3744 = vsel %vm2111, 0.0, %v3743
        %v3746 = vunpack.c.l.s4 1983009808
        %v3747 = vunpack.c.0.s8 %v3746
        %v3748 = vperm.slane %v3414, %v3747
        %v3750 = vunpack.c.l.s4 1983009808
        %v3751 = vunpack.c.0.s8 %v3750
        %v3752 = vperm.slane %v3744, %v3751
        %v3753 = vrot.slane %v3748, 4
        %v3754 = vsel %vm2111, %v3753, %v3738
        %v3755 = vrot.slane %v3738, 4
        %v3756 = vsel %vm2111, %v3748, %v3755
        %v3758 = vunpack.c.l.s4 1934713408
        %v3759 = vunpack.c.0.s8 %v3758
        %v3760 = vperm.slane %v3754, %v3759
        %v3762 = vunpack.c.l.s4 1934713408
        %v3763 = vunpack.c.0.s8 %v3762
        %v3764 = vperm.slane %v3756, %v3763
        %v3765 = vrot.slane %v3752, 4
        %v3766 = vsel %vm2111, %v3765, %v3742
        %v3767 = vrot.slane %v3742, 4
        %v3768 = vsel %vm2111, %v3752, %v3767
        %v3770 = vunpack.c.l.s4 1934713408
        %v3771 = vunpack.c.0.s8 %v3770
        %v3772 = vperm.slane %v3766, %v3771
        %v3774 = vunpack.c.l.s4 1934713408
        %v3775 = vunpack.c.0.s8 %v3774
        %v3776 = vperm.slane %v3768, %v3775
        %v3777 = vrot.slane %v3760, 4
        %v3778 = vsel %vm2111, 0.0, %v3777
        %v3779 = vrot.slane %v3764, 4
        %v3780 = vsel %vm2111, 0.0, %v3779
        %v3781 = vrot.slane %v3772, 4
        %v3782 = vsel %vm2111, 0.0, %v3781
        %v3783 = vrot.slane %v3776, 4
        %v3784 = vsel %vm2111, 0.0, %v3783
        %v3785 = vrot.slane %v3388, 4
        %v3786 = vsel %vm2111, 0.0, %v3785
        %v3788 = vunpack.c.l.s4 1983009808
        %v3789 = vunpack.c.0.s8 %v3788
        %v3790 = vperm.slane %v3388, %v3789
        %v3792 = vunpack.c.l.s4 1983009808
        %v3793 = vunpack.c.0.s8 %v3792
        %v3794 = vperm.slane %v3786, %v3793
        %v3795 = vrot.slane %v3416, 4
        %v3796 = vsel %vm2111, 0.0, %v3795
        %v3798 = vunpack.c.l.s4 1983009808
        %v3799 = vunpack.c.0.s8 %v3798
        %v3800 = vperm.slane %v3416, %v3799
        %v3802 = vunpack.c.l.s4 1983009808
        %v3803 = vunpack.c.0.s8 %v3802
        %v3804 = vperm.slane %v3796, %v3803
        %v3805 = vrot.slane %v3800, 4
        %v3806 = vsel %vm2111, %v3805, %v3790
        %v3807 = vrot.slane %v3790, 4
        %v3808 = vsel %vm2111, %v3800, %v3807
        %v3810 = vunpack.c.l.s4 1934713408
        %v3811 = vunpack.c.0.s8 %v3810
        %v3812 = vperm.slane %v3806, %v3811
        %v3814 = vunpack.c.l.s4 1934713408
        %v3815 = vunpack.c.0.s8 %v3814
        %v3816 = vperm.slane %v3808, %v3815
        %v3817 = vrot.slane %v3804, 4
        %v3818 = vsel %vm2111, %v3817, %v3794
        %v3819 = vrot.slane %v3794, 4
        %v3820 = vsel %vm2111, %v3804, %v3819
        %v3822 = vunpack.c.l.s4 1934713408
        %v3823 = vunpack.c.0.s8 %v3822
        %v3824 = vperm.slane %v3818, %v3823
        %v3826 = vunpack.c.l.s4 1934713408
        %v3827 = vunpack.c.0.s8 %v3826
        %v3828 = vperm.slane %v3820, %v3827
        %v3829 = vrot.slane %v3812, 4
        %v3830 = vsel %vm2111, 0.0, %v3829
        %v3831 = vrot.slane %v3816, 4
        %v3832 = vsel %vm2111, 0.0, %v3831
        %v3833 = vrot.slane %v3824, 4
        %v3834 = vsel %vm2111, 0.0, %v3833
        %v3835 = vrot.slane %v3828, 4
        %v3836 = vsel %vm2111, 0.0, %v3835
        %v3837 = vsel %vm2111, %v3779, %v3760
        %v3839 = vunpack.c.l.s4 1983009808
        %v3840 = vunpack.c.0.s8 %v3839
        %v3841 = vperm.slane %v3837, %v3840
        %v3842 = vrot.slane %v3780, 4
        %v3843 = vsel %vm2111, %v3842, %v3778
        %v3845 = vunpack.c.l.s4 1983009808
        %v3846 = vunpack.c.0.s8 %v3845
        %v3847 = vperm.slane %v3843, %v3846
        %v3848 = vsel %vm2111, %v3783, %v3772
        %v3850 = vunpack.c.l.s4 1983009808
        %v3851 = vunpack.c.0.s8 %v3850
        %v3852 = vperm.slane %v3848, %v3851
        %v3853 = vrot.slane %v3784, 4
        %v3854 = vsel %vm2111, %v3853, %v3782
        %v3856 = vunpack.c.l.s4 1983009808
        %v3857 = vunpack.c.0.s8 %v3856
        %v3858 = vperm.slane %v3854, %v3857
        %v3859 = vrot.slane %v3847, 4
        %v3860 = vsel %vm2111, %v3859, %v3841
        %v3862 = vunpack.c.l.s4 1934713408
        %v3863 = vunpack.c.0.s8 %v3862
        %v3864 = vperm.slane %v3860, %v3863
        %v3865 = vrot.slane %v3858, 4
        %v3866 = vsel %vm2111, %v3865, %v3852
        %v3868 = vunpack.c.l.s4 1934713408
        %v3869 = vunpack.c.0.s8 %v3868
        %v3870 = vperm.slane %v3866, %v3869
        %v3871 = vrot.slane %v3870, 4
        %v3872 = vsel %vm2111, %v3871, %v3864
        %v3873 = vrot.slane %v3864, 4
        %v3874 = vsel %vm2111, %v3870, %v3873
        %v3875 = vsel %vm2111, %v3831, %v3812
        %v3877 = vunpack.c.l.s4 1983009808
        %v3878 = vunpack.c.0.s8 %v3877
        %v3879 = vperm.slane %v3875, %v3878
        %v3880 = vrot.slane %v3832, 4
        %v3881 = vsel %vm2111, %v3880, %v3830
        %v3883 = vunpack.c.l.s4 1983009808
        %v3884 = vunpack.c.0.s8 %v3883
        %v3885 = vperm.slane %v3881, %v3884
        %v3886 = vsel %vm2111, %v3835, %v3824
        %v3888 = vunpack.c.l.s4 1983009808
        %v3889 = vunpack.c.0.s8 %v3888
        %v3890 = vperm.slane %v3886, %v3889
        %v3891 = vrot.slane %v3836, 4
        %v3892 = vsel %vm2111, %v3891, %v3834
        %v3894 = vunpack.c.l.s4 1983009808
        %v3895 = vunpack.c.0.s8 %v3894
        %v3896 = vperm.slane %v3892, %v3895
        %v3897 = vrot.slane %v3885, 4
        %v3898 = vsel %vm2111, %v3897, %v3879
        %v3900 = vunpack.c.l.s4 1934713408
        %v3901 = vunpack.c.0.s8 %v3900
        %v3902 = vperm.slane %v3898, %v3901
        %v3903 = vrot.slane %v3896, 4
        %v3904 = vsel %vm2111, %v3903, %v3890
        %v3906 = vunpack.c.l.s4 1934713408
        %v3907 = vunpack.c.0.s8 %v3906
        %v3908 = vperm.slane %v3904, %v3907
        %v3909 = vrot.slane %v3908, 4
        %v3910 = vsel %vm2111, %v3909, %v3902
        %v3911 = vrot.slane %v3902, 4
        %v3912 = vsel %vm2111, %v3908, %v3911
        %v3913 = vpack.c.bf16 %v3872, %v3872
        %v3914 = vpack.c.bf16 %v3910, %v3910
        %v3915 = vpack.c.bf16 %v3874, %v3874
        %v3916 = vpack.c.bf16 %v3912, %v3912
        %v3917 = vrot.slane %v3607, 4
        %v3918 = vsel %vm2111, 0.0, %v3917
        %v3920 = vunpack.c.l.s4 1983009808
        %v3921 = vunpack.c.0.s8 %v3920
        %v3922 = vperm.slane %v3607, %v3921
        %v3924 = vunpack.c.l.s4 1983009808
        %v3925 = vunpack.c.0.s8 %v3924
        %v3926 = vperm.slane %v3918, %v3925
        %v3927 = vrot.slane %v3635, 4
        %v3928 = vsel %vm2111, 0.0, %v3927
        %v3930 = vunpack.c.l.s4 1983009808
        %v3931 = vunpack.c.0.s8 %v3930
        %v3932 = vperm.slane %v3635, %v3931
        %v3934 = vunpack.c.l.s4 1983009808
        %v3935 = vunpack.c.0.s8 %v3934
        %v3936 = vperm.slane %v3928, %v3935
        %v3937 = vrot.slane %v3932, 4
        %v3938 = vsel %vm2111, %v3937, %v3922
        %v3939 = vrot.slane %v3922, 4
        %v3940 = vsel %vm2111, %v3932, %v3939
        %v3942 = vunpack.c.l.s4 1934713408
        %v3943 = vunpack.c.0.s8 %v3942
        %v3944 = vperm.slane %v3938, %v3943
        %v3946 = vunpack.c.l.s4 1934713408
        %v3947 = vunpack.c.0.s8 %v3946
        %v3948 = vperm.slane %v3940, %v3947
        %v3949 = vrot.slane %v3936, 4
        %v3950 = vsel %vm2111, %v3949, %v3926
        %v3951 = vrot.slane %v3926, 4
        %v3952 = vsel %vm2111, %v3936, %v3951
        %v3954 = vunpack.c.l.s4 1934713408
        %v3955 = vunpack.c.0.s8 %v3954
        %v3956 = vperm.slane %v3950, %v3955
        %v3958 = vunpack.c.l.s4 1934713408
        %v3959 = vunpack.c.0.s8 %v3958
        %v3960 = vperm.slane %v3952, %v3959
        %v3961 = vrot.slane %v3944, 4
        %v3962 = vsel %vm2111, 0.0, %v3961
        %v3963 = vrot.slane %v3948, 4
        %v3964 = vsel %vm2111, 0.0, %v3963
        %v3965 = vrot.slane %v3956, 4
        %v3966 = vsel %vm2111, 0.0, %v3965
        %v3967 = vrot.slane %v3960, 4
        %v3968 = vsel %vm2111, 0.0, %v3967
        %v3969 = vrot.slane %v3609, 4
        %v3970 = vsel %vm2111, 0.0, %v3969
        %v3972 = vunpack.c.l.s4 1983009808
        %v3973 = vunpack.c.0.s8 %v3972
        %v3974 = vperm.slane %v3609, %v3973
        %v3976 = vunpack.c.l.s4 1983009808
        %v3977 = vunpack.c.0.s8 %v3976
        %v3978 = vperm.slane %v3970, %v3977
        %v3979 = vrot.slane %v3637, 4
        %v3980 = vsel %vm2111, 0.0, %v3979
        %v3982 = vunpack.c.l.s4 1983009808
        %v3983 = vunpack.c.0.s8 %v3982
        %v3984 = vperm.slane %v3637, %v3983
        %v3986 = vunpack.c.l.s4 1983009808
        %v3987 = vunpack.c.0.s8 %v3986
        %v3988 = vperm.slane %v3980, %v3987
        %v3989 = vrot.slane %v3984, 4
        %v3990 = vsel %vm2111, %v3989, %v3974
        %v3991 = vrot.slane %v3974, 4
        %v3992 = vsel %vm2111, %v3984, %v3991
        %v3994 = vunpack.c.l.s4 1934713408
        %v3995 = vunpack.c.0.s8 %v3994
        %v3996 = vperm.slane %v3990, %v3995
        %v3998 = vunpack.c.l.s4 1934713408
        %v3999 = vunpack.c.0.s8 %v3998
        %v4000 = vperm.slane %v3992, %v3999
        %v4001 = vrot.slane %v3988, 4
        %v4002 = vsel %vm2111, %v4001, %v3978
        %v4003 = vrot.slane %v3978, 4
        %v4004 = vsel %vm2111, %v3988, %v4003
        %v4006 = vunpack.c.l.s4 1934713408
        %v4007 = vunpack.c.0.s8 %v4006
        %v4008 = vperm.slane %v4002, %v4007
        %v4010 = vunpack.c.l.s4 1934713408
        %v4011 = vunpack.c.0.s8 %v4010
        %v4012 = vperm.slane %v4004, %v4011
        %v4013 = vrot.slane %v3996, 4
        %v4014 = vsel %vm2111, 0.0, %v4013
        %v4015 = vrot.slane %v4000, 4
        %v4016 = vsel %vm2111, 0.0, %v4015
        %v4017 = vrot.slane %v4008, 4
        %v4018 = vsel %vm2111, 0.0, %v4017
        %v4019 = vrot.slane %v4012, 4
        %v4020 = vsel %vm2111, 0.0, %v4019
        %v4021 = vsel %vm2111, %v3963, %v3944
        %v4023 = vunpack.c.l.s4 1983009808
        %v4024 = vunpack.c.0.s8 %v4023
        %v4025 = vperm.slane %v4021, %v4024
        %v4026 = vrot.slane %v3964, 4
        %v4027 = vsel %vm2111, %v4026, %v3962
        %v4029 = vunpack.c.l.s4 1983009808
        %v4030 = vunpack.c.0.s8 %v4029
        %v4031 = vperm.slane %v4027, %v4030
        %v4032 = vsel %vm2111, %v3967, %v3956
        %v4034 = vunpack.c.l.s4 1983009808
        %v4035 = vunpack.c.0.s8 %v4034
        %v4036 = vperm.slane %v4032, %v4035
        %v4037 = vrot.slane %v3968, 4
        %v4038 = vsel %vm2111, %v4037, %v3966
        %v4040 = vunpack.c.l.s4 1983009808
        %v4041 = vunpack.c.0.s8 %v4040
        %v4042 = vperm.slane %v4038, %v4041
        %v4043 = vrot.slane %v4031, 4
        %v4044 = vsel %vm2111, %v4043, %v4025
        %v4046 = vunpack.c.l.s4 1934713408
        %v4047 = vunpack.c.0.s8 %v4046
        %v4048 = vperm.slane %v4044, %v4047
        %v4049 = vrot.slane %v4042, 4
        %v4050 = vsel %vm2111, %v4049, %v4036
        %v4052 = vunpack.c.l.s4 1934713408
        %v4053 = vunpack.c.0.s8 %v4052
        %v4054 = vperm.slane %v4050, %v4053
        %v4055 = vrot.slane %v4054, 4
        %v4056 = vsel %vm2111, %v4055, %v4048
        %v4057 = vrot.slane %v4048, 4
        %v4058 = vsel %vm2111, %v4054, %v4057
        %v4059 = vsel %vm2111, %v4015, %v3996
        %v4061 = vunpack.c.l.s4 1983009808
        %v4062 = vunpack.c.0.s8 %v4061
        %v4063 = vperm.slane %v4059, %v4062
        %v4064 = vrot.slane %v4016, 4
        %v4065 = vsel %vm2111, %v4064, %v4014
        %v4067 = vunpack.c.l.s4 1983009808
        %v4068 = vunpack.c.0.s8 %v4067
        %v4069 = vperm.slane %v4065, %v4068
        %v4070 = vsel %vm2111, %v4019, %v4008
        %v4072 = vunpack.c.l.s4 1983009808
        %v4073 = vunpack.c.0.s8 %v4072
        %v4074 = vperm.slane %v4070, %v4073
        %v4075 = vrot.slane %v4020, 4
        %v4076 = vsel %vm2111, %v4075, %v4018
        %v4078 = vunpack.c.l.s4 1983009808
        %v4079 = vunpack.c.0.s8 %v4078
        %v4080 = vperm.slane %v4076, %v4079
        %v4081 = vrot.slane %v4069, 4
        %v4082 = vsel %vm2111, %v4081, %v4063
        %v4084 = vunpack.c.l.s4 1934713408
        %v4085 = vunpack.c.0.s8 %v4084
        %v4086 = vperm.slane %v4082, %v4085
        %v4087 = vrot.slane %v4080, 4
        %v4088 = vsel %vm2111, %v4087, %v4074
        %v4090 = vunpack.c.l.s4 1934713408
        %v4091 = vunpack.c.0.s8 %v4090
        %v4092 = vperm.slane %v4088, %v4091
        %v4093 = vrot.slane %v4092, 4
        %v4094 = vsel %vm2111, %v4093, %v4086
        %v4095 = vrot.slane %v4086, 4
        %v4096 = vsel %vm2111, %v4092, %v4095
        %v4097 = vpack.c.bf16 %v4056, %v4056
        %v4098 = vpack.c.bf16 %v4094, %v4094
        %v4099 = vpack.c.bf16 %v4058, %v4058
        %v4100 = vpack.c.bf16 %v4096, %v4096
        %v4102 = vperm.slane %v1317, 0
        %v4106 = vunpack.c.l.b16 %v3913
        %v4107 = vunpack.c.l.b16 %v3914
        %v4108 = vpack.c.b16 %v4107, %v4106
        %4110 = vmatpush.bf16.xpose.msra.mxu0 0
        %4111 = vmatpush.bf16.xpose.msra.mxu0 0
        %4112 = vmatpush.bf16.xpose.msra.mxu0 0
        %4113 = vmatpush.bf16.xpose.msra.mxu0 0
        %4114 = vmatpush.bf16.xpose.msra.mxu0 0
        %4115 = vmatpush.bf16.xpose.msra.mxu0 0
        %4116 = vmatpush.bf16.xpose.msra.mxu0 0
        %4117 = vmatpush.bf16.xpose.msra.mxu0 %v4108
        %4118 = vmatmul.bf16.gmra.mxu0 %v3731
        %v4119 = vpop.f32.mrf.mxu0
        %v4120 = vadd.f32 %v4102, %v4119
        %v4121 = vpop.f32.mrf.mxu0
        %4122 = vdwg.mxu0
        %v4125 = vunpack.c.l.b16 %v3915
        %v4126 = vunpack.c.l.b16 %v3916
        %v4127 = vpack.c.b16 %v4126, %v4125
        %4129 = vmatpush.bf16.xpose.msra.mxu0 0
        %4130 = vmatpush.bf16.xpose.msra.mxu0 0
        %4131 = vmatpush.bf16.xpose.msra.mxu0 0
        %4132 = vmatpush.bf16.xpose.msra.mxu0 0
        %4133 = vmatpush.bf16.xpose.msra.mxu0 0
        %4134 = vmatpush.bf16.xpose.msra.mxu0 0
        %4135 = vmatpush.bf16.xpose.msra.mxu0 0
        %4136 = vmatpush.bf16.xpose.msra.mxu0 %v4127
        %4137 = vmatmul.bf16.gmra.mxu0 %v3732
        %v4138 = vpop.f32.mrf.mxu0
        %v4139 = vadd.f32 %v4102, %v4138
        %v4140 = vpop.f32.mrf.mxu0
        %4141 = vdwg.mxu0
        %vm4142 = vcmask 130048
        %v4143 = vsel %vm4142, %v4120, -inf
        %4144 = vmax.xlane.f32.xlu0 %v4143
        %v4145 = vpop.xlane.xlu0 %4144
        %v4146 = vsel %vm4142, %v4139, -inf
        %4147 = vmax.xlane.f32.xlu0 %v4146
        %v4148 = vpop.xlane.xlu0 %4147
        %v4149 = vsub.f32 %v4120, %v4145
        %v4150 = vsub.f32 %v4139, %v4148
        %v4151 = vmul.f32 %v4149, 1.442695
        %v4152 = vpow.pop %v4151
        %v4153 = vmul.f32 %v4150, 1.442695
        %v4154 = vpow.pop %v4153
        %v4155 = vsel %vm4142, %v4152, 0.0
        %4156 = vadd.xlane.f32.xlu0 %v4155
        %v4157 = vpop.xlane.xlu0 %4156
        %v4158 = vsel %vm4142, %v4154, 0.0
        %4159 = vadd.xlane.f32.xlu0 %v4158
        %v4160 = vpop.xlane.xlu0 %4159
        %v4161 = vrcp.pop %v4157
        %v4162 = vrcp.pop %v4160
        %v4163 = vmul.f32 %v4152, %v4161
        %v4164 = vmul.f32 %v4154, %v4162
        %v4165 = vpack.c.bf16 %v4163, %v4163
        %v4166 = vpack.c.bf16 %v4164, %v4164
        %v4169 = vunpack.c.l.b16 %v4097
        %v4170 = vunpack.c.l.b16 %v4098
        %v4171 = vpack.c.b16 %v4170, %v4169
        %v4174 = vsel %vm4142, %v4165, 0
        %4176 = vmatpush.bf16.msra.mxu0 0
        %4177 = vmatpush.bf16.msra.mxu0 0
        %4178 = vmatpush.bf16.msra.mxu0 0
        %4179 = vmatpush.bf16.msra.mxu0 0
        %4180 = vmatpush.bf16.msra.mxu0 0
        %4181 = vmatpush.bf16.msra.mxu0 0
        %4182 = vmatpush.bf16.msra.mxu0 0
        %4183 = vmatpush.bf16.msra.mxu0 %v4171
        %4184 = vmatmul.bf16.gmra.mxu0 %v4174
        %v4185 = vpop.f32.mrf.mxu0
        %v4186 = vadd.f32 0.0, %v4185
        %v4187 = vpop.f32.mrf.mxu0
        %4188 = vdwg.mxu0
        %v4191 = vunpack.c.l.b16 %v4099
        %v4192 = vunpack.c.l.b16 %v4100
        %v4193 = vpack.c.b16 %v4192, %v4191
        %v4196 = vsel %vm4142, %v4166, 0
        %4198 = vmatpush.bf16.msra.mxu0 0
        %4199 = vmatpush.bf16.msra.mxu0 0
        %4200 = vmatpush.bf16.msra.mxu0 0
        %4201 = vmatpush.bf16.msra.mxu0 0
        %4202 = vmatpush.bf16.msra.mxu0 0
        %4203 = vmatpush.bf16.msra.mxu0 0
        %4204 = vmatpush.bf16.msra.mxu0 0
        %4205 = vmatpush.bf16.msra.mxu0 %v4193
        %4206 = vmatmul.bf16.gmra.mxu0 %v4196
        %v4207 = vpop.f32.mrf.mxu0
        %v4208 = vadd.f32 0.0, %v4207
        %v4209 = vpop.f32.mrf.mxu0
        %4210 = vdwg.mxu0
        %v4211 = vrot.slane %v4186, 4
        %v4212 = vsel %vm2111, 0.0, %v4211
        %v4214 = vunpack.c.l.s4 1983009808
        %v4215 = vunpack.c.0.s8 %v4214
        %v4216 = vperm.slane %v4186, %v4215
        %v4218 = vunpack.c.l.s4 1983009808
        %v4219 = vunpack.c.0.s8 %v4218
        %v4220 = vperm.slane %v4212, %v4219
        %v4221 = vrot.slane %v4208, 4
        %v4222 = vsel %vm2111, 0.0, %v4221
        %v4224 = vunpack.c.l.s4 1983009808
        %v4225 = vunpack.c.0.s8 %v4224
        %v4226 = vperm.slane %v4208, %v4225
        %v4228 = vunpack.c.l.s4 1983009808
        %v4229 = vunpack.c.0.s8 %v4228
        %v4230 = vperm.slane %v4222, %v4229
        %v4231 = vrot.slane %v4226, 4
        %v4232 = vsel %vm2111, %v4231, %v4216
        %v4233 = vrot.slane %v4216, 4
        %v4234 = vsel %vm2111, %v4226, %v4233
        %v4236 = vunpack.c.l.s4 1934713408
        %v4237 = vunpack.c.0.s8 %v4236
        %v4238 = vperm.slane %v4232, %v4237
        %v4240 = vunpack.c.l.s4 1934713408
        %v4241 = vunpack.c.0.s8 %v4240
        %v4242 = vperm.slane %v4234, %v4241
        %v4243 = vrot.slane %v4230, 4
        %v4244 = vsel %vm2111, %v4243, %v4220
        %v4245 = vrot.slane %v4220, 4
        %v4246 = vsel %vm2111, %v4230, %v4245
        %v4248 = vunpack.c.l.s4 1934713408
        %v4249 = vunpack.c.0.s8 %v4248
        %v4250 = vperm.slane %v4244, %v4249
        %v4252 = vunpack.c.l.s4 1934713408
        %v4253 = vunpack.c.0.s8 %v4252
        %v4254 = vperm.slane %v4246, %v4253
        %v4255 = vrot.slane %v4238, 4
        %v4256 = vsel %vm2111, 0.0, %v4255
        %v4257 = vrot.slane %v4242, 4
        %v4258 = vsel %vm2111, 0.0, %v4257
        %v4259 = vrot.slane %v4250, 4
        %v4260 = vsel %vm2111, 0.0, %v4259
        %v4261 = vrot.slane %v4254, 4
        %v4262 = vsel %vm2111, 0.0, %v4261
        %v4263 = vsel %vm2111, %v4257, %v4238
        %v4265 = vunpack.c.l.s4 1983009808
        %v4266 = vunpack.c.0.s8 %v4265
        %v4267 = vperm.slane %v4263, %v4266
        %v4268 = vrot.slane %v4258, 4
        %v4269 = vsel %vm2111, %v4268, %v4256
        %v4271 = vunpack.c.l.s4 1983009808
        %v4272 = vunpack.c.0.s8 %v4271
        %v4273 = vperm.slane %v4269, %v4272
        %v4274 = vsel %vm2111, %v4261, %v4250
        %v4276 = vunpack.c.l.s4 1983009808
        %v4277 = vunpack.c.0.s8 %v4276
        %v4278 = vperm.slane %v4274, %v4277
        %v4279 = vrot.slane %v4262, 4
        %v4280 = vsel %vm2111, %v4279, %v4260
        %v4282 = vunpack.c.l.s4 1983009808
        %v4283 = vunpack.c.0.s8 %v4282
        %v4284 = vperm.slane %v4280, %v4283
        %v4285 = vrot.slane %v4273, 4
        %v4286 = vsel %vm2111, %v4285, %v4267
        %v4288 = vunpack.c.l.s4 1934713408
        %v4289 = vunpack.c.0.s8 %v4288
        %v4290 = vperm.slane %v4286, %v4289
        %v4291 = vrot.slane %v4284, 4
        %v4292 = vsel %vm2111, %v4291, %v4278
        %v4294 = vunpack.c.l.s4 1934713408
        %v4295 = vunpack.c.0.s8 %v4294
        %v4296 = vperm.slane %v4292, %v4295
        %v4297 = vrot.slane %v4296, 4
        %v4298 = vsel %vm2111, %v4297, %v4290
        %v4299 = vrot.slane %v4290, 4
        %v4300 = vsel %vm2111, %v4296, %v4299
        %v4301 = vpack.c.bf16 %v4298, %v4298
        %v4302 = vpack.c.bf16 %v4300, %v4300
        %v4304 = vperm.slane %v2969, 0
        %v4305 = vperm.slane %v2969, 1
        %v4340 = vunpack.c.l.b16 %v2937
        %v4341 = vunpack.c.h.b16 %v2937
        %v4342 = vunpack.c.l.b16 %v2938
        %v4343 = vunpack.c.h.b16 %v2938
        %v4344 = vunpack.c.l.b16 %v2939
        %v4345 = vunpack.c.h.b16 %v2939
        %v4346 = vunpack.c.l.b16 %v2940
        %v4347 = vunpack.c.h.b16 %v2940
        %v4348 = vunpack.c.l.b16 %v2941
        %v4349 = vunpack.c.h.b16 %v2941
        %v4350 = vunpack.c.l.b16 %v2942
        %v4351 = vunpack.c.h.b16 %v2942
        %v4352 = vunpack.c.l.b16 %v2943
        %v4353 = vunpack.c.h.b16 %v2943
        %v4354 = vunpack.c.l.b16 %v2944
        %v4355 = vunpack.c.h.b16 %v2944
        %v4356 = vunpack.c.l.b16 %v2945
        %v4357 = vunpack.c.h.b16 %v2945
        %v4358 = vunpack.c.l.b16 %v2946
        %v4359 = vunpack.c.h.b16 %v2946
        %v4360 = vunpack.c.l.b16 %v2947
        %v4361 = vunpack.c.h.b16 %v2947
        %v4362 = vunpack.c.l.b16 %v2948
        %v4363 = vunpack.c.h.b16 %v2948
        %v4364 = vunpack.c.l.b16 %v2949
        %v4365 = vunpack.c.h.b16 %v2949
        %v4366 = vunpack.c.l.b16 %v2950
        %v4367 = vunpack.c.h.b16 %v2950
        %v4368 = vunpack.c.l.b16 %v2951
        %v4369 = vunpack.c.h.b16 %v2951
        %v4370 = vunpack.c.l.b16 %v2952
        %v4371 = vunpack.c.h.b16 %v2952
        %v4372 = vunpack.c.l.b16 %v2953
        %v4373 = vunpack.c.h.b16 %v2953
        %v4374 = vunpack.c.l.b16 %v2954
        %v4375 = vunpack.c.h.b16 %v2954
        %v4376 = vunpack.c.l.b16 %v2955
        %v4377 = vunpack.c.h.b16 %v2955
        %v4378 = vunpack.c.l.b16 %v2956
        %v4379 = vunpack.c.h.b16 %v2956
        %v4380 = vunpack.c.l.b16 %v2957
        %v4381 = vunpack.c.h.b16 %v2957
        %v4382 = vunpack.c.l.b16 %v2958
        %v4383 = vunpack.c.h.b16 %v2958
        %v4384 = vunpack.c.l.b16 %v2959
        %v4385 = vunpack.c.h.b16 %v2959
        %v4386 = vunpack.c.l.b16 %v2960
        %v4387 = vunpack.c.h.b16 %v2960
        %v4388 = vunpack.c.l.b16 %v2961
        %v4389 = vunpack.c.h.b16 %v2961
        %v4390 = vunpack.c.l.b16 %v2962
        %v4391 = vunpack.c.h.b16 %v2962
        %v4392 = vunpack.c.l.b16 %v2963
        %v4393 = vunpack.c.h.b16 %v2963
        %v4394 = vunpack.c.l.b16 %v2964
        %v4395 = vunpack.c.h.b16 %v2964
        %v4396 = vunpack.c.l.b16 %v2965
        %v4397 = vunpack.c.h.b16 %v2965
        %v4398 = vunpack.c.l.b16 %v2966
        %v4399 = vunpack.c.h.b16 %v2966
        %v4400 = vunpack.c.l.b16 %v2967
        %v4401 = vunpack.c.h.b16 %v2967
        %v4402 = vunpack.c.l.b16 %v2968
        %v4403 = vunpack.c.h.b16 %v2968
        %v4404 = vpack.c.b16 %v4342, %v4340
        %v4405 = vpack.c.b16 %v4343, %v4341
        %v4406 = vpack.c.b16 %v4346, %v4344
        %v4407 = vpack.c.b16 %v4347, %v4345
        %v4408 = vpack.c.b16 %v4350, %v4348
        %v4409 = vpack.c.b16 %v4351, %v4349
        %v4410 = vpack.c.b16 %v4354, %v4352
        %v4411 = vpack.c.b16 %v4355, %v4353
        %v4412 = vpack.c.b16 %v4358, %v4356
        %v4413 = vpack.c.b16 %v4359, %v4357
        %v4414 = vpack.c.b16 %v4362, %v4360
        %v4415 = vpack.c.b16 %v4363, %v4361
        %v4416 = vpack.c.b16 %v4366, %v4364
        %v4417 = vpack.c.b16 %v4367, %v4365
        %v4418 = vpack.c.b16 %v4370, %v4368
        %v4419 = vpack.c.b16 %v4371, %v4369
        %v4420 = vpack.c.b16 %v4374, %v4372
        %v4421 = vpack.c.b16 %v4375, %v4373
        %v4422 = vpack.c.b16 %v4378, %v4376
        %v4423 = vpack.c.b16 %v4379, %v4377
        %v4424 = vpack.c.b16 %v4382, %v4380
        %v4425 = vpack.c.b16 %v4383, %v4381
        %v4426 = vpack.c.b16 %v4386, %v4384
        %v4427 = vpack.c.b16 %v4387, %v4385
        %v4428 = vpack.c.b16 %v4390, %v4388
        %v4429 = vpack.c.b16 %v4391, %v4389
        %v4430 = vpack.c.b16 %v4394, %v4392
        %v4431 = vpack.c.b16 %v4395, %v4393
        %v4432 = vpack.c.b16 %v4398, %v4396
        %v4433 = vpack.c.b16 %v4399, %v4397
        %v4434 = vpack.c.b16 %v4402, %v4400
        %v4435 = vpack.c.b16 %v4403, %v4401
        %4468 = vmatpush.bf16.msra.mxu0 %v4418
        %4469 = vmatpush.bf16.msra.mxu0 %v4416
        %4470 = vmatpush.bf16.msra.mxu0 %v4414
        %4471 = vmatpush.bf16.msra.mxu0 %v4412
        %4472 = vmatpush.bf16.msra.mxu0 %v4410
        %4473 = vmatpush.bf16.msra.mxu0 %v4408
        %4474 = vmatpush.bf16.msra.mxu0 %v4406
        %4475 = vmatpush.bf16.msra.mxu0 %v4404
        %4476 = vmatmul.bf16.gmra.mxu0 %v4301
        %v4477 = vpop.f32.mrf.mxu0
        %v4478 = vadd.f32 %v4304, %v4477
        %v4479 = vpop.f32.mrf.mxu0
        %4480 = vdwg.mxu0
        %4481 = vmatpush.bf16.msra.mxu0 %v4434
        %4482 = vmatpush.bf16.msra.mxu0 %v4432
        %4483 = vmatpush.bf16.msra.mxu0 %v4430
        %4484 = vmatpush.bf16.msra.mxu0 %v4428
        %4485 = vmatpush.bf16.msra.mxu0 %v4426
        %4486 = vmatpush.bf16.msra.mxu0 %v4424
        %4487 = vmatpush.bf16.msra.mxu0 %v4422
        %4488 = vmatpush.bf16.msra.mxu0 %v4420
        %4489 = vmatmul.bf16.gmra.mxu0 %v4302
        %v4490 = vpop.f32.mrf.mxu0
        %v4491 = vadd.f32 %v4478, %v4490
        %v4492 = vpop.f32.mrf.mxu0
        %4493 = vdwg.mxu0
        %4494 = vmatpush.bf16.msra.mxu0 %v4419
        %4495 = vmatpush.bf16.msra.mxu0 %v4417
        %4496 = vmatpush.bf16.msra.mxu0 %v4415
        %4497 = vmatpush.bf16.msra.mxu0 %v4413
        %4498 = vmatpush.bf16.msra.mxu0 %v4411
        %4499 = vmatpush.bf16.msra.mxu0 %v4409
        %4500 = vmatpush.bf16.msra.mxu0 %v4407
        %4501 = vmatpush.bf16.msra.mxu0 %v4405
        %4502 = vmatmul.bf16.gmra.mxu0 %v4301
        %v4503 = vpop.f32.mrf.mxu0
        %v4504 = vadd.f32 %v4305, %v4503
        %v4505 = vpop.f32.mrf.mxu0
        %4506 = vdwg.mxu0
        %4507 = vmatpush.bf16.msra.mxu0 %v4435
        %4508 = vmatpush.bf16.msra.mxu0 %v4433
        %4509 = vmatpush.bf16.msra.mxu0 %v4431
        %4510 = vmatpush.bf16.msra.mxu0 %v4429
        %4511 = vmatpush.bf16.msra.mxu0 %v4427
        %4512 = vmatpush.bf16.msra.mxu0 %v4425
        %4513 = vmatpush.bf16.msra.mxu0 %v4423
        %4514 = vmatpush.bf16.msra.mxu0 %v4421
        %4515 = vmatmul.bf16.gmra.mxu0 %v4302
        %v4516 = vpop.f32.mrf.mxu0
        %v4517 = vadd.f32 %v4504, %v4516
        %v4518 = vpop.f32.mrf.mxu0
        %4519 = vdwg.mxu0
        %v4520 = vld [vmem:[#allocation28] sm:$0x3]
        %v4521 = vld [vmem:[%s57] sm:$0x3]
        %v4522 = vadd.f32 %v2834, %v4491
        %v4523 = vadd.f32 %v2835, %v4517
        %v4524 = vadd.f32 %v4522, %v4523
        %4525 = vadd.xlane.f32.xlu0 %v4524
        %v4526 = vpop.xlane.xlu0 %4525
        %v4527 = vmul.f32 %v4526, %v2799
        %v4528 = vsub.f32 %v4522, %v4527
        %v4529 = vsub.f32 %v4523, %v4527
        %v4530 = vmul.f32 %v4528, %v4528
        %v4531 = vmul.f32 %v4529, %v4529
        %v4532 = vadd.f32 %v4530, %v4531
        %4533 = vadd.xlane.f32.xlu0 %v4532
        %v4534 = vpop.xlane.xlu0 %4533
        %v4535 = vmul.f32 %v4534, %v2799
        %v4536 = vadd.f32 %v4535, 1e-05
        %v4537 = vrsqrt.pop %v4536
        %v4538 = vmul.f32 %v4537, %v4536
        %v4539 = vmul.f32 %v4538, %v4537
        %v4540 = vmul.f32 0.5, %v4539
        %v4541 = vsub.f32 1.5, %v4540
        %v4542 = vmul.f32 %v4537, %v4541
        %vm4543 = vweird.f32 %v4536
        %vm4544 = vweird.f32 %v4537
        %vm4545 = vmor %vm4543, %vm4544
        %v4546 = vsel %vm4545, %v4537, %v4542
        %v4547 = vmul.f32 %v4528, %v4546
        %v4548 = vmul.f32 %v4529, %v4546
        %v4550 = vperm.slane %v4520, 0
        %v4551 = vperm.slane %v4520, 1
        %v4554 = vmul.f32 %v4547, %v4550
        %v4555 = vmul.f32 %v4548, %v4551
        %v4557 = vperm.slane %v4521, 0
        %v4558 = vperm.slane %v4521, 1
        %v4561 = vadd.f32 %v4554, %v4557
        %v4562 = vadd.f32 %v4555, %v4558
        %v4563 = vpack.c.bf16 %v4561, %v4561
        %v4564 = vpack.c.bf16 %v4562, %v4562
        %v4565 = vld [vmem:[#allocation25] sm:$0xff]
        %v4566 = vld [vmem:[#allocation25 + $0x8] sm:$0xff]
        %v4567 = vld [vmem:[#allocation25 + $0x10] sm:$0xff]
        %v4568 = vld [vmem:[#allocation25 + $0x18] sm:$0xff]
        %v4569 = vld [vmem:[#allocation25 + $0x20] sm:$0xff]
        %v4570 = vld [vmem:[#allocation25 + $0x28] sm:$0xff]
        %v4571 = vld [vmem:[#allocation25 + $0x30] sm:$0xff]
        %v4572 = vld [vmem:[#allocation25 + $0x38] sm:$0xff]
        %v4573 = vld [vmem:[#allocation25 + $0x40] sm:$0xff]
        %v4574 = vld [vmem:[#allocation25 + $0x48] sm:$0xff]
        %v4575 = vld [vmem:[#allocation25 + $0x50] sm:$0xff]
        %v4576 = vld [vmem:[#allocation25 + $0x58] sm:$0xff]
        %v4577 = vld [vmem:[#allocation25 + $0x60] sm:$0xff]
        %v4578 = vld [vmem:[#allocation25 + $0x68] sm:$0xff]
        %v4579 = vld [vmem:[#allocation25 + $0x70] sm:$0xff]
        %v4580 = vld [vmem:[#allocation25 + $0x78] sm:$0xff]
        %v4581 = vld [vmem:[#allocation25 + $0x80] sm:$0xff]
        %v4582 = vld [vmem:[#allocation25 + $0x88] sm:$0xff]
        %v4583 = vld [vmem:[#allocation25 + $0x90] sm:$0xff]
        %v4584 = vld [vmem:[#allocation25 + $0x98] sm:$0xff]
        %v4585 = vld [vmem:[#allocation25 + $0xa0] sm:$0xff]
        %v4586 = vld [vmem:[#allocation25 + $0xa8] sm:$0xff]
        %v4587 = vld [vmem:[#allocation25 + $0xb0] sm:$0xff]
        %v4588 = vld [vmem:[#allocation25 + $0xb8] sm:$0xff]
        %v4589 = vld [vmem:[#allocation25 + $0xc0] sm:$0xff]
        %v4590 = vld [vmem:[#allocation25 + $0xc8] sm:$0xff]
        %v4591 = vld [vmem:[#allocation25 + $0xd0] sm:$0xff]
        %v4592 = vld [vmem:[#allocation25 + $0xd8] sm:$0xff]
        %v4593 = vld [vmem:[#allocation25 + $0xe0] sm:$0xff]
        %v4594 = vld [vmem:[#allocation25 + $0xe8] sm:$0xff]
        %v4595 = vld [vmem:[#allocation25 + $0xf0] sm:$0xff]
        %v4596 = vld [vmem:[#allocation25 + $0xf8] sm:$0xff]
        %v4597 = vld [vmem:[#allocation25 + $0x100] sm:$0xff]
        %v4598 = vld [vmem:[#allocation25 + $0x108] sm:$0xff]
        %v4599 = vld [vmem:[#allocation25 + $0x110] sm:$0xff]
        %v4600 = vld [vmem:[#allocation25 + $0x118] sm:$0xff]
        %v4601 = vld [vmem:[#allocation25 + $0x120] sm:$0xff]
        %v4602 = vld [vmem:[#allocation25 + $0x128] sm:$0xff]
        %v4603 = vld [vmem:[#allocation25 + $0x130] sm:$0xff]
        %v4604 = vld [vmem:[#allocation25 + $0x138] sm:$0xff]
        %v4605 = vld [vmem:[#allocation25 + $0x140] sm:$0xff]
        %v4606 = vld [vmem:[#allocation25 + $0x148] sm:$0xff]
        %v4607 = vld [vmem:[#allocation25 + $0x150] sm:$0xff]
        %v4608 = vld [vmem:[#allocation25 + $0x158] sm:$0xff]
        %v4609 = vld [vmem:[#allocation25 + $0x160] sm:$0xff]
        %v4610 = vld [vmem:[#allocation25 + $0x168] sm:$0xff]
        %v4611 = vld [vmem:[#allocation25 + $0x170] sm:$0xff]
        %v4612 = vld [vmem:[#allocation25 + $0x178] sm:$0xff]
        %v4613 = vld [vmem:[#allocation25 + $0x180] sm:$0xff]
        %v4614 = vld [vmem:[#allocation25 + $0x188] sm:$0xff]
        %v4615 = vld [vmem:[#allocation25 + $0x190] sm:$0xff]
        %v4616 = vld [vmem:[#allocation25 + $0x198] sm:$0xff]
        %v4617 = vld [vmem:[#allocation25 + $0x1a0] sm:$0xff]
        %v4618 = vld [vmem:[#allocation25 + $0x1a8] sm:$0xff]
        %v4619 = vld [vmem:[#allocation25 + $0x1b0] sm:$0xff]
        %v4620 = vld [vmem:[#allocation25 + $0x1b8] sm:$0xff]
        %v4621 = vld [vmem:[#allocation25 + $0x1c0] sm:$0xff]
        %v4622 = vld [vmem:[#allocation25 + $0x1c8] sm:$0xff]
        %v4623 = vld [vmem:[#allocation25 + $0x1d0] sm:$0xff]
        %v4624 = vld [vmem:[#allocation25 + $0x1d8] sm:$0xff]
        %v4625 = vld [vmem:[#allocation25 + $0x1e0] sm:$0xff]
        %v4626 = vld [vmem:[#allocation25 + $0x1e8] sm:$0xff]
        %v4627 = vld [vmem:[#allocation25 + $0x1f0] sm:$0xff]
        %v4628 = vld [vmem:[#allocation25 + $0x1f8] sm:$0xff]
        %v4629 = vld [vmem:[%s45] sm:$0xf]
        %v4631 = vperm.slane %v4629, 0
        %v4632 = vperm.slane %v4629, 1
        %v4633 = vperm.slane %v4629, 2
        %v4634 = vperm.slane %v4629, 3
        %v4703 = vunpack.c.l.b16 %v4565
        %v4704 = vunpack.c.h.b16 %v4565
        %v4705 = vunpack.c.l.b16 %v4566
        %v4706 = vunpack.c.h.b16 %v4566
        %v4707 = vunpack.c.l.b16 %v4567
        %v4708 = vunpack.c.h.b16 %v4567
        %v4709 = vunpack.c.l.b16 %v4568
        %v4710 = vunpack.c.h.b16 %v4568
        %v4711 = vunpack.c.l.b16 %v4569
        %v4712 = vunpack.c.h.b16 %v4569
        %v4713 = vunpack.c.l.b16 %v4570
        %v4714 = vunpack.c.h.b16 %v4570
        %v4715 = vunpack.c.l.b16 %v4571
        %v4716 = vunpack.c.h.b16 %v4571
        %v4717 = vunpack.c.l.b16 %v4572
        %v4718 = vunpack.c.h.b16 %v4572
        %v4719 = vunpack.c.l.b16 %v4573
        %v4720 = vunpack.c.h.b16 %v4573
        %v4721 = vunpack.c.l.b16 %v4574
        %v4722 = vunpack.c.h.b16 %v4574
        %v4723 = vunpack.c.l.b16 %v4575
        %v4724 = vunpack.c.h.b16 %v4575
        %v4725 = vunpack.c.l.b16 %v4576
        %v4726 = vunpack.c.h.b16 %v4576
        %v4727 = vunpack.c.l.b16 %v4577
        %v4728 = vunpack.c.h.b16 %v4577
        %v4729 = vunpack.c.l.b16 %v4578
        %v4730 = vunpack.c.h.b16 %v4578
        %v4731 = vunpack.c.l.b16 %v4579
        %v4732 = vunpack.c.h.b16 %v4579
        %v4733 = vunpack.c.l.b16 %v4580
        %v4734 = vunpack.c.h.b16 %v4580
        %v4735 = vunpack.c.l.b16 %v4581
        %v4736 = vunpack.c.h.b16 %v4581
        %v4737 = vunpack.c.l.b16 %v4582
        %v4738 = vunpack.c.h.b16 %v4582
        %v4739 = vunpack.c.l.b16 %v4583
        %v4740 = vunpack.c.h.b16 %v4583
        %v4741 = vunpack.c.l.b16 %v4584
        %v4742 = vunpack.c.h.b16 %v4584
        %v4743 = vunpack.c.l.b16 %v4585
        %v4744 = vunpack.c.h.b16 %v4585
        %v4745 = vunpack.c.l.b16 %v4586
        %v4746 = vunpack.c.h.b16 %v4586
        %v4747 = vunpack.c.l.b16 %v4587
        %v4748 = vunpack.c.h.b16 %v4587
        %v4749 = vunpack.c.l.b16 %v4588
        %v4750 = vunpack.c.h.b16 %v4588
        %v4751 = vunpack.c.l.b16 %v4589
        %v4752 = vunpack.c.h.b16 %v4589
        %v4753 = vunpack.c.l.b16 %v4590
        %v4754 = vunpack.c.h.b16 %v4590
        %v4755 = vunpack.c.l.b16 %v4591
        %v4756 = vunpack.c.h.b16 %v4591
        %v4757 = vunpack.c.l.b16 %v4592
        %v4758 = vunpack.c.h.b16 %v4592
        %v4759 = vunpack.c.l.b16 %v4593
        %v4760 = vunpack.c.h.b16 %v4593
        %v4761 = vunpack.c.l.b16 %v4594
        %v4762 = vunpack.c.h.b16 %v4594
        %v4763 = vunpack.c.l.b16 %v4595
        %v4764 = vunpack.c.h.b16 %v4595
        %v4765 = vunpack.c.l.b16 %v4596
        %v4766 = vunpack.c.h.b16 %v4596
        %v4767 = vunpack.c.l.b16 %v4597
        %v4768 = vunpack.c.h.b16 %v4597
        %v4769 = vunpack.c.l.b16 %v4598
        %v4770 = vunpack.c.h.b16 %v4598
        %v4771 = vunpack.c.l.b16 %v4599
        %v4772 = vunpack.c.h.b16 %v4599
        %v4773 = vunpack.c.l.b16 %v4600
        %v4774 = vunpack.c.h.b16 %v4600
        %v4775 = vunpack.c.l.b16 %v4601
        %v4776 = vunpack.c.h.b16 %v4601
        %v4777 = vunpack.c.l.b16 %v4602
        %v4778 = vunpack.c.h.b16 %v4602
        %v4779 = vunpack.c.l.b16 %v4603
        %v4780 = vunpack.c.h.b16 %v4603
        %v4781 = vunpack.c.l.b16 %v4604
        %v4782 = vunpack.c.h.b16 %v4604
        %v4783 = vunpack.c.l.b16 %v4605
        %v4784 = vunpack.c.h.b16 %v4605
        %v4785 = vunpack.c.l.b16 %v4606
        %v4786 = vunpack.c.h.b16 %v4606
        %v4787 = vunpack.c.l.b16 %v4607
        %v4788 = vunpack.c.h.b16 %v4607
        %v4789 = vunpack.c.l.b16 %v4608
        %v4790 = vunpack.c.h.b16 %v4608
        %v4791 = vunpack.c.l.b16 %v4609
        %v4792 = vunpack.c.h.b16 %v4609
        %v4793 = vunpack.c.l.b16 %v4610
        %v4794 = vunpack.c.h.b16 %v4610
        %v4795 = vunpack.c.l.b16 %v4611
        %v4796 = vunpack.c.h.b16 %v4611
        %v4797 = vunpack.c.l.b16 %v4612
        %v4798 = vunpack.c.h.b16 %v4612
        %v4799 = vunpack.c.l.b16 %v4613
        %v4800 = vunpack.c.h.b16 %v4613
        %v4801 = vunpack.c.l.b16 %v4614
        %v4802 = vunpack.c.h.b16 %v4614
        %v4803 = vunpack.c.l.b16 %v4615
        %v4804 = vunpack.c.h.b16 %v4615
        %v4805 = vunpack.c.l.b16 %v4616
        %v4806 = vunpack.c.h.b16 %v4616
        %v4807 = vunpack.c.l.b16 %v4617
        %v4808 = vunpack.c.h.b16 %v4617
        %v4809 = vunpack.c.l.b16 %v4618
        %v4810 = vunpack.c.h.b16 %v4618
        %v4811 = vunpack.c.l.b16 %v4619
        %v4812 = vunpack.c.h.b16 %v4619
        %v4813 = vunpack.c.l.b16 %v4620
        %v4814 = vunpack.c.h.b16 %v4620
        %v4815 = vunpack.c.l.b16 %v4621
        %v4816 = vunpack.c.h.b16 %v4621
        %v4817 = vunpack.c.l.b16 %v4622
        %v4818 = vunpack.c.h.b16 %v4622
        %v4819 = vunpack.c.l.b16 %v4623
        %v4820 = vunpack.c.h.b16 %v4623
        %v4821 = vunpack.c.l.b16 %v4624
        %v4822 = vunpack.c.h.b16 %v4624
        %v4823 = vunpack.c.l.b16 %v4625
        %v4824 = vunpack.c.h.b16 %v4625
        %v4825 = vunpack.c.l.b16 %v4626
        %v4826 = vunpack.c.h.b16 %v4626
        %v4827 = vunpack.c.l.b16 %v4627
        %v4828 = vunpack.c.h.b16 %v4627
        %v4829 = vunpack.c.l.b16 %v4628
        %v4830 = vunpack.c.h.b16 %v4628
        %v4831 = vpack.c.b16 %v4707, %v4703
        %v4832 = vpack.c.b16 %v4708, %v4704
        %v4833 = vpack.c.b16 %v4709, %v4705
        %v4834 = vpack.c.b16 %v4710, %v4706
        %v4835 = vpack.c.b16 %v4715, %v4711
        %v4836 = vpack.c.b16 %v4716, %v4712
        %v4837 = vpack.c.b16 %v4717, %v4713
        %v4838 = vpack.c.b16 %v4718, %v4714
        %v4839 = vpack.c.b16 %v4723, %v4719
        %v4840 = vpack.c.b16 %v4724, %v4720
        %v4841 = vpack.c.b16 %v4725, %v4721
        %v4842 = vpack.c.b16 %v4726, %v4722
        %v4843 = vpack.c.b16 %v4731, %v4727
        %v4844 = vpack.c.b16 %v4732, %v4728
        %v4845 = vpack.c.b16 %v4733, %v4729
        %v4846 = vpack.c.b16 %v4734, %v4730
        %v4847 = vpack.c.b16 %v4739, %v4735
        %v4848 = vpack.c.b16 %v4740, %v4736
        %v4849 = vpack.c.b16 %v4741, %v4737
        %v4850 = vpack.c.b16 %v4742, %v4738
        %v4851 = vpack.c.b16 %v4747, %v4743
        %v4852 = vpack.c.b16 %v4748, %v4744
        %v4853 = vpack.c.b16 %v4749, %v4745
        %v4854 = vpack.c.b16 %v4750, %v4746
        %v4855 = vpack.c.b16 %v4755, %v4751
        %v4856 = vpack.c.b16 %v4756, %v4752
        %v4857 = vpack.c.b16 %v4757, %v4753
        %v4858 = vpack.c.b16 %v4758, %v4754
        %v4859 = vpack.c.b16 %v4763, %v4759
        %v4860 = vpack.c.b16 %v4764, %v4760
        %v4861 = vpack.c.b16 %v4765, %v4761
        %v4862 = vpack.c.b16 %v4766, %v4762
        %v4863 = vpack.c.b16 %v4771, %v4767
        %v4864 = vpack.c.b16 %v4772, %v4768
        %v4865 = vpack.c.b16 %v4773, %v4769
        %v4866 = vpack.c.b16 %v4774, %v4770
        %v4867 = vpack.c.b16 %v4779, %v4775
        %v4868 = vpack.c.b16 %v4780, %v4776
        %v4869 = vpack.c.b16 %v4781, %v4777
        %v4870 = vpack.c.b16 %v4782, %v4778
        %v4871 = vpack.c.b16 %v4787, %v4783
        %v4872 = vpack.c.b16 %v4788, %v4784
        %v4873 = vpack.c.b16 %v4789, %v4785
        %v4874 = vpack.c.b16 %v4790, %v4786
        %v4875 = vpack.c.b16 %v4795, %v4791
        %v4876 = vpack.c.b16 %v4796, %v4792
        %v4877 = vpack.c.b16 %v4797, %v4793
        %v4878 = vpack.c.b16 %v4798, %v4794
        %v4879 = vpack.c.b16 %v4803, %v4799
        %v4880 = vpack.c.b16 %v4804, %v4800
        %v4881 = vpack.c.b16 %v4805, %v4801
        %v4882 = vpack.c.b16 %v4806, %v4802
        %v4883 = vpack.c.b16 %v4811, %v4807
        %v4884 = vpack.c.b16 %v4812, %v4808
        %v4885 = vpack.c.b16 %v4813, %v4809
        %v4886 = vpack.c.b16 %v4814, %v4810
        %v4887 = vpack.c.b16 %v4819, %v4815
        %v4888 = vpack.c.b16 %v4820, %v4816
        %v4889 = vpack.c.b16 %v4821, %v4817
        %v4890 = vpack.c.b16 %v4822, %v4818
        %v4891 = vpack.c.b16 %v4827, %v4823
        %v4892 = vpack.c.b16 %v4828, %v4824
        %v4893 = vpack.c.b16 %v4829, %v4825
        %v4894 = vpack.c.b16 %v4830, %v4826
        %4959 = vmatpush.bf16.msra.mxu0 %v4859
        %4960 = vmatpush.bf16.msra.mxu0 %v4855
        %4961 = vmatpush.bf16.msra.mxu0 %v4851
        %4962 = vmatpush.bf16.msra.mxu0 %v4847
        %4963 = vmatpush.bf16.msra.mxu0 %v4843
        %4964 = vmatpush.bf16.msra.mxu0 %v4839
        %4965 = vmatpush.bf16.msra.mxu0 %v4835
        %4966 = vmatpush.bf16.msra.mxu0 %v4831
        %4967 = vmatmul.bf16.gmra.mxu0 %v4563
        %v4968 = vpop.f32.mrf.mxu0
        %v4969 = vadd.f32 %v4631, %v4968
        %v4970 = vpop.f32.mrf.mxu0
        %4971 = vdwg.mxu0
        %4972 = vmatpush.bf16.msra.mxu0 %v4891
        %4973 = vmatpush.bf16.msra.mxu0 %v4887
        %4974 = vmatpush.bf16.msra.mxu0 %v4883
        %4975 = vmatpush.bf16.msra.mxu0 %v4879
        %4976 = vmatpush.bf16.msra.mxu0 %v4875
        %4977 = vmatpush.bf16.msra.mxu0 %v4871
        %4978 = vmatpush.bf16.msra.mxu0 %v4867
        %4979 = vmatpush.bf16.msra.mxu0 %v4863
        %4980 = vmatmul.bf16.gmra.mxu0 %v4564
        %v4981 = vpop.f32.mrf.mxu0
        %v4982 = vadd.f32 %v4969, %v4981
        %v4983 = vpop.f32.mrf.mxu0
        %4984 = vdwg.mxu0
        %4985 = vmatpush.bf16.msra.mxu0 %v4860
        %4986 = vmatpush.bf16.msra.mxu0 %v4856
        %4987 = vmatpush.bf16.msra.mxu0 %v4852
        %4988 = vmatpush.bf16.msra.mxu0 %v4848
        %4989 = vmatpush.bf16.msra.mxu0 %v4844
        %4990 = vmatpush.bf16.msra.mxu0 %v4840
        %4991 = vmatpush.bf16.msra.mxu0 %v4836
        %4992 = vmatpush.bf16.msra.mxu0 %v4832
        %4993 = vmatmul.bf16.gmra.mxu0 %v4563
        %v4994 = vpop.f32.mrf.mxu0
        %v4995 = vadd.f32 %v4632, %v4994
        %v4996 = vpop.f32.mrf.mxu0
        %4997 = vdwg.mxu0
        %4998 = vmatpush.bf16.msra.mxu0 %v4892
        %4999 = vmatpush.bf16.msra.mxu0 %v4888
        %5000 = vmatpush.bf16.msra.mxu0 %v4884
        %5001 = vmatpush.bf16.msra.mxu0 %v4880
        %5002 = vmatpush.bf16.msra.mxu0 %v4876
        %5003 = vmatpush.bf16.msra.mxu0 %v4872
        %5004 = vmatpush.bf16.msra.mxu0 %v4868
        %5005 = vmatpush.bf16.msra.mxu0 %v4864
        %5006 = vmatmul.bf16.gmra.mxu0 %v4564
        %v5007 = vpop.f32.mrf.mxu0
        %v5008 = vadd.f32 %v4995, %v5007
        %v5009 = vpop.f32.mrf.mxu0
        %5010 = vdwg.mxu0
        %5011 = vmatpush.bf16.msra.mxu0 %v4861
        %5012 = vmatpush.bf16.msra.mxu0 %v4857
        %5013 = vmatpush.bf16.msra.mxu0 %v4853
        %5014 = vmatpush.bf16.msra.mxu0 %v4849
        %5015 = vmatpush.bf16.msra.mxu0 %v4845
        %5016 = vmatpush.bf16.msra.mxu0 %v4841
        %5017 = vmatpush.bf16.msra.mxu0 %v4837
        %5018 = vmatpush.bf16.msra.mxu0 %v4833
        %5019 = vmatmul.bf16.gmra.mxu0 %v4563
        %v5020 = vpop.f32.mrf.mxu0
        %v5021 = vadd.f32 %v4633, %v5020
        %v5022 = vpop.f32.mrf.mxu0
        %5023 = vdwg.mxu0
        %5024 = vmatpush.bf16.msra.mxu0 %v4893
        %5025 = vmatpush.bf16.msra.mxu0 %v4889
        %5026 = vmatpush.bf16.msra.mxu0 %v4885
        %5027 = vmatpush.bf16.msra.mxu0 %v4881
        %5028 = vmatpush.bf16.msra.mxu0 %v4877
        %5029 = vmatpush.bf16.msra.mxu0 %v4873
        %5030 = vmatpush.bf16.msra.mxu0 %v4869
        %5031 = vmatpush.bf16.msra.mxu0 %v4865
        %5032 = vmatmul.bf16.gmra.mxu0 %v4564
        %v5033 = vpop.f32.mrf.mxu0
        %v5034 = vadd.f32 %v5021, %v5033
        %v5035 = vpop.f32.mrf.mxu0
        %5036 = vdwg.mxu0
        %5037 = vmatpush.bf16.msra.mxu0 %v4862
        %5038 = vmatpush.bf16.msra.mxu0 %v4858
        %5039 = vmatpush.bf16.msra.mxu0 %v4854
        %5040 = vmatpush.bf16.msra.mxu0 %v4850
        %5041 = vmatpush.bf16.msra.mxu0 %v4846
        %5042 = vmatpush.bf16.msra.mxu0 %v4842
        %5043 = vmatpush.bf16.msra.mxu0 %v4838
        %5044 = vmatpush.bf16.msra.mxu0 %v4834
        %5045 = vmatmul.bf16.gmra.mxu0 %v4563
        %v5046 = vpop.f32.mrf.mxu0
        %v5047 = vadd.f32 %v4634, %v5046
        %v5048 = vpop.f32.mrf.mxu0
        %5049 = vdwg.mxu0
        %5050 = vmatpush.bf16.msra.mxu0 %v4894
        %5051 = vmatpush.bf16.msra.mxu0 %v4890
        %5052 = vmatpush.bf16.msra.mxu0 %v4886
        %5053 = vmatpush.bf16.msra.mxu0 %v4882
        %5054 = vmatpush.bf16.msra.mxu0 %v4878
        %5055 = vmatpush.bf16.msra.mxu0 %v4874
        %5056 = vmatpush.bf16.msra.mxu0 %v4870
        %5057 = vmatpush.bf16.msra.mxu0 %v4866
        %5058 = vmatmul.bf16.gmra.mxu0 %v4564
        %v5059 = vpop.f32.mrf.mxu0
        %v5060 = vadd.f32 %v5047, %v5059
        %v5061 = vpop.f32.mrf.mxu0
        %5062 = vdwg.mxu0
        %v5063 = vmax.f32 %v4982, 0.0
        %v5064 = vmax.f32 %v5008, 0.0
        %v5065 = vmax.f32 %v5034, 0.0
        %v5066 = vmax.f32 %v5060, 0.0
        %v5067 = vpack.c.bf16 %v5063, %v5063
        %v5068 = vpack.c.bf16 %v5064, %v5064
        %v5069 = vpack.c.bf16 %v5065, %v5065
        %v5070 = vpack.c.bf16 %v5066, %v5066
        %v5071 = vld [vmem:[#allocation26] sm:$0xff]
        %v5072 = vld [vmem:[#allocation26 + $0x8] sm:$0xff]
        %v5073 = vld [vmem:[#allocation26 + $0x10] sm:$0xff]
        %v5074 = vld [vmem:[#allocation26 + $0x18] sm:$0xff]
        %v5075 = vld [vmem:[#allocation26 + $0x20] sm:$0xff]
        %v5076 = vld [vmem:[#allocation26 + $0x28] sm:$0xff]
        %v5077 = vld [vmem:[#allocation26 + $0x30] sm:$0xff]
        %v5078 = vld [vmem:[#allocation26 + $0x38] sm:$0xff]
        %v5079 = vld [vmem:[#allocation26 + $0x40] sm:$0xff]
        %v5080 = vld [vmem:[#allocation26 + $0x48] sm:$0xff]
        %v5081 = vld [vmem:[#allocation26 + $0x50] sm:$0xff]
        %v5082 = vld [vmem:[#allocation26 + $0x58] sm:$0xff]
        %v5083 = vld [vmem:[#allocation26 + $0x60] sm:$0xff]
        %v5084 = vld [vmem:[#allocation26 + $0x68] sm:$0xff]
        %v5085 = vld [vmem:[#allocation26 + $0x70] sm:$0xff]
        %v5086 = vld [vmem:[#allocation26 + $0x78] sm:$0xff]
        %v5087 = vld [vmem:[#allocation26 + $0x80] sm:$0xff]
        %v5088 = vld [vmem:[#allocation26 + $0x88] sm:$0xff]
        %v5089 = vld [vmem:[#allocation26 + $0x90] sm:$0xff]
        %v5090 = vld [vmem:[#allocation26 + $0x98] sm:$0xff]
        %v5091 = vld [vmem:[#allocation26 + $0xa0] sm:$0xff]
        %v5092 = vld [vmem:[#allocation26 + $0xa8] sm:$0xff]
        %v5093 = vld [vmem:[#allocation26 + $0xb0] sm:$0xff]
        %v5094 = vld [vmem:[#allocation26 + $0xb8] sm:$0xff]
        %v5095 = vld [vmem:[#allocation26 + $0xc0] sm:$0xff]
        %v5096 = vld [vmem:[#allocation26 + $0xc8] sm:$0xff]
        %v5097 = vld [vmem:[#allocation26 + $0xd0] sm:$0xff]
        %v5098 = vld [vmem:[#allocation26 + $0xd8] sm:$0xff]
        %v5099 = vld [vmem:[#allocation26 + $0xe0] sm:$0xff]
        %v5100 = vld [vmem:[#allocation26 + $0xe8] sm:$0xff]
        %v5101 = vld [vmem:[#allocation26 + $0xf0] sm:$0xff]
        %v5102 = vld [vmem:[#allocation26 + $0xf8] sm:$0xff]
        %v5103 = vld [vmem:[#allocation26 + $0x100] sm:$0xff]
        %v5104 = vld [vmem:[#allocation26 + $0x108] sm:$0xff]
        %v5105 = vld [vmem:[#allocation26 + $0x110] sm:$0xff]
        %v5106 = vld [vmem:[#allocation26 + $0x118] sm:$0xff]
        %v5107 = vld [vmem:[#allocation26 + $0x120] sm:$0xff]
        %v5108 = vld [vmem:[#allocation26 + $0x128] sm:$0xff]
        %v5109 = vld [vmem:[#allocation26 + $0x130] sm:$0xff]
        %v5110 = vld [vmem:[#allocation26 + $0x138] sm:$0xff]
        %v5111 = vld [vmem:[#allocation26 + $0x140] sm:$0xff]
        %v5112 = vld [vmem:[#allocation26 + $0x148] sm:$0xff]
        %v5113 = vld [vmem:[#allocation26 + $0x150] sm:$0xff]
        %v5114 = vld [vmem:[#allocation26 + $0x158] sm:$0xff]
        %v5115 = vld [vmem:[#allocation26 + $0x160] sm:$0xff]
        %v5116 = vld [vmem:[#allocation26 + $0x168] sm:$0xff]
        %v5117 = vld [vmem:[#allocation26 + $0x170] sm:$0xff]
        %v5118 = vld [vmem:[#allocation26 + $0x178] sm:$0xff]
        %v5119 = vld [vmem:[#allocation26 + $0x180] sm:$0xff]
        %v5120 = vld [vmem:[#allocation26 + $0x188] sm:$0xff]
        %v5121 = vld [vmem:[#allocation26 + $0x190] sm:$0xff]
        %v5122 = vld [vmem:[#allocation26 + $0x198] sm:$0xff]
        %v5123 = vld [vmem:[#allocation26 + $0x1a0] sm:$0xff]
        %v5124 = vld [vmem:[#allocation26 + $0x1a8] sm:$0xff]
        %v5125 = vld [vmem:[#allocation26 + $0x1b0] sm:$0xff]
        %v5126 = vld [vmem:[#allocation26 + $0x1b8] sm:$0xff]
        %v5127 = vld [vmem:[#allocation26 + $0x1c0] sm:$0xff]
        %v5128 = vld [vmem:[#allocation26 + $0x1c8] sm:$0xff]
        %v5129 = vld [vmem:[#allocation26 + $0x1d0] sm:$0xff]
        %v5130 = vld [vmem:[#allocation26 + $0x1d8] sm:$0xff]
        %v5131 = vld [vmem:[#allocation26 + $0x1e0] sm:$0xff]
        %v5132 = vld [vmem:[#allocation26 + $0x1e8] sm:$0xff]
        %v5133 = vld [vmem:[#allocation26 + $0x1f0] sm:$0xff]
        %v5134 = vld [vmem:[#allocation26 + $0x1f8] sm:$0xff]
        %v5135 = vld [vmem:[%s49] sm:$0x3]
        %v5137 = vperm.slane %v5135, 0
        %v5138 = vperm.slane %v5135, 1
        %v5205 = vunpack.c.l.b16 %v5071
        %v5206 = vunpack.c.h.b16 %v5071
        %v5207 = vunpack.c.l.b16 %v5072
        %v5208 = vunpack.c.h.b16 %v5072
        %v5209 = vunpack.c.l.b16 %v5073
        %v5210 = vunpack.c.h.b16 %v5073
        %v5211 = vunpack.c.l.b16 %v5074
        %v5212 = vunpack.c.h.b16 %v5074
        %v5213 = vunpack.c.l.b16 %v5075
        %v5214 = vunpack.c.h.b16 %v5075
        %v5215 = vunpack.c.l.b16 %v5076
        %v5216 = vunpack.c.h.b16 %v5076
        %v5217 = vunpack.c.l.b16 %v5077
        %v5218 = vunpack.c.h.b16 %v5077
        %v5219 = vunpack.c.l.b16 %v5078
        %v5220 = vunpack.c.h.b16 %v5078
        %v5221 = vunpack.c.l.b16 %v5079
        %v5222 = vunpack.c.h.b16 %v5079
        %v5223 = vunpack.c.l.b16 %v5080
        %v5224 = vunpack.c.h.b16 %v5080
        %v5225 = vunpack.c.l.b16 %v5081
        %v5226 = vunpack.c.h.b16 %v5081
        %v5227 = vunpack.c.l.b16 %v5082
        %v5228 = vunpack.c.h.b16 %v5082
        %v5229 = vunpack.c.l.b16 %v5083
        %v5230 = vunpack.c.h.b16 %v5083
        %v5231 = vunpack.c.l.b16 %v5084
        %v5232 = vunpack.c.h.b16 %v5084
        %v5233 = vunpack.c.l.b16 %v5085
        %v5234 = vunpack.c.h.b16 %v5085
        %v5235 = vunpack.c.l.b16 %v5086
        %v5236 = vunpack.c.h.b16 %v5086
        %v5237 = vunpack.c.l.b16 %v5087
        %v5238 = vunpack.c.h.b16 %v5087
        %v5239 = vunpack.c.l.b16 %v5088
        %v5240 = vunpack.c.h.b16 %v5088
        %v5241 = vunpack.c.l.b16 %v5089
        %v5242 = vunpack.c.h.b16 %v5089
        %v5243 = vunpack.c.l.b16 %v5090
        %v5244 = vunpack.c.h.b16 %v5090
        %v5245 = vunpack.c.l.b16 %v5091
        %v5246 = vunpack.c.h.b16 %v5091
        %v5247 = vunpack.c.l.b16 %v5092
        %v5248 = vunpack.c.h.b16 %v5092
        %v5249 = vunpack.c.l.b16 %v5093
        %v5250 = vunpack.c.h.b16 %v5093
        %v5251 = vunpack.c.l.b16 %v5094
        %v5252 = vunpack.c.h.b16 %v5094
        %v5253 = vunpack.c.l.b16 %v5095
        %v5254 = vunpack.c.h.b16 %v5095
        %v5255 = vunpack.c.l.b16 %v5096
        %v5256 = vunpack.c.h.b16 %v5096
        %v5257 = vunpack.c.l.b16 %v5097
        %v5258 = vunpack.c.h.b16 %v5097
        %v5259 = vunpack.c.l.b16 %v5098
        %v5260 = vunpack.c.h.b16 %v5098
        %v5261 = vunpack.c.l.b16 %v5099
        %v5262 = vunpack.c.h.b16 %v5099
        %v5263 = vunpack.c.l.b16 %v5100
        %v5264 = vunpack.c.h.b16 %v5100
        %v5265 = vunpack.c.l.b16 %v5101
        %v5266 = vunpack.c.h.b16 %v5101
        %v5267 = vunpack.c.l.b16 %v5102
        %v5268 = vunpack.c.h.b16 %v5102
        %v5269 = vunpack.c.l.b16 %v5103
        %v5270 = vunpack.c.h.b16 %v5103
        %v5271 = vunpack.c.l.b16 %v5104
        %v5272 = vunpack.c.h.b16 %v5104
        %v5273 = vunpack.c.l.b16 %v5105
        %v5274 = vunpack.c.h.b16 %v5105
        %v5275 = vunpack.c.l.b16 %v5106
        %v5276 = vunpack.c.h.b16 %v5106
        %v5277 = vunpack.c.l.b16 %v5107
        %v5278 = vunpack.c.h.b16 %v5107
        %v5279 = vunpack.c.l.b16 %v5108
        %v5280 = vunpack.c.h.b16 %v5108
        %v5281 = vunpack.c.l.b16 %v5109
        %v5282 = vunpack.c.h.b16 %v5109
        %v5283 = vunpack.c.l.b16 %v5110
        %v5284 = vunpack.c.h.b16 %v5110
        %v5285 = vunpack.c.l.b16 %v5111
        %v5286 = vunpack.c.h.b16 %v5111
        %v5287 = vunpack.c.l.b16 %v5112
        %v5288 = vunpack.c.h.b16 %v5112
        %v5289 = vunpack.c.l.b16 %v5113
        %v5290 = vunpack.c.h.b16 %v5113
        %v5291 = vunpack.c.l.b16 %v5114
        %v5292 = vunpack.c.h.b16 %v5114
        %v5293 = vunpack.c.l.b16 %v5115
        %v5294 = vunpack.c.h.b16 %v5115
        %v5295 = vunpack.c.l.b16 %v5116
        %v5296 = vunpack.c.h.b16 %v5116
        %v5297 = vunpack.c.l.b16 %v5117
        %v5298 = vunpack.c.h.b16 %v5117
        %v5299 = vunpack.c.l.b16 %v5118
        %v5300 = vunpack.c.h.b16 %v5118
        %v5301 = vunpack.c.l.b16 %v5119
        %v5302 = vunpack.c.h.b16 %v5119
        %v5303 = vunpack.c.l.b16 %v5120
        %v5304 = vunpack.c.h.b16 %v5120
        %v5305 = vunpack.c.l.b16 %v5121
        %v5306 = vunpack.c.h.b16 %v5121
        %v5307 = vunpack.c.l.b16 %v5122
        %v5308 = vunpack.c.h.b16 %v5122
        %v5309 = vunpack.c.l.b16 %v5123
        %v5310 = vunpack.c.h.b16 %v5123
        %v5311 = vunpack.c.l.b16 %v5124
        %v5312 = vunpack.c.h.b16 %v5124
        %v5313 = vunpack.c.l.b16 %v5125
        %v5314 = vunpack.c.h.b16 %v5125
        %v5315 = vunpack.c.l.b16 %v5126
        %v5316 = vunpack.c.h.b16 %v5126
        %v5317 = vunpack.c.l.b16 %v5127
        %v5318 = vunpack.c.h.b16 %v5127
        %v5319 = vunpack.c.l.b16 %v5128
        %v5320 = vunpack.c.h.b16 %v5128
        %v5321 = vunpack.c.l.b16 %v5129
        %v5322 = vunpack.c.h.b16 %v5129
        %v5323 = vunpack.c.l.b16 %v5130
        %v5324 = vunpack.c.h.b16 %v5130
        %v5325 = vunpack.c.l.b16 %v5131
        %v5326 = vunpack.c.h.b16 %v5131
        %v5327 = vunpack.c.l.b16 %v5132
        %v5328 = vunpack.c.h.b16 %v5132
        %v5329 = vunpack.c.l.b16 %v5133
        %v5330 = vunpack.c.h.b16 %v5133
        %v5331 = vunpack.c.l.b16 %v5134
        %v5332 = vunpack.c.h.b16 %v5134
        %v5333 = vpack.c.b16 %v5207, %v5205
        %v5334 = vpack.c.b16 %v5208, %v5206
        %v5335 = vpack.c.b16 %v5211, %v5209
        %v5336 = vpack.c.b16 %v5212, %v5210
        %v5337 = vpack.c.b16 %v5215, %v5213
        %v5338 = vpack.c.b16 %v5216, %v5214
        %v5339 = vpack.c.b16 %v5219, %v5217
        %v5340 = vpack.c.b16 %v5220, %v5218
        %v5341 = vpack.c.b16 %v5223, %v5221
        %v5342 = vpack.c.b16 %v5224, %v5222
        %v5343 = vpack.c.b16 %v5227, %v5225
        %v5344 = vpack.c.b16 %v5228, %v5226
        %v5345 = vpack.c.b16 %v5231, %v5229
        %v5346 = vpack.c.b16 %v5232, %v5230
        %v5347 = vpack.c.b16 %v5235, %v5233
        %v5348 = vpack.c.b16 %v5236, %v5234
        %v5349 = vpack.c.b16 %v5239, %v5237
        %v5350 = vpack.c.b16 %v5240, %v5238
        %v5351 = vpack.c.b16 %v5243, %v5241
        %v5352 = vpack.c.b16 %v5244, %v5242
        %v5353 = vpack.c.b16 %v5247, %v5245
        %v5354 = vpack.c.b16 %v5248, %v5246
        %v5355 = vpack.c.b16 %v5251, %v5249
        %v5356 = vpack.c.b16 %v5252, %v5250
        %v5357 = vpack.c.b16 %v5255, %v5253
        %v5358 = vpack.c.b16 %v5256, %v5254
        %v5359 = vpack.c.b16 %v5259, %v5257
        %v5360 = vpack.c.b16 %v5260, %v5258
        %v5361 = vpack.c.b16 %v5263, %v5261
        %v5362 = vpack.c.b16 %v5264, %v5262
        %v5363 = vpack.c.b16 %v5267, %v5265
        %v5364 = vpack.c.b16 %v5268, %v5266
        %v5365 = vpack.c.b16 %v5271, %v5269
        %v5366 = vpack.c.b16 %v5272, %v5270
        %v5367 = vpack.c.b16 %v5275, %v5273
        %v5368 = vpack.c.b16 %v5276, %v5274
        %v5369 = vpack.c.b16 %v5279, %v5277
        %v5370 = vpack.c.b16 %v5280, %v5278
        %v5371 = vpack.c.b16 %v5283, %v5281
        %v5372 = vpack.c.b16 %v5284, %v5282
        %v5373 = vpack.c.b16 %v5287, %v5285
        %v5374 = vpack.c.b16 %v5288, %v5286
        %v5375 = vpack.c.b16 %v5291, %v5289
        %v5376 = vpack.c.b16 %v5292, %v5290
        %v5377 = vpack.c.b16 %v5295, %v5293
        %v5378 = vpack.c.b16 %v5296, %v5294
        %v5379 = vpack.c.b16 %v5299, %v5297
        %v5380 = vpack.c.b16 %v5300, %v5298
        %v5381 = vpack.c.b16 %v5303, %v5301
        %v5382 = vpack.c.b16 %v5304, %v5302
        %v5383 = vpack.c.b16 %v5307, %v5305
        %v5384 = vpack.c.b16 %v5308, %v5306
        %v5385 = vpack.c.b16 %v5311, %v5309
        %v5386 = vpack.c.b16 %v5312, %v5310
        %v5387 = vpack.c.b16 %v5315, %v5313
        %v5388 = vpack.c.b16 %v5316, %v5314
        %v5389 = vpack.c.b16 %v5319, %v5317
        %v5390 = vpack.c.b16 %v5320, %v5318
        %v5391 = vpack.c.b16 %v5323, %v5321
        %v5392 = vpack.c.b16 %v5324, %v5322
        %v5393 = vpack.c.b16 %v5327, %v5325
        %v5394 = vpack.c.b16 %v5328, %v5326
        %v5395 = vpack.c.b16 %v5331, %v5329
        %v5396 = vpack.c.b16 %v5332, %v5330
        %5461 = vmatpush.bf16.msra.mxu0 %v5347
        %5462 = vmatpush.bf16.msra.mxu0 %v5345
        %5463 = vmatpush.bf16.msra.mxu0 %v5343
        %5464 = vmatpush.bf16.msra.mxu0 %v5341
        %5465 = vmatpush.bf16.msra.mxu0 %v5339
        %5466 = vmatpush.bf16.msra.mxu0 %v5337
        %5467 = vmatpush.bf16.msra.mxu0 %v5335
        %5468 = vmatpush.bf16.msra.mxu0 %v5333
        %5469 = vmatmul.bf16.gmra.mxu0 %v5067
        %v5470 = vpop.f32.mrf.mxu0
        %v5471 = vadd.f32 %v5137, %v5470
        %v5472 = vpop.f32.mrf.mxu0
        %5473 = vdwg.mxu0
        %5474 = vmatpush.bf16.msra.mxu0 %v5363
        %5475 = vmatpush.bf16.msra.mxu0 %v5361
        %5476 = vmatpush.bf16.msra.mxu0 %v5359
        %5477 = vmatpush.bf16.msra.mxu0 %v5357
        %5478 = vmatpush.bf16.msra.mxu0 %v5355
        %5479 = vmatpush.bf16.msra.mxu0 %v5353
        %5480 = vmatpush.bf16.msra.mxu0 %v5351
        %5481 = vmatpush.bf16.msra.mxu0 %v5349
        %5482 = vmatmul.bf16.gmra.mxu0 %v5068
        %v5483 = vpop.f32.mrf.mxu0
        %v5484 = vadd.f32 %v5471, %v5483
        %v5485 = vpop.f32.mrf.mxu0
        %5486 = vdwg.mxu0
        %5487 = vmatpush.bf16.msra.mxu0 %v5379
        %5488 = vmatpush.bf16.msra.mxu0 %v5377
        %5489 = vmatpush.bf16.msra.mxu0 %v5375
        %5490 = vmatpush.bf16.msra.mxu0 %v5373
        %5491 = vmatpush.bf16.msra.mxu0 %v5371
        %5492 = vmatpush.bf16.msra.mxu0 %v5369
        %5493 = vmatpush.bf16.msra.mxu0 %v5367
        %5494 = vmatpush.bf16.msra.mxu0 %v5365
        %5495 = vmatmul.bf16.gmra.mxu0 %v5069
        %v5496 = vpop.f32.mrf.mxu0
        %v5497 = vadd.f32 %v5484, %v5496
        %v5498 = vpop.f32.mrf.mxu0
        %5499 = vdwg.mxu0
        %5500 = vmatpush.bf16.msra.mxu0 %v5395
        %5501 = vmatpush.bf16.msra.mxu0 %v5393
        %5502 = vmatpush.bf16.msra.mxu0 %v5391
        %5503 = vmatpush.bf16.msra.mxu0 %v5389
        %5504 = vmatpush.bf16.msra.mxu0 %v5387
        %5505 = vmatpush.bf16.msra.mxu0 %v5385
        %5506 = vmatpush.bf16.msra.mxu0 %v5383
        %5507 = vmatpush.bf16.msra.mxu0 %v5381
        %5508 = vmatmul.bf16.gmra.mxu0 %v5070
        %v5509 = vpop.f32.mrf.mxu0
        %v5510 = vadd.f32 %v5497, %v5509
        %v5511 = vpop.f32.mrf.mxu0
        %5512 = vdwg.mxu0
        %5513 = vmatpush.bf16.msra.mxu0 %v5348
        %5514 = vmatpush.bf16.msra.mxu0 %v5346
        %5515 = vmatpush.bf16.msra.mxu0 %v5344
        %5516 = vmatpush.bf16.msra.mxu0 %v5342
        %5517 = vmatpush.bf16.msra.mxu0 %v5340
        %5518 = vmatpush.bf16.msra.mxu0 %v5338
        %5519 = vmatpush.bf16.msra.mxu0 %v5336
        %5520 = vmatpush.bf16.msra.mxu0 %v5334
        %5521 = vmatmul.bf16.gmra.mxu0 %v5067
        %v5522 = vpop.f32.mrf.mxu0
        %v5523 = vadd.f32 %v5138, %v5522
        %v5524 = vpop.f32.mrf.mxu0
        %5525 = vdwg.mxu0
        %5526 = vmatpush.bf16.msra.mxu0 %v5364
        %5527 = vmatpush.bf16.msra.mxu0 %v5362
        %5528 = vmatpush.bf16.msra.mxu0 %v5360
        %5529 = vmatpush.bf16.msra.mxu0 %v5358
        %5530 = vmatpush.bf16.msra.mxu0 %v5356
        %5531 = vmatpush.bf16.msra.mxu0 %v5354
        %5532 = vmatpush.bf16.msra.mxu0 %v5352
        %5533 = vmatpush.bf16.msra.mxu0 %v5350
        %5534 = vmatmul.bf16.gmra.mxu0 %v5068
        %v5535 = vpop.f32.mrf.mxu0
        %v5536 = vadd.f32 %v5523, %v5535
        %v5537 = vpop.f32.mrf.mxu0
        %5538 = vdwg.mxu0
        %5539 = vmatpush.bf16.msra.mxu0 %v5380
        %5540 = vmatpush.bf16.msra.mxu0 %v5378
        %5541 = vmatpush.bf16.msra.mxu0 %v5376
        %5542 = vmatpush.bf16.msra.mxu0 %v5374
        %5543 = vmatpush.bf16.msra.mxu0 %v5372
        %5544 = vmatpush.bf16.msra.mxu0 %v5370
        %5545 = vmatpush.bf16.msra.mxu0 %v5368
        %5546 = vmatpush.bf16.msra.mxu0 %v5366
        %5547 = vmatmul.bf16.gmra.mxu0 %v5069
        %v5548 = vpop.f32.mrf.mxu0
        %v5549 = vadd.f32 %v5536, %v5548
        %v5550 = vpop.f32.mrf.mxu0
        %5551 = vdwg.mxu0
        %5552 = vmatpush.bf16.msra.mxu0 %v5396
        %5553 = vmatpush.bf16.msra.mxu0 %v5394
        %5554 = vmatpush.bf16.msra.mxu0 %v5392
        %5555 = vmatpush.bf16.msra.mxu0 %v5390
        %5556 = vmatpush.bf16.msra.mxu0 %v5388
        %5557 = vmatpush.bf16.msra.mxu0 %v5386
        %5558 = vmatpush.bf16.msra.mxu0 %v5384
        %5559 = vmatpush.bf16.msra.mxu0 %v5382
        %5560 = vmatmul.bf16.gmra.mxu0 %v5070
        %v5561 = vpop.f32.mrf.mxu0
        %v5562 = vadd.f32 %v5549, %v5561
        %v5563 = vpop.f32.mrf.mxu0
        %5564 = vdwg.mxu0
        %v5565 = vld [vmem:[#allocation29] sm:$0x3]
        %v5566 = vld [vmem:[%s61] sm:$0x3]
        %v5567 = vadd.f32 %v4561, %v5510
        %v5568 = vadd.f32 %v4562, %v5562
        %v5569 = vadd.f32 %v5567, %v5568
        %5570 = vadd.xlane.f32.xlu0 %v5569
        %v5571 = vpop.xlane.xlu0 %5570
        %v5572 = vmul.f32 %v5571, %v2799
        %v5573 = vsub.f32 %v5567, %v5572
        %v5574 = vsub.f32 %v5568, %v5572
        %v5575 = vmul.f32 %v5573, %v5573
        %v5576 = vmul.f32 %v5574, %v5574
        %v5577 = vadd.f32 %v5575, %v5576
        %5578 = vadd.xlane.f32.xlu0 %v5577
        %v5579 = vpop.xlane.xlu0 %5578
        %v5580 = vmul.f32 %v5579, %v2799
        %v5581 = vadd.f32 %v5580, 1e-05
        %v5582 = vrsqrt.pop %v5581
        %v5583 = vmul.f32 %v5582, %v5581
        %v5584 = vmul.f32 %v5583, %v5582
        %v5585 = vmul.f32 0.5, %v5584
        %v5586 = vsub.f32 1.5, %v5585
        %v5587 = vmul.f32 %v5582, %v5586
        %vm5588 = vweird.f32 %v5581
        %vm5589 = vweird.f32 %v5582
        %vm5590 = vmor %vm5588, %vm5589
        %v5591 = vsel %vm5590, %v5582, %v5587
        %v5592 = vmul.f32 %v5573, %v5591
        %v5593 = vmul.f32 %v5574, %v5591
        %v5595 = vperm.slane %v5565, 0
        %v5596 = vperm.slane %v5565, 1
        %v5599 = vmul.f32 %v5592, %v5595
        %v5600 = vmul.f32 %v5593, %v5596
        %v5602 = vperm.slane %v5566, 0
        %v5603 = vperm.slane %v5566, 1
        %v5606 = vadd.f32 %v5599, %v5602
        %v5607 = vadd.f32 %v5600, %v5603
        %v5608 = vpack.c.bf16 %v5607, %v5606
        %5609 = vst [vmem:[%s1301] sm:$0xff] %v5608
        %s5610 = sand.u32 %s772, 1
        %s5611 = scalar_lea.sflag [#allocation4], %s5610
        %s5612 = sand.u32 %s772, 1
        %s5613 = smul.addr %s5612, 8
        %s5614 = scalar_lea.vmem [#allocation31], %s5613
        // Predicated region
        $region217: #{tpu_custom_call.1} parent=143 // pred_check
          %p5615 = pneg %p782
        $region218: #{tpu_custom_call.1} parent=143 // pred_check_branch
          %5617 = sbr.rel (%p5615) target = $region220
        $region219: #{tpu_custom_call.1} parent=143 // pred_region
          %5619 = vsyncadd %s5611, 0
          %s5620 = smul.addr %s93, 2
          %s5621 = smul.addr %s5620, 4
          %s5622 = scalar_lea.hbm %s63, %s5621
          %s5624 = sshll.u32 %s5614, 4
          %s5625 = int_to_ptr.vmem [resolvable:$true] %s5624
          %s5626 = sshll.u32 %s5622, 4
          %s5627 = int_to_ptr.hbm [resolvable:$true] %s5626
          %5629 = dma.vmem_to_hbm [thread:$0]  %s5625, 128, %s5627, %s5611
        $region220: #{tpu_custom_call.1} parent=143 // pred_fallthru
          _
      $region144: #{tpu_custom_call.1} parent=5 // pred_fallthru
        _
      %p5630 = scmp.le.s32.totalorder 2, %s88
      // Predicated region
      $region221: #{tpu_custom_call.1} parent=5 // pred_check
        %p5631 = pneg %p5630
      $region222: #{tpu_custom_call.1} parent=5 // pred_check_branch
        %5633 = sbr.rel (%p5631) target = $region224
      $region223: #{tpu_custom_call.1} parent=5 // pred_region
        %s5634 = ssub.s32 %s88, 2
        // Predicated region
        $region225: #{tpu_custom_call.1} parent=223 // pred_check
          %p5635 = pneg %p788
        $region226: #{tpu_custom_call.1} parent=223 // pred_check_branch
          %5637 = sbr.rel (%p5635) target = $region228
        $region227: #{tpu_custom_call.1} parent=223 // pred_region
          %s5638 = sand.u32 %s773, 1
          %s5639 = scalar_lea.sflag [#allocation4], %s5638
          %s5640 = sand.u32 %s773, 1
          %s5641 = smul.addr %s5640, 8
          %s5642 = scalar_lea.vmem [#allocation31], %s5641
          %5644 = dma.done %s5639, 128
        $region228: #{tpu_custom_call.1} parent=223 // pred_fallthru
          _
      $region224: #{tpu_custom_call.1} parent=5 // pred_fallthru
        _
    $region6: #{tpu_custom_call.1} parent=1 // loop_footer
      %s92 = sadd.s32 1, %s88
    $region7: #{tpu_custom_call.1} parent=1 // loop_footer_branch
      %87 = sbr.rel target = $region3
    $region8: #{tpu_custom_call.1} parent=1 // loop_exit
      _
    %5645 = vsyncpa [#allocation3], 1
    %s5646 = scalar_lea.sflag [#allocation3], 1
    %5647 = vsyncpa %s5646, 1
    %5648 = vsyncpa [#allocation6], 1
    %s5649 = scalar_lea.sflag [#allocation6], 1
    %5650 = vsyncpa %s5649, 1
    %5651 = vsyncpa [#allocation9], 1
    %s5652 = scalar_lea.sflag [#allocation9], 1
    %5653 = vsyncpa %s5652, 1
    %5654 = vsyncpa [#allocation12], 1
    %5655 = vsyncpa [#allocation15], 1
    %5656 = vsyncpa [#allocation18], 1
    %5657 = vsyncpa [#allocation21], 1
    %5658 = vsyncpa [#allocation24], 1
    %5659 = vsyncpa [#allocation27], 1
    %5660 = vsyncpa [#allocation30], 1
    %5661 = vsyncpa [#allocation4], 1
    %s5662 = scalar_lea.sflag [#allocation4], 1
    %5663 = vsyncpa %s5662, 1

</llo_original>
